<compile_context>
chip_gen: v6e
topology: v6e:2x2x1
jax: 0.10.0
libtpu: 0.0.40
codegen_flags: <defaults>
</compile_context>

<pallas_src>
import functools

import numpy as np
import jax
import jax.numpy as jnp
from jax.experimental import pallas as pl
from jax.experimental.pallas import tpu as pltpu


def _round_up(x, m):
    return ((x + m - 1) // m) * m


# ----------------------------------------------------------------------------
# Fused kernel: 3x3 conv (9 shifted dots) + bias + ReLU + BN affine + 2x2 pool
# ----------------------------------------------------------------------------
def _fpn_fused_kernel(x_ref, w_ref, b_ref, s_ref, t_ref, o_ref, z_ref,
                      *, TRo, Wo, Wp):
    # x_ref : (Fr, Cin)        bf16  flattened padded band (row-major, Wp cols/row)
    # w_ref : (9, Cin, Cout)   bf16  conv taps, index = 3*dh + dw
    # b_ref : (1, Cout)        f32   conv bias
    # s_ref : (1, Cout)        f32   BN scale  (gamma / sqrt(var + eps))
    # t_ref : (1, Cout)        f32   BN shift  (beta - mean * scale)
    # o_ref : (TRo, Wo, Cout)  f32   pooled output block
    # z_ref : (2*TRo*Wp, Cout) f32   VMEM scratch (pre-pool feature rows)
    Cout = o_ref.shape[-1]
    Rc = 2 * TRo                 # conv rows covered by this band
    M = Rc * Wp                  # flat conv positions (incl. width-pad garbage)

    # --- 3x3 conv as nine shifted contiguous slices, fp32 accumulation -------
    acc = None
    for dh in range(3):
        for dw in range(3):
            off = dh * Wp + dw
            xs = x_ref[off:off + M, :]                       # (M, Cin) bf16
            d = jnp.dot(xs, w_ref[3 * dh + dw],
                        preferred_element_type=jnp.float32)  # (M, Cout) f32
            acc = d if acc is None else acc + d

    # --- fused epilogue: bias + ReLU + BatchNorm (eval) affine ---------------
    z = jnp.maximum(acc + b_ref[...], 0.0)
    z = z * s_ref[...] + t_ref[...]
    z_ref[...] = z                                           # stays in VMEM

    # --- fused 2x2 max pool ---------------------------------------------------
    # Width pool: Wp is even, so flat even/odd positions pair columns (2w, 2w+1).
    Mh = M // 2
    Wph = Wp // 2
    wide = jnp.maximum(z_ref[pl.ds(0, Mh, 2), :],
                       z_ref[pl.ds(1, Mh, 2), :])            # (Rc*Wph, Cout)
    # Wph % 8 == 0 -> this reshape is layout-preserving.
    wide = wide.reshape(Rc, Wph, Cout)[:, :Wo, :]            # drop pad columns
    # Height pool: split leading dim (free) and max the two row slabs.
    wide = wide.reshape(TRo, 2, Wo, Cout)
    o_ref[...] = jnp.maximum(wide[:, 0], wide[:, 1]).astype(o_ref.dtype)


# ----------------------------------------------------------------------------
# Band-size heuristic: largest divisor of Ho whose per-step VMEM fits budget
# ----------------------------------------------------------------------------
def _choose_band_rows(B, Ho, Wp, Cin, Cout, budget_bytes=8 * 1024 * 1024):
    d_max = Ho if B >= 2 else max(1, Ho // 2)   # keep >=2 parallel grid steps
    best = 1
    for d in range(1, Ho + 1):
        if Ho % d or d > d_max:
            continue
        rc = 2 * d
        band = (rc + 2) * Wp * Cin * 2 * 2           # bf16 band, double-buffered
        work = rc * Wp * Cout * 4 * 2                # scratch + fp32 accumulator
        outb = d * (Wp // 2) * Cout * 4 * 2          # output block, double-buffered
        if band + work + outb <= budget_bytes:
            best = d
    return best


# ----------------------------------------------------------------------------
# Forward pass (NCHW in / NCHW out, like the PyTorch module)
# ----------------------------------------------------------------------------
def fpn_block_forward(x_nchw, params):
    x = jnp.transpose(x_nchw, (0, 2, 3, 1)).astype(jnp.float32)   # NCHW -> NHWC
    B, H, W, Cin = x.shape
    Cout = params["w"].shape[-1]
    Ho, Wo = H // 2, W // 2                       # PyTorch floor-mode pooling

    Wp = _round_up(W + 2, 16)                     # padded width (Wp/2 % 8 == 0)
    TRo = _choose_band_rows(B, Ho, Wp, Cin, Cout)  # pooled rows per grid step
    nj = Ho // TRo
    Rc = 2 * TRo                                  # conv rows per band
    rows_in = Rc + 2                              # band rows incl. conv halo

    # Zero-pad (conv padding=1 plus lane-alignment columns) and build halo bands.
    xpad = jnp.pad(x, ((0, 0), (1, 1), (1, Wp - W - 1), (0, 0)))  # (B, H+2, Wp, Cin)
    if nj == 1:
        bands = xpad[:, None, :rows_in]                           # no duplication
    else:
        bands = jnp.stack(
            [xpad[:, 2 * TRo * j: 2 * TRo * j + rows_in] for j in range(nj)],
            axis=1)                                               # (B, nj, rows_in, Wp, Cin)
    bands = bands.reshape(B, nj, rows_in * Wp, Cin)               # free contiguous reshape
    Fr = _round_up(rows_in * Wp + 2, 8)           # +2 slack for the (dh=2,dw=2) tap
    bands = jnp.pad(bands, ((0, 0), (0, 0), (0, Fr - rows_in * Wp), (0, 0)))
    bands = bands.astype(jnp.bfloat16)            # MXU-native, halves band bytes

    # Weights / fused BatchNorm (eval) affine.
    w9 = params["w"].reshape(9, Cin, Cout).astype(jnp.bfloat16)
    scale = params["gamma"] * jax.lax.rsqrt(params["var"] + 1e-5)
    shift = params["beta"] - params["mean"] * scale
    b_row = params["b"].reshape(1, Cout).astype(jnp.float32)
    s_row = scale.reshape(1, Cout).astype(jnp.float32)
    t_row = shift.reshape(1, Cout).astype(jnp.float32)

    kernel = functools.partial(_fpn_fused_kernel, TRo=TRo, Wo=Wo, Wp=Wp)

    out = pl.pallas_call(
        kernel,
        out_shape=jax.ShapeDtypeStruct((B, Ho, Wo, Cout), jnp.float32),
        grid=(B, nj),
        in_specs=[
            pl.BlockSpec((None, None, Fr, Cin), lambda b, j: (b, j, 0, 0)),  # band
            pl.BlockSpec((9, Cin, Cout), lambda b, j: (0, 0, 0)),            # taps
            pl.BlockSpec((1, Cout), lambda b, j: (0, 0)),                    # bias
            pl.BlockSpec((1, Cout), lambda b, j: (0, 0)),                    # BN scale
            pl.BlockSpec((1, Cout), lambda b, j: (0, 0)),                    # BN shift
        ],
        out_specs=pl.BlockSpec((None, TRo, Wo, Cout), lambda b, j: (b, j, 0, 0)),
        scratch_shapes=[pltpu.VMEM((Rc * Wp, Cout), jnp.float32)],
        compiler_params=pltpu.CompilerParams(
            dimension_semantics=("parallel", "parallel"),
            vmem_limit_bytes=48 * 1024 * 1024,    # leaves headroom on v7x (64 MiB)
        ),
    )(bands, w9, b_row, s_row, t_row)

    return jnp.transpose(out, (0, 3, 1, 2))       # NHWC -> NCHW


# ----------------------------------------------------------------------------
# Deterministic synthetic parameters (conv weight stored as (3, 3, Cin, Cout))
# ----------------------------------------------------------------------------
def init_params(key, cin, cout, k=3):
    ks = jax.random.split(key, 6)
    w = jax.random.normal(ks[0], (k, k, cin, cout), jnp.float32) \
        * np.sqrt(2.0 / (k * k * cin))
    b = 0.05 * jax.random.normal(ks[1], (cout,), jnp.float32)
    gamma = 1.0 + 0.1 * jax.random.normal(ks[2], (cout,), jnp.float32)
    beta = 0.1 * jax.random.normal(ks[3], (cout,), jnp.float32)
    mean = 0.1 * jax.random.normal(ks[4], (cout,), jnp.float32)
    var = 1.0 + 0.1 * jnp.abs(jax.random.normal(ks[5], (cout,), jnp.float32))
    return {"w": w, "b": b, "gamma": gamma, "beta": beta, "mean": mean, "var": var}


# ----------------------------------------------------------------------------
if __name__ == "__main__":
    key = jax.random.PRNGKey(0)
    k_in, k_par = jax.random.split(key)

    B, Cin, H, W, Cout = 2, 4, 16, 16, 32
    x = jax.random.normal(k_in, (B, Cin, H, W), jnp.float32)
    params = init_params(k_par, Cin, Cout)

    fwd = jax.jit(fpn_block_forward)
    out = jax.block_until_ready(fwd(x, params))

    assert out.shape == (B, Cout, H // 2, W // 2), out.shape
    assert out.dtype == jnp.float32
    assert bool(jnp.all(jnp.isfinite(out)))
    print("KERNEL_OK")
</pallas_src>

<mosaic_0001>
module attributes {stable_mosaic.version = 11 : i64} {
  func.func @_fpn_fused_kernel(%arg0: i32, %arg1: i32, %arg2: memref<1x1x584x4xbf16, #tpu.memory_space<vmem>>, %arg3: memref<9x4x32xbf16, #tpu.memory_space<vmem>>, %arg4: memref<1x32xf32, #tpu.memory_space<vmem>>, %arg5: memref<1x32xf32, #tpu.memory_space<vmem>>, %arg6: memref<1x32xf32, #tpu.memory_space<vmem>>, %arg7: memref<1x8x8x32xf32, #tpu.memory_space<vmem>>, %arg8: memref<512x32xf32, #tpu.memory_space<vmem>>) attributes {dimension_semantics = [#tpu.dimension_semantics<parallel>, #tpu.dimension_semantics<parallel>], iteration_bounds = array<i64: 2, 1>, scalar_prefetch = 0 : i64, scratch_operands = 1 : i64, tpu.core_type = #tpu.core_type<tc>, window_params = [{transform_indices = @transform_0, window_bounds = array<i64: 1, 1, 584, 4>}, {pipeline_mode = #tpu.pipeline_mode<synchronous>, transform_indices = @transform_1, window_bounds = array<i64: 9, 4, 32>}, {pipeline_mode = #tpu.pipeline_mode<synchronous>, transform_indices = @transform_2, window_bounds = array<i64: 1, 32>}, {pipeline_mode = #tpu.pipeline_mode<synchronous>, transform_indices = @transform_3, window_bounds = array<i64: 1, 32>}, {pipeline_mode = #tpu.pipeline_mode<synchronous>, transform_indices = @transform_4, window_bounds = array<i64: 1, 32>}, {transform_indices = @transform_5, window_bounds = array<i64: 1, 8, 8, 32>}]} {
    %c0 = arith.constant 0 : index
    %c0_0 = arith.constant 0 : index
    %c0_1 = arith.constant 0 : index
    %c0_2 = arith.constant 0 : index
    %0 = vector.load %arg2[%c0, %c0_0, %c0_1, %c0_2] : memref<1x1x584x4xbf16, #tpu.memory_space<vmem>>, vector<1x1x512x4xbf16>
    %1 = vector.shape_cast %0 : vector<1x1x512x4xbf16> to vector<512x4xbf16>
    %c0_3 = arith.constant 0 : index
    %c0_4 = arith.constant 0 : index
    %c0_5 = arith.constant 0 : index
    %2 = vector.load %arg3[%c0_3, %c0_4, %c0_5] : memref<9x4x32xbf16, #tpu.memory_space<vmem>>, vector<1x4x32xbf16>
    %3 = vector.shape_cast %2 : vector<1x4x32xbf16> to vector<4x32xbf16>
    %cst = arith.constant dense<0.000000e+00> : vector<512x32xf32>
    %4 = tpu.matmul %1, %3, %cst {dimension_numbers = #tpu.dot_dimension_numbers<[1], [0], [0], [1], [0, 0, 1, 1], [], []>} : vector<512x4xbf16>, vector<4x32xbf16>, vector<512x32xf32> -> vector<512x32xf32>
    %c0_6 = arith.constant 0 : index
    %c0_7 = arith.constant 0 : index
    %c1 = arith.constant 1 : index
    %c0_8 = arith.constant 0 : index
    %5 = vector.load %arg2[%c0_6, %c0_7, %c1, %c0_8] : memref<1x1x584x4xbf16, #tpu.memory_space<vmem>>, vector<1x1x512x4xbf16>
    %6 = vector.shape_cast %5 : vector<1x1x512x4xbf16> to vector<512x4xbf16>
    %c1_9 = arith.constant 1 : index
    %c0_10 = arith.constant 0 : index
    %c0_11 = arith.constant 0 : index
    %7 = vector.load %arg3[%c1_9, %c0_10, %c0_11] : memref<9x4x32xbf16, #tpu.memory_space<vmem>>, vector<1x4x32xbf16>
    %8 = vector.shape_cast %7 : vector<1x4x32xbf16> to vector<4x32xbf16>
    %cst_12 = arith.constant dense<0.000000e+00> : vector<512x32xf32>
    %9 = tpu.matmul %6, %8, %cst_12 {dimension_numbers = #tpu.dot_dimension_numbers<[1], [0], [0], [1], [0, 0, 1, 1], [], []>} : vector<512x4xbf16>, vector<4x32xbf16>, vector<512x32xf32> -> vector<512x32xf32>
    %10 = arith.addf %4, %9 : vector<512x32xf32>
    %c0_13 = arith.constant 0 : index
    %c0_14 = arith.constant 0 : index
    %c2 = arith.constant 2 : index
    %c0_15 = arith.constant 0 : index
    %11 = vector.load %arg2[%c0_13, %c0_14, %c2, %c0_15] : memref<1x1x584x4xbf16, #tpu.memory_space<vmem>>, vector<1x1x512x4xbf16>
    %12 = vector.shape_cast %11 : vector<1x1x512x4xbf16> to vector<512x4xbf16>
    %c2_16 = arith.constant 2 : index
    %c0_17 = arith.constant 0 : index
    %c0_18 = arith.constant 0 : index
    %13 = vector.load %arg3[%c2_16, %c0_17, %c0_18] : memref<9x4x32xbf16, #tpu.memory_space<vmem>>, vector<1x4x32xbf16>
    %14 = vector.shape_cast %13 : vector<1x4x32xbf16> to vector<4x32xbf16>
    %cst_19 = arith.constant dense<0.000000e+00> : vector<512x32xf32>
    %15 = tpu.matmul %12, %14, %cst_19 {dimension_numbers = #tpu.dot_dimension_numbers<[1], [0], [0], [1], [0, 0, 1, 1], [], []>} : vector<512x4xbf16>, vector<4x32xbf16>, vector<512x32xf32> -> vector<512x32xf32>
    %16 = arith.addf %10, %15 : vector<512x32xf32>
    %c0_20 = arith.constant 0 : index
    %c0_21 = arith.constant 0 : index
    %c32 = arith.constant 32 : index
    %c0_22 = arith.constant 0 : index
    %17 = vector.load %arg2[%c0_20, %c0_21, %c32, %c0_22] : memref<1x1x584x4xbf16, #tpu.memory_space<vmem>>, vector<1x1x512x4xbf16>
    %18 = vector.shape_cast %17 : vector<1x1x512x4xbf16> to vector<512x4xbf16>
    %c3 = arith.constant 3 : index
    %c0_23 = arith.constant 0 : index
    %c0_24 = arith.constant 0 : index
    %19 = vector.load %arg3[%c3, %c0_23, %c0_24] : memref<9x4x32xbf16, #tpu.memory_space<vmem>>, vector<1x4x32xbf16>
    %20 = vector.shape_cast %19 : vector<1x4x32xbf16> to vector<4x32xbf16>
    %cst_25 = arith.constant dense<0.000000e+00> : vector<512x32xf32>
    %21 = tpu.matmul %18, %20, %cst_25 {dimension_numbers = #tpu.dot_dimension_numbers<[1], [0], [0], [1], [0, 0, 1, 1], [], []>} : vector<512x4xbf16>, vector<4x32xbf16>, vector<512x32xf32> -> vector<512x32xf32>
    %22 = arith.addf %16, %21 : vector<512x32xf32>
    %c0_26 = arith.constant 0 : index
    %c0_27 = arith.constant 0 : index
    %c33 = arith.constant 33 : index
    %c0_28 = arith.constant 0 : index
    %23 = vector.load %arg2[%c0_26, %c0_27, %c33, %c0_28] : memref<1x1x584x4xbf16, #tpu.memory_space<vmem>>, vector<1x1x512x4xbf16>
    %24 = vector.shape_cast %23 : vector<1x1x512x4xbf16> to vector<512x4xbf16>
    %c4 = arith.constant 4 : index
    %c0_29 = arith.constant 0 : index
    %c0_30 = arith.constant 0 : index
    %25 = vector.load %arg3[%c4, %c0_29, %c0_30] : memref<9x4x32xbf16, #tpu.memory_space<vmem>>, vector<1x4x32xbf16>
    %26 = vector.shape_cast %25 : vector<1x4x32xbf16> to vector<4x32xbf16>
    %cst_31 = arith.constant dense<0.000000e+00> : vector<512x32xf32>
    %27 = tpu.matmul %24, %26, %cst_31 {dimension_numbers = #tpu.dot_dimension_numbers<[1], [0], [0], [1], [0, 0, 1, 1], [], []>} : vector<512x4xbf16>, vector<4x32xbf16>, vector<512x32xf32> -> vector<512x32xf32>
    %28 = arith.addf %22, %27 : vector<512x32xf32>
    %c0_32 = arith.constant 0 : index
    %c0_33 = arith.constant 0 : index
    %c34 = arith.constant 34 : index
    %c0_34 = arith.constant 0 : index
    %29 = vector.load %arg2[%c0_32, %c0_33, %c34, %c0_34] : memref<1x1x584x4xbf16, #tpu.memory_space<vmem>>, vector<1x1x512x4xbf16>
    %30 = vector.shape_cast %29 : vector<1x1x512x4xbf16> to vector<512x4xbf16>
    %c5 = arith.constant 5 : index
    %c0_35 = arith.constant 0 : index
    %c0_36 = arith.constant 0 : index
    %31 = vector.load %arg3[%c5, %c0_35, %c0_36] : memref<9x4x32xbf16, #tpu.memory_space<vmem>>, vector<1x4x32xbf16>
    %32 = vector.shape_cast %31 : vector<1x4x32xbf16> to vector<4x32xbf16>
    %cst_37 = arith.constant dense<0.000000e+00> : vector<512x32xf32>
    %33 = tpu.matmul %30, %32, %cst_37 {dimension_numbers = #tpu.dot_dimension_numbers<[1], [0], [0], [1], [0, 0, 1, 1], [], []>} : vector<512x4xbf16>, vector<4x32xbf16>, vector<512x32xf32> -> vector<512x32xf32>
    %34 = arith.addf %28, %33 : vector<512x32xf32>
    %c0_38 = arith.constant 0 : index
    %c0_39 = arith.constant 0 : index
    %c64 = arith.constant 64 : index
    %c0_40 = arith.constant 0 : index
    %35 = vector.load %arg2[%c0_38, %c0_39, %c64, %c0_40] : memref<1x1x584x4xbf16, #tpu.memory_space<vmem>>, vector<1x1x512x4xbf16>
    %36 = vector.shape_cast %35 : vector<1x1x512x4xbf16> to vector<512x4xbf16>
    %c6 = arith.constant 6 : index
    %c0_41 = arith.constant 0 : index
    %c0_42 = arith.constant 0 : index
    %37 = vector.load %arg3[%c6, %c0_41, %c0_42] : memref<9x4x32xbf16, #tpu.memory_space<vmem>>, vector<1x4x32xbf16>
    %38 = vector.shape_cast %37 : vector<1x4x32xbf16> to vector<4x32xbf16>
    %cst_43 = arith.constant dense<0.000000e+00> : vector<512x32xf32>
    %39 = tpu.matmul %36, %38, %cst_43 {dimension_numbers = #tpu.dot_dimension_numbers<[1], [0], [0], [1], [0, 0, 1, 1], [], []>} : vector<512x4xbf16>, vector<4x32xbf16>, vector<512x32xf32> -> vector<512x32xf32>
    %40 = arith.addf %34, %39 : vector<512x32xf32>
    %c0_44 = arith.constant 0 : index
    %c0_45 = arith.constant 0 : index
    %c65 = arith.constant 65 : index
    %c0_46 = arith.constant 0 : index
    %41 = vector.load %arg2[%c0_44, %c0_45, %c65, %c0_46] : memref<1x1x584x4xbf16, #tpu.memory_space<vmem>>, vector<1x1x512x4xbf16>
    %42 = vector.shape_cast %41 : vector<1x1x512x4xbf16> to vector<512x4xbf16>
    %c7 = arith.constant 7 : index
    %c0_47 = arith.constant 0 : index
    %c0_48 = arith.constant 0 : index
    %43 = vector.load %arg3[%c7, %c0_47, %c0_48] : memref<9x4x32xbf16, #tpu.memory_space<vmem>>, vector<1x4x32xbf16>
    %44 = vector.shape_cast %43 : vector<1x4x32xbf16> to vector<4x32xbf16>
    %cst_49 = arith.constant dense<0.000000e+00> : vector<512x32xf32>
    %45 = tpu.matmul %42, %44, %cst_49 {dimension_numbers = #tpu.dot_dimension_numbers<[1], [0], [0], [1], [0, 0, 1, 1], [], []>} : vector<512x4xbf16>, vector<4x32xbf16>, vector<512x32xf32> -> vector<512x32xf32>
    %46 = arith.addf %40, %45 : vector<512x32xf32>
    %c0_50 = arith.constant 0 : index
    %c0_51 = arith.constant 0 : index
    %c66 = arith.constant 66 : index
    %c0_52 = arith.constant 0 : index
    %47 = vector.load %arg2[%c0_50, %c0_51, %c66, %c0_52] : memref<1x1x584x4xbf16, #tpu.memory_space<vmem>>, vector<1x1x512x4xbf16>
    %48 = vector.shape_cast %47 : vector<1x1x512x4xbf16> to vector<512x4xbf16>
    %c8 = arith.constant 8 : index
    %c0_53 = arith.constant 0 : index
    %c0_54 = arith.constant 0 : index
    %49 = vector.load %arg3[%c8, %c0_53, %c0_54] : memref<9x4x32xbf16, #tpu.memory_space<vmem>>, vector<1x4x32xbf16>
    %50 = vector.shape_cast %49 : vector<1x4x32xbf16> to vector<4x32xbf16>
    %cst_55 = arith.constant dense<0.000000e+00> : vector<512x32xf32>
    %51 = tpu.matmul %48, %50, %cst_55 {dimension_numbers = #tpu.dot_dimension_numbers<[1], [0], [0], [1], [0, 0, 1, 1], [], []>} : vector<512x4xbf16>, vector<4x32xbf16>, vector<512x32xf32> -> vector<512x32xf32>
    %52 = arith.addf %46, %51 : vector<512x32xf32>
    %c0_56 = arith.constant 0 : index
    %c0_57 = arith.constant 0 : index
    %53 = vector.load %arg4[%c0_56, %c0_57] : memref<1x32xf32, #tpu.memory_space<vmem>>, vector<1x32xf32>
    %54 = vector.broadcast %53 : vector<1x32xf32> to vector<512x32xf32>
    %55 = arith.addf %52, %54 : vector<512x32xf32>
    %cst_58 = arith.constant 0.000000e+00 : f32
    %56 = vector.broadcast %cst_58 : f32 to vector<512x32xf32>
    %57 = arith.maximumf %55, %56 : vector<512x32xf32>
    %c0_59 = arith.constant 0 : index
    %c0_60 = arith.constant 0 : index
    %58 = vector.load %arg5[%c0_59, %c0_60] : memref<1x32xf32, #tpu.memory_space<vmem>>, vector<1x32xf32>
    %59 = vector.broadcast %58 : vector<1x32xf32> to vector<512x32xf32>
    %60 = arith.mulf %57, %59 : vector<512x32xf32>
    %c0_61 = arith.constant 0 : index
    %c0_62 = arith.constant 0 : index
    %61 = vector.load %arg6[%c0_61, %c0_62] : memref<1x32xf32, #tpu.memory_space<vmem>>, vector<1x32xf32>
    %62 = vector.broadcast %61 : vector<1x32xf32> to vector<512x32xf32>
    %63 = arith.addf %60, %62 : vector<512x32xf32>
    %c0_63 = arith.constant 0 : index
    %c0_64 = arith.constant 0 : index
    %64 = vector.load %arg8[%c0_63, %c0_64] : memref<512x32xf32, #tpu.memory_space<vmem>>, vector<512x32xf32>
    tpu.vector_store %arg8[%c0_63, %c0_64], %63 {strides = array<i32>} : memref<512x32xf32, #tpu.memory_space<vmem>>, vector<512x32xf32>,
    %c0_65 = arith.constant 0 : index
    %c0_66 = arith.constant 0 : index
    %65 = tpu.strided_load %arg8[%c0_65, %c0_66] {strides = array<i32: 2, 1>} : memref<512x32xf32, #tpu.memory_space<vmem>>, vector<256x32xf32>
    %c1_67 = arith.constant 1 : index
    %c0_68 = arith.constant 0 : index
    %66 = tpu.strided_load %arg8[%c1_67, %c0_68] {strides = array<i32: 2, 1>} : memref<512x32xf32, #tpu.memory_space<vmem>>, vector<256x32xf32>
    %67 = arith.maximumf %65, %66 : vector<256x32xf32>
    %68 = vector.shape_cast %67 : vector<256x32xf32> to vector<16x16x32xf32>
    %69 = vector.extract_strided_slice %68 {offsets = [0, 0, 0], sizes = [16, 8, 32], strides = [1, 1, 1]} : vector<16x16x32xf32> to vector<16x8x32xf32>
    %70 = vector.shape_cast %69 : vector<16x8x32xf32> to vector<8x2x8x32xf32>
    %71 = vector.extract_strided_slice %70 {offsets = [0, 0, 0, 0], sizes = [8, 1, 8, 32], strides = [1, 1, 1, 1]} : vector<8x2x8x32xf32> to vector<8x1x8x32xf32>
    %72 = vector.shape_cast %71 : vector<8x1x8x32xf32> to vector<8x8x32xf32>
    %73 = vector.extract_strided_slice %70 {offsets = [0, 1, 0, 0], sizes = [8, 1, 8, 32], strides = [1, 1, 1, 1]} : vector<8x2x8x32xf32> to vector<8x1x8x32xf32>
    %74 = vector.shape_cast %73 : vector<8x1x8x32xf32> to vector<8x8x32xf32>
    %75 = arith.maximumf %72, %74 : vector<8x8x32xf32>
    %c0_69 = arith.constant 0 : index
    %c0_70 = arith.constant 0 : index
    %c0_71 = arith.constant 0 : index
    %c0_72 = arith.constant 0 : index
    %76 = vector.load %arg7[%c0_69, %c0_70, %c0_71, %c0_72] : memref<1x8x8x32xf32, #tpu.memory_space<vmem>>, vector<1x8x8x32xf32>
    %77 = vector.shape_cast %76 : vector<1x8x8x32xf32> to vector<8x8x32xf32>
    %78 = vector.shape_cast %75 : vector<8x8x32xf32> to vector<1x8x8x32xf32>
    tpu.vector_store %arg7[%c0_69, %c0_70, %c0_71, %c0_72], %78 {strides = array<i32>} : memref<1x8x8x32xf32, #tpu.memory_space<vmem>>, vector<1x8x8x32xf32>,
    return
  }
  func.func @transform_0(%arg0: i32, %arg1: i32) -> (i32, i32, i32, i32) {
    %c0_i32 = arith.constant 0 : i32
    %c0_i32_0 = arith.constant 0 : i32
    %c0_i32_1 = arith.constant 0 : i32
    return %arg0, %arg1, %c0_i32, %c0_i32_0 : i32, i32, i32, i32
  }
  func.func @transform_1(%arg0: i32, %arg1: i32) -> (i32, i32, i32) {
    %c0_i32 = arith.constant 0 : i32
    %c0_i32_0 = arith.constant 0 : i32
    %c0_i32_1 = arith.constant 0 : i32
    %c0_i32_2 = arith.constant 0 : i32
    return %c0_i32, %c0_i32_0, %c0_i32_1 : i32, i32, i32
  }
  func.func @transform_2(%arg0: i32, %arg1: i32) -> (i32, i32) {
    %c0_i32 = arith.constant 0 : i32
    %c0_i32_0 = arith.constant 0 : i32
    %c0_i32_1 = arith.constant 0 : i32
    return %c0_i32, %c0_i32_0 : i32, i32
  }
  func.func @transform_3(%arg0: i32, %arg1: i32) -> (i32, i32) {
    %c0_i32 = arith.constant 0 : i32
    %c0_i32_0 = arith.constant 0 : i32
    %c0_i32_1 = arith.constant 0 : i32
    return %c0_i32, %c0_i32_0 : i32, i32
  }
  func.func @transform_4(%arg0: i32, %arg1: i32) -> (i32, i32) {
    %c0_i32 = arith.constant 0 : i32
    %c0_i32_0 = arith.constant 0 : i32
    %c0_i32_1 = arith.constant 0 : i32
    return %c0_i32, %c0_i32_0 : i32, i32
  }
  func.func @transform_5(%arg0: i32, %arg1: i32) -> (i32, i32, i32, i32) {
    %c0_i32 = arith.constant 0 : i32
    %c0_i32_0 = arith.constant 0 : i32
    %c0_i32_1 = arith.constant 0 : i32
    return %arg0, %arg1, %c0_i32, %c0_i32_0 : i32, i32, i32, i32
  }
}

</mosaic_0001>

<llo_original>
// kernel: fpn_block_forward.1
$region0: #{fpn_block_forward.1}
  #allocation0 [shape = 'u32[]', space=smem, size = 0x4, offset = 0x4, fixed_abs, tag = 'smem constant byte address 0x4 - core index']
  #allocation1 [shape = 'u32[144,128]{1,0:T(1,128)}', space=vmem, size = 0x12000, scoped, tag = 'internal scratch']
  #allocation2 [shape = 'f32[512,32]{1,0:T(8,128)}', space=vmem, size = 0x40000, scoped, tag = 'scratch operand']
  %s0 = inlined_call_operand.vmem [shape: bf16[2,1,584,4], index: 0, kind: input, shape index: {}]
  %s1 = inlined_call_operand.vmem [shape: bf16[9,4,32], index: 1, kind: input, shape index: {}]
  %s2 = inlined_call_operand.vmem [shape: f32[1,32], index: 2, kind: input, shape index: {}]
  %s3 = inlined_call_operand.vmem [shape: f32[1,32], index: 3, kind: input, shape index: {}]
  %s4 = inlined_call_operand.vmem [shape: f32[1,32], index: 4, kind: input, shape index: {}]
  %s5 = inlined_call_operand.hbm [shape: f32[2,8,8,32], index: 5, kind: output, shape index: {}]
  %s6 = sld [smem:[#allocation0]]
  $region53: #{fpn_block_forward.1} parent=0
    _
  %s8 = ssub.s32 1, %s6
  %s9 = scalar_select 0, %s8, %s6
  $region1: #{fpn_block_forward.1} parent=0
    #allocation3 [shape = 'u8[65536]{0}', space=vmem, size = 0x10000, scoped, tag = 'output window, operand 0']
    #allocation4 [shape = 's32[2]{0}', space=sflag, size = 0x8, scoped, tag = 'scoped memory for fpn_block_forward.1']
    %10 = vsyncpa [#allocation4], 0
    %s11 = scalar_lea.sflag [#allocation4], 1
    %12 = vsyncpa %s11, 0
    loop: start=0, step=1, limit=4
    $region2: #{fpn_block_forward.1} parent=1 // loop_pre_header
      _
    $region3: #{fpn_block_forward.1} parent=1 // loop_header
      %s14 = sphi 0, %s18
      %p15 = scmp.ge.s32.totalorder %s14, 4
      %s21 = sphi 0, %s33
      %s22 = sphi 0, %s29
      %s23 = sphi 0, %s21
      %s24 = sphi 0, %s22
      %s25 = sphi 0, %s23
      %s26 = sphi 0, %s24
      %s38 = sphi 0, %s40
      %s41 = sphi 0, %s38
      %s42 = sphi 0, %s41
      %s58 = sphi 0, %s42
      %s62 = sphi 0, %s62
      %s64 = sphi 0, %s62
      %s65 = sphi 0, %s64
      %s79 = sphi 0, %s65
      %s83 = sphi 0, %s83
      %s85 = sphi 0, %s83
      %s86 = sphi 0, %s85
      %s100 = sphi 0, %s86
      %s104 = sphi 0, %s104
      %s106 = sphi 0, %s104
      %s107 = sphi 0, %s106
      %s121 = sphi 0, %s107
      %s125 = sphi 0, %s125
      %s127 = sphi 0, %s125
      %s128 = sphi 0, %s127
      %s142 = sphi 0, %s128
      %s150 = sphi 0, %s152
      %s153 = sphi 0, %s150
      %s154 = sphi 0, %s153
      %s170 = sphi 0, %s154
    $region4: #{fpn_block_forward.1} parent=1 // loop_header_branch
      %17 = sbr.rel (%p15) target = $region8
    $region5: #{fpn_block_forward.1} parent=1 // loop_body
      %s19 = ssub.s32 %s14, 1
      %s20 = ssub.s32 %s14, 2
      %s27 = sadd.s32 1, %s22
      %p28 = scmp.ge.s32.totalorder %s27, 1
      %s29 = scalar_select %p28, 0, %s27
      %s30 = sadd.s32 1, %s21
      %s31 = scalar_select %p28, %s30, %s21
      %p32 = scmp.ge.s32.totalorder %s31, 2
      %s33 = scalar_select %p32, 0, %s31
      %s34 = ssub.s32 %s21, %s33
      %s35 = ssub.s32 %s22, %s29
      %s36 = sor.u32 %s34, %s35
      %p37 = scmp.eq.s32.totalorder %s36, 0
      %s39 = sadd.s32 %s38, 1
      %s40 = scalar_select %p37, %s38, %s39
      %p43 = pneg %p37
      %p44 = scmp.eq.s32.totalorder %s14, 1
      %p45 = por %p43, %p44
      %p46 = scmp.ne.s32.totalorder %s38, %s41
      %p47 = scmp.eq.s32.totalorder %s14, 0
      %p48 = por %p46, %p47
      %p49 = scmp.ne.s32.totalorder %s38, %s41
      %p50 = scmp.eq.s32.totalorder %s19, 1
      %p51 = por %p49, %p50
      %p52 = scmp.ne.s32.totalorder %s41, %s42
      %p53 = scmp.eq.s32.totalorder %s19, 0
      %p54 = por %p52, %p53
      %p55 = scmp.ne.s32.totalorder %s41, %s42
      %p56 = scmp.eq.s32.totalorder %s20, 1
      %p57 = por %p55, %p56
      %p59 = scmp.ne.s32.totalorder %s42, %s58
      %p60 = scmp.eq.s32.totalorder %s20, 0
      %p61 = por %p59, %p60
      %s63 = sadd.s32 %s62, 1
      %p66 = scmp.eq.s32.totalorder %s14, 1
      %p67 = scmp.ne.s32.totalorder %s62, %s64
      %p68 = scmp.eq.s32.totalorder %s14, 0
      %p69 = por %p67, %p68
      %p70 = scmp.ne.s32.totalorder %s62, %s64
      %p71 = scmp.eq.s32.totalorder %s19, 1
      %p72 = por %p70, %p71
      %p73 = scmp.ne.s32.totalorder %s64, %s65
      %p74 = scmp.eq.s32.totalorder %s19, 0
      %p75 = por %p73, %p74
      %p76 = scmp.ne.s32.totalorder %s64, %s65
      %p77 = scmp.eq.s32.totalorder %s20, 1
      %p78 = por %p76, %p77
      %p80 = scmp.ne.s32.totalorder %s65, %s79
      %p81 = scmp.eq.s32.totalorder %s20, 0
      %p82 = por %p80, %p81
      %s84 = sadd.s32 %s83, 1
      %p87 = scmp.eq.s32.totalorder %s14, 1
      %p88 = scmp.ne.s32.totalorder %s83, %s85
      %p89 = scmp.eq.s32.totalorder %s14, 0
      %p90 = por %p88, %p89
      %p91 = scmp.ne.s32.totalorder %s83, %s85
      %p92 = scmp.eq.s32.totalorder %s19, 1
      %p93 = por %p91, %p92
      %p94 = scmp.ne.s32.totalorder %s85, %s86
      %p95 = scmp.eq.s32.totalorder %s19, 0
      %p96 = por %p94, %p95
      %p97 = scmp.ne.s32.totalorder %s85, %s86
      %p98 = scmp.eq.s32.totalorder %s20, 1
      %p99 = por %p97, %p98
      %p101 = scmp.ne.s32.totalorder %s86, %s100
      %p102 = scmp.eq.s32.totalorder %s20, 0
      %p103 = por %p101, %p102
      %s105 = sadd.s32 %s104, 1
      %p108 = scmp.eq.s32.totalorder %s14, 1
      %p109 = scmp.ne.s32.totalorder %s104, %s106
      %p110 = scmp.eq.s32.totalorder %s14, 0
      %p111 = por %p109, %p110
      %p112 = scmp.ne.s32.totalorder %s104, %s106
      %p113 = scmp.eq.s32.totalorder %s19, 1
      %p114 = por %p112, %p113
      %p115 = scmp.ne.s32.totalorder %s106, %s107
      %p116 = scmp.eq.s32.totalorder %s19, 0
      %p117 = por %p115, %p116
      %p118 = scmp.ne.s32.totalorder %s106, %s107
      %p119 = scmp.eq.s32.totalorder %s20, 1
      %p120 = por %p118, %p119
      %p122 = scmp.ne.s32.totalorder %s107, %s121
      %p123 = scmp.eq.s32.totalorder %s20, 0
      %p124 = por %p122, %p123
      %s126 = sadd.s32 %s125, 1
      %p129 = scmp.eq.s32.totalorder %s14, 1
      %p130 = scmp.ne.s32.totalorder %s125, %s127
      %p131 = scmp.eq.s32.totalorder %s14, 0
      %p132 = por %p130, %p131
      %p133 = scmp.ne.s32.totalorder %s125, %s127
      %p134 = scmp.eq.s32.totalorder %s19, 1
      %p135 = por %p133, %p134
      %p136 = scmp.ne.s32.totalorder %s127, %s128
      %p137 = scmp.eq.s32.totalorder %s19, 0
      %p138 = por %p136, %p137
      %p139 = scmp.ne.s32.totalorder %s127, %s128
      %p140 = scmp.eq.s32.totalorder %s20, 1
      %p141 = por %p139, %p140
      %p143 = scmp.ne.s32.totalorder %s128, %s142
      %p144 = scmp.eq.s32.totalorder %s20, 0
      %p145 = por %p143, %p144
      %s146 = ssub.s32 %s21, %s33
      %s147 = ssub.s32 %s22, %s29
      %s148 = sor.u32 %s146, %s147
      %p149 = scmp.eq.s32.totalorder %s148, 0
      %s151 = sadd.s32 %s150, 1
      %s152 = scalar_select %p149, %s150, %s151
      %p155 = pneg %p149
      %p156 = scmp.eq.s32.totalorder %s14, 1
      %p157 = por %p155, %p156
      %p158 = scmp.ne.s32.totalorder %s150, %s153
      %p159 = scmp.eq.s32.totalorder %s14, 0
      %p160 = por %p158, %p159
      %p161 = scmp.ne.s32.totalorder %s150, %s153
      %p162 = scmp.eq.s32.totalorder %s19, 1
      %p163 = por %p161, %p162
      %p164 = scmp.ne.s32.totalorder %s153, %s154
      %p165 = scmp.eq.s32.totalorder %s19, 0
      %p166 = por %p164, %p165
      %p167 = scmp.ne.s32.totalorder %s153, %s154
      %p168 = scmp.eq.s32.totalorder %s20, 1
      %p169 = por %p167, %p168
      %p171 = scmp.ne.s32.totalorder %s154, %s170
      %p172 = scmp.eq.s32.totalorder %s20, 0
      %p173 = por %p171, %p172
      %p174 = scmp.le.s32.totalorder 1, %s14
      %p175 = scmp.lt.s32.totalorder %s14, 3
      %p176 = pnand %p174, %p175
      %p177 = pneg %p176
      // Predicated region
      $region9: #{fpn_block_forward.1} parent=5 // pred_check
        _
      $region10: #{fpn_block_forward.1} parent=5 // pred_check_branch
        %179 = sbr.rel (%p176) target = $region12
      $region11: #{fpn_block_forward.1} parent=5 // pred_region
        %s180 = ssub.s32 %s14, 1
        // Predicated region
        $region13: #{fpn_block_forward.1} parent=11 // pred_check
          %p181 = pneg %p75
        $region14: #{fpn_block_forward.1} parent=11 // pred_check_branch
          %183 = sbr.rel (%p181) target = $region16
        $region15: #{fpn_block_forward.1} parent=11 // pred_region
          _
        $region16: #{fpn_block_forward.1} parent=11 // pred_fallthru
          _
        // Predicated region
        $region17: #{fpn_block_forward.1} parent=11 // pred_check
          %p184 = pneg %p96
        $region18: #{fpn_block_forward.1} parent=11 // pred_check_branch
          %186 = sbr.rel (%p184) target = $region20
        $region19: #{fpn_block_forward.1} parent=11 // pred_region
          _
        $region20: #{fpn_block_forward.1} parent=11 // pred_fallthru
          _
        // Predicated region
        $region21: #{fpn_block_forward.1} parent=11 // pred_check
          %p187 = pneg %p117
        $region22: #{fpn_block_forward.1} parent=11 // pred_check_branch
          %189 = sbr.rel (%p187) target = $region24
        $region23: #{fpn_block_forward.1} parent=11 // pred_region
          _
        $region24: #{fpn_block_forward.1} parent=11 // pred_fallthru
          _
        // Predicated region
        $region25: #{fpn_block_forward.1} parent=11 // pred_check
          %p190 = pneg %p138
        $region26: #{fpn_block_forward.1} parent=11 // pred_check_branch
          %192 = sbr.rel (%p190) target = $region28
        $region27: #{fpn_block_forward.1} parent=11 // pred_region
          _
        $region28: #{fpn_block_forward.1} parent=11 // pred_fallthru
          _
      $region12: #{fpn_block_forward.1} parent=5 // pred_fallthru
        _
      %p193 = scmp.lt.s32.totalorder %s14, 2
      // Predicated region
      $region29: #{fpn_block_forward.1} parent=5 // pred_check
        %p194 = pneg %p193
      $region30: #{fpn_block_forward.1} parent=5 // pred_check_branch
        %196 = sbr.rel (%p194) target = $region32
      $region31: #{fpn_block_forward.1} parent=5 // pred_region
        // Predicated region
        $region33: #{fpn_block_forward.1} parent=31 // pred_check
          %p197 = pneg %p48
        $region34: #{fpn_block_forward.1} parent=31 // pred_check_branch
          %199 = sbr.rel (%p197) target = $region36
        $region35: #{fpn_block_forward.1} parent=31 // pred_region
          %p200 = scmp.lt.s32.totalorder %s21, 1
          %s201 = scalar_select %p200, %s21, 1
          %p202 = scmp.lt.s32.totalorder %s22, 0
          %s203 = scalar_select %p202, %s22, 0
          %s204 = smul.addr %s203, 73
          %s205 = smul.addr %s201, 73
          %s206 = sadd.s32 %s204, %s205
          %s207 = smul.addr %s206, 4
          %s208 = scalar_lea.vmem %s0, %s207
        $region36: #{fpn_block_forward.1} parent=31 // pred_fallthru
          _
      $region32: #{fpn_block_forward.1} parent=5 // pred_fallthru
        _
      %p209 = scmp.le.s32.totalorder 1, %s14
      %p210 = scmp.lt.s32.totalorder %s14, 3
      %p211 = pnand %p209, %p210
      %p212 = pneg %p211
      // Predicated region
      $region37: #{fpn_block_forward.1} parent=5 // pred_check
        _
      $region38: #{fpn_block_forward.1} parent=5 // pred_check_branch
        %214 = sbr.rel (%p211) target = $region40
      $region39: #{fpn_block_forward.1} parent=5 // pred_region
        %s215 = ssub.s32 %s14, 1
        %p216 = scmp.lt.s32.totalorder %s23, 1
        %s217 = scalar_select %p216, %s23, 1
        %p218 = scmp.lt.s32.totalorder %s24, 0
        %s219 = scalar_select %p218, %s24, 0
        %s220 = smul.addr %s219, 73
        %s221 = smul.addr %s217, 73
        %s222 = sadd.s32 %s220, %s221
        %s223 = smul.addr %s222, 4
        %s224 = scalar_lea.vmem %s0, %s223
        %p225 = pneg %p54
        %p226 = pneg %p51
        %p227 = pneg %p75
        %p228 = pneg %p72
        %p229 = pneg %p96
        %p230 = pneg %p93
        %p231 = pneg %p117
        %p232 = pneg %p114
        %p233 = pneg %p138
        %p234 = pneg %p135
        %p235 = pneg %p166
        %p236 = pneg %p163
        %s237 = sand.u32 %s153, 1
        %s238 = scalar_lea.sflag [#allocation4], %s237
        %s239 = sand.u32 %s153, 1
        %s240 = smul.addr %s239, 64
        %s241 = scalar_lea.vmem [#allocation3], %s240
        %p242 = scmp.lt.s32.totalorder %s23, 1
        %s243 = scalar_select %p242, %s23, 1
        %p244 = scmp.lt.s32.totalorder %s24, 0
        %s245 = scalar_select %p244, %s24, 0
        %s246 = smul.addr %s245, 73
        %s247 = smul.addr %s243, 73
        %s248 = sadd.s32 %s246, %s247
        %s249 = smul.addr %s248, 4
        %s250 = scalar_lea.vmem %s0, %s249
        %s251 = smul.u32 8, %s24
        %v253 = vld [vmem:[%s250] sm:$0xf]
        %v254 = vld [vmem:[%s250 + $0x4] sm:$0xf]
        %v255 = vld [vmem:[%s250 + $0x8] sm:$0xf]
        %v256 = vld [vmem:[%s250 + $0xc] sm:$0xf]
        %v257 = vld [vmem:[%s250 + $0x10] sm:$0xf]
        %v258 = vld [vmem:[%s250 + $0x14] sm:$0xf]
        %v259 = vld [vmem:[%s250 + $0x18] sm:$0xf]
        %v260 = vld [vmem:[%s250 + $0x1c] sm:$0xf]
        %v261 = vld [vmem:[%s250 + $0x20] sm:$0xf]
        %v262 = vld [vmem:[%s250 + $0x24] sm:$0xf]
        %v263 = vld [vmem:[%s250 + $0x28] sm:$0xf]
        %v264 = vld [vmem:[%s250 + $0x2c] sm:$0xf]
        %v265 = vld [vmem:[%s250 + $0x30] sm:$0xf]
        %v266 = vld [vmem:[%s250 + $0x34] sm:$0xf]
        %v267 = vld [vmem:[%s250 + $0x38] sm:$0xf]
        %v268 = vld [vmem:[%s250 + $0x3c] sm:$0xf]
        %v269 = vld [vmem:[%s250 + $0x40] sm:$0xf]
        %v270 = vld [vmem:[%s250 + $0x44] sm:$0xf]
        %v271 = vld [vmem:[%s250 + $0x48] sm:$0xf]
        %v272 = vld [vmem:[%s250 + $0x4c] sm:$0xf]
        %v273 = vld [vmem:[%s250 + $0x50] sm:$0xf]
        %v274 = vld [vmem:[%s250 + $0x54] sm:$0xf]
        %v275 = vld [vmem:[%s250 + $0x58] sm:$0xf]
        %v276 = vld [vmem:[%s250 + $0x5c] sm:$0xf]
        %v277 = vld [vmem:[%s250 + $0x60] sm:$0xf]
        %v278 = vld [vmem:[%s250 + $0x64] sm:$0xf]
        %v279 = vld [vmem:[%s250 + $0x68] sm:$0xf]
        %v280 = vld [vmem:[%s250 + $0x6c] sm:$0xf]
        %v281 = vld [vmem:[%s250 + $0x70] sm:$0xf]
        %v282 = vld [vmem:[%s250 + $0x74] sm:$0xf]
        %v283 = vld [vmem:[%s250 + $0x78] sm:$0xf]
        %v284 = vld [vmem:[%s250 + $0x7c] sm:$0xf]
        %v285 = vld [vmem:[%s250 + $0x80] sm:$0xf]
        %v286 = vld [vmem:[%s250 + $0x84] sm:$0xf]
        %v287 = vld [vmem:[%s250 + $0x88] sm:$0xf]
        %v288 = vld [vmem:[%s250 + $0x8c] sm:$0xf]
        %v289 = vld [vmem:[%s250 + $0x90] sm:$0xf]
        %v290 = vld [vmem:[%s250 + $0x94] sm:$0xf]
        %v291 = vld [vmem:[%s250 + $0x98] sm:$0xf]
        %v292 = vld [vmem:[%s250 + $0x9c] sm:$0xf]
        %v293 = vld [vmem:[%s250 + $0xa0] sm:$0xf]
        %v294 = vld [vmem:[%s250 + $0xa4] sm:$0xf]
        %v295 = vld [vmem:[%s250 + $0xa8] sm:$0xf]
        %v296 = vld [vmem:[%s250 + $0xac] sm:$0xf]
        %v297 = vld [vmem:[%s250 + $0xb0] sm:$0xf]
        %v298 = vld [vmem:[%s250 + $0xb4] sm:$0xf]
        %v299 = vld [vmem:[%s250 + $0xb8] sm:$0xf]
        %v300 = vld [vmem:[%s250 + $0xbc] sm:$0xf]
        %v301 = vld [vmem:[%s250 + $0xc0] sm:$0xf]
        %v302 = vld [vmem:[%s250 + $0xc4] sm:$0xf]
        %v303 = vld [vmem:[%s250 + $0xc8] sm:$0xf]
        %v304 = vld [vmem:[%s250 + $0xcc] sm:$0xf]
        %v305 = vld [vmem:[%s250 + $0xd0] sm:$0xf]
        %v306 = vld [vmem:[%s250 + $0xd4] sm:$0xf]
        %v307 = vld [vmem:[%s250 + $0xd8] sm:$0xf]
        %v308 = vld [vmem:[%s250 + $0xdc] sm:$0xf]
        %v309 = vld [vmem:[%s250 + $0xe0] sm:$0xf]
        %v310 = vld [vmem:[%s250 + $0xe4] sm:$0xf]
        %v311 = vld [vmem:[%s250 + $0xe8] sm:$0xf]
        %v312 = vld [vmem:[%s250 + $0xec] sm:$0xf]
        %v313 = vld [vmem:[%s250 + $0xf0] sm:$0xf]
        %v314 = vld [vmem:[%s250 + $0xf4] sm:$0xf]
        %v315 = vld [vmem:[%s250 + $0xf8] sm:$0xf]
        %v316 = vld [vmem:[%s250 + $0xfc] sm:$0xf]
        %v317 = vld [vmem:[%s1] sm:$0x3]
        %v318 = vld [vmem:[%s250 + $0x100] sm:$0x1]
        %s319 = scalar_lea.vmem %s1, 2
        %v320 = vld [vmem:[%s319] sm:$0x3]
        %v386 = vunpack.c.l.b16 %v253
        %v387 = vunpack.c.l.b16 %v254
        %v388 = vunpack.c.l.b16 %v255
        %v389 = vunpack.c.l.b16 %v256
        %v390 = vunpack.c.l.b16 %v257
        %v391 = vunpack.c.l.b16 %v258
        %v392 = vunpack.c.l.b16 %v259
        %v393 = vunpack.c.l.b16 %v260
        %v394 = vunpack.c.l.b16 %v261
        %v395 = vunpack.c.l.b16 %v262
        %v396 = vunpack.c.l.b16 %v263
        %v397 = vunpack.c.l.b16 %v264
        %v398 = vunpack.c.l.b16 %v265
        %v399 = vunpack.c.l.b16 %v266
        %v400 = vunpack.c.l.b16 %v267
        %v401 = vunpack.c.l.b16 %v268
        %v402 = vunpack.c.l.b16 %v269
        %v403 = vunpack.c.l.b16 %v270
        %v404 = vunpack.c.l.b16 %v271
        %v405 = vunpack.c.l.b16 %v272
        %v406 = vunpack.c.l.b16 %v273
        %v407 = vunpack.c.l.b16 %v274
        %v408 = vunpack.c.l.b16 %v275
        %v409 = vunpack.c.l.b16 %v276
        %v410 = vunpack.c.l.b16 %v277
        %v411 = vunpack.c.l.b16 %v278
        %v412 = vunpack.c.l.b16 %v279
        %v413 = vunpack.c.l.b16 %v280
        %v414 = vunpack.c.l.b16 %v281
        %v415 = vunpack.c.l.b16 %v282
        %v416 = vunpack.c.l.b16 %v283
        %v417 = vunpack.c.l.b16 %v284
        %v418 = vunpack.c.l.b16 %v285
        %v419 = vunpack.c.l.b16 %v286
        %v420 = vunpack.c.l.b16 %v287
        %v421 = vunpack.c.l.b16 %v288
        %v422 = vunpack.c.l.b16 %v289
        %v423 = vunpack.c.l.b16 %v290
        %v424 = vunpack.c.l.b16 %v291
        %v425 = vunpack.c.l.b16 %v292
        %v426 = vunpack.c.l.b16 %v293
        %v427 = vunpack.c.l.b16 %v294
        %v428 = vunpack.c.l.b16 %v295
        %v429 = vunpack.c.l.b16 %v296
        %v430 = vunpack.c.l.b16 %v297
        %v431 = vunpack.c.l.b16 %v298
        %v432 = vunpack.c.l.b16 %v299
        %v433 = vunpack.c.l.b16 %v300
        %v434 = vunpack.c.l.b16 %v301
        %v435 = vunpack.c.l.b16 %v302
        %v436 = vunpack.c.l.b16 %v303
        %v437 = vunpack.c.l.b16 %v304
        %v438 = vunpack.c.l.b16 %v305
        %v439 = vunpack.c.l.b16 %v306
        %v440 = vunpack.c.l.b16 %v307
        %v441 = vunpack.c.l.b16 %v308
        %v442 = vunpack.c.l.b16 %v309
        %v443 = vunpack.c.l.b16 %v310
        %v444 = vunpack.c.l.b16 %v311
        %v445 = vunpack.c.l.b16 %v312
        %v446 = vunpack.c.l.b16 %v313
        %v447 = vunpack.c.l.b16 %v314
        %v448 = vunpack.c.l.b16 %v315
        %v449 = vunpack.c.l.b16 %v316
        %v450 = vunpack.c.l.b16 %v318
        %v451 = vpack.c.b16 %v387, %v386
        %v452 = vpack.c.b16 %v389, %v388
        %v453 = vpack.c.b16 %v391, %v390
        %v454 = vpack.c.b16 %v393, %v392
        %v455 = vpack.c.b16 %v395, %v394
        %v456 = vpack.c.b16 %v397, %v396
        %v457 = vpack.c.b16 %v399, %v398
        %v458 = vpack.c.b16 %v401, %v400
        %v459 = vpack.c.b16 %v403, %v402
        %v460 = vpack.c.b16 %v405, %v404
        %v461 = vpack.c.b16 %v407, %v406
        %v462 = vpack.c.b16 %v409, %v408
        %v463 = vpack.c.b16 %v411, %v410
        %v464 = vpack.c.b16 %v413, %v412
        %v465 = vpack.c.b16 %v415, %v414
        %v466 = vpack.c.b16 %v417, %v416
        %v467 = vpack.c.b16 %v419, %v418
        %v468 = vpack.c.b16 %v421, %v420
        %v469 = vpack.c.b16 %v423, %v422
        %v470 = vpack.c.b16 %v425, %v424
        %v471 = vpack.c.b16 %v427, %v426
        %v472 = vpack.c.b16 %v429, %v428
        %v473 = vpack.c.b16 %v431, %v430
        %v474 = vpack.c.b16 %v433, %v432
        %v475 = vpack.c.b16 %v435, %v434
        %v476 = vpack.c.b16 %v437, %v436
        %v477 = vpack.c.b16 %v439, %v438
        %v478 = vpack.c.b16 %v441, %v440
        %v479 = vpack.c.b16 %v443, %v442
        %v480 = vpack.c.b16 %v445, %v444
        %v481 = vpack.c.b16 %v447, %v446
        %v482 = vpack.c.b16 %v449, %v448
        %v483 = vpack.c.b16 %v450, %v450
        %vm484 = vsmask.f32 7424
        %v486 = vshrl.u32 %v451, 16
        %v488 = vshll.u32 %v451, 16
        %v490 = vrot.slane %v488, 1
        %v491 = vor.u32 %v486, %v490
        %v493 = vshll.u32 %v452, 16
        %v495 = vrot.slane %v493, 1
        %v496 = vsel %vm484, %v491, %v495
        %v497 = vshrl.u32 %v452, 16
        %v499 = vor.u32 %v497, %v495
        %v501 = vshll.u32 %v453, 16
        %v503 = vrot.slane %v501, 1
        %v504 = vsel %vm484, %v499, %v503
        %v505 = vshrl.u32 %v453, 16
        %v507 = vor.u32 %v505, %v503
        %v509 = vshll.u32 %v454, 16
        %v511 = vrot.slane %v509, 1
        %v512 = vsel %vm484, %v507, %v511
        %v513 = vshrl.u32 %v454, 16
        %v515 = vor.u32 %v513, %v511
        %v517 = vshll.u32 %v455, 16
        %v519 = vrot.slane %v517, 1
        %v520 = vsel %vm484, %v515, %v519
        %v521 = vshrl.u32 %v455, 16
        %v523 = vor.u32 %v521, %v519
        %v525 = vshll.u32 %v456, 16
        %v527 = vrot.slane %v525, 1
        %v528 = vsel %vm484, %v523, %v527
        %v529 = vshrl.u32 %v456, 16
        %v531 = vor.u32 %v529, %v527
        %v533 = vshll.u32 %v457, 16
        %v535 = vrot.slane %v533, 1
        %v536 = vsel %vm484, %v531, %v535
        %v537 = vshrl.u32 %v457, 16
        %v539 = vor.u32 %v537, %v535
        %v541 = vshll.u32 %v458, 16
        %v543 = vrot.slane %v541, 1
        %v544 = vsel %vm484, %v539, %v543
        %v545 = vshrl.u32 %v458, 16
        %v547 = vor.u32 %v545, %v543
        %v549 = vshll.u32 %v459, 16
        %v551 = vrot.slane %v549, 1
        %v552 = vsel %vm484, %v547, %v551
        %v553 = vshrl.u32 %v459, 16
        %v555 = vor.u32 %v553, %v551
        %v557 = vshll.u32 %v460, 16
        %v559 = vrot.slane %v557, 1
        %v560 = vsel %vm484, %v555, %v559
        %v561 = vshrl.u32 %v460, 16
        %v563 = vor.u32 %v561, %v559
        %v565 = vshll.u32 %v461, 16
        %v567 = vrot.slane %v565, 1
        %v568 = vsel %vm484, %v563, %v567
        %v569 = vshrl.u32 %v461, 16
        %v571 = vor.u32 %v569, %v567
        %v573 = vshll.u32 %v462, 16
        %v575 = vrot.slane %v573, 1
        %v576 = vsel %vm484, %v571, %v575
        %v577 = vshrl.u32 %v462, 16
        %v579 = vor.u32 %v577, %v575
        %v581 = vshll.u32 %v463, 16
        %v583 = vrot.slane %v581, 1
        %v584 = vsel %vm484, %v579, %v583
        %v585 = vshrl.u32 %v463, 16
        %v587 = vor.u32 %v585, %v583
        %v589 = vshll.u32 %v464, 16
        %v591 = vrot.slane %v589, 1
        %v592 = vsel %vm484, %v587, %v591
        %v593 = vshrl.u32 %v464, 16
        %v595 = vor.u32 %v593, %v591
        %v597 = vshll.u32 %v465, 16
        %v599 = vrot.slane %v597, 1
        %v600 = vsel %vm484, %v595, %v599
        %v601 = vshrl.u32 %v465, 16
        %v603 = vor.u32 %v601, %v599
        %v605 = vshll.u32 %v466, 16
        %v607 = vrot.slane %v605, 1
        %v608 = vsel %vm484, %v603, %v607
        %v609 = vshrl.u32 %v466, 16
        %v611 = vor.u32 %v609, %v607
        %v613 = vshll.u32 %v467, 16
        %v615 = vrot.slane %v613, 1
        %v616 = vsel %vm484, %v611, %v615
        %v617 = vshrl.u32 %v467, 16
        %v619 = vor.u32 %v617, %v615
        %v621 = vshll.u32 %v468, 16
        %v623 = vrot.slane %v621, 1
        %v624 = vsel %vm484, %v619, %v623
        %v625 = vshrl.u32 %v468, 16
        %v627 = vor.u32 %v625, %v623
        %v629 = vshll.u32 %v469, 16
        %v631 = vrot.slane %v629, 1
        %v632 = vsel %vm484, %v627, %v631
        %v633 = vshrl.u32 %v469, 16
        %v635 = vor.u32 %v633, %v631
        %v637 = vshll.u32 %v470, 16
        %v639 = vrot.slane %v637, 1
        %v640 = vsel %vm484, %v635, %v639
        %v641 = vshrl.u32 %v470, 16
        %v643 = vor.u32 %v641, %v639
        %v645 = vshll.u32 %v471, 16
        %v647 = vrot.slane %v645, 1
        %v648 = vsel %vm484, %v643, %v647
        %v649 = vshrl.u32 %v471, 16
        %v651 = vor.u32 %v649, %v647
        %v653 = vshll.u32 %v472, 16
        %v655 = vrot.slane %v653, 1
        %v656 = vsel %vm484, %v651, %v655
        %v657 = vshrl.u32 %v472, 16
        %v659 = vor.u32 %v657, %v655
        %v661 = vshll.u32 %v473, 16
        %v663 = vrot.slane %v661, 1
        %v664 = vsel %vm484, %v659, %v663
        %v665 = vshrl.u32 %v473, 16
        %v667 = vor.u32 %v665, %v663
        %v669 = vshll.u32 %v474, 16
        %v671 = vrot.slane %v669, 1
        %v672 = vsel %vm484, %v667, %v671
        %v673 = vshrl.u32 %v474, 16
        %v675 = vor.u32 %v673, %v671
        %v677 = vshll.u32 %v475, 16
        %v679 = vrot.slane %v677, 1
        %v680 = vsel %vm484, %v675, %v679
        %v681 = vshrl.u32 %v475, 16
        %v683 = vor.u32 %v681, %v679
        %v685 = vshll.u32 %v476, 16
        %v687 = vrot.slane %v685, 1
        %v688 = vsel %vm484, %v683, %v687
        %v689 = vshrl.u32 %v476, 16
        %v691 = vor.u32 %v689, %v687
        %v693 = vshll.u32 %v477, 16
        %v695 = vrot.slane %v693, 1
        %v696 = vsel %vm484, %v691, %v695
        %v697 = vshrl.u32 %v477, 16
        %v699 = vor.u32 %v697, %v695
        %v701 = vshll.u32 %v478, 16
        %v703 = vrot.slane %v701, 1
        %v704 = vsel %vm484, %v699, %v703
        %v705 = vshrl.u32 %v478, 16
        %v707 = vor.u32 %v705, %v703
        %v709 = vshll.u32 %v479, 16
        %v711 = vrot.slane %v709, 1
        %v712 = vsel %vm484, %v707, %v711
        %v713 = vshrl.u32 %v479, 16
        %v715 = vor.u32 %v713, %v711
        %v717 = vshll.u32 %v480, 16
        %v719 = vrot.slane %v717, 1
        %v720 = vsel %vm484, %v715, %v719
        %v721 = vshrl.u32 %v480, 16
        %v723 = vor.u32 %v721, %v719
        %v725 = vshll.u32 %v481, 16
        %v727 = vrot.slane %v725, 1
        %v728 = vsel %vm484, %v723, %v727
        %v729 = vshrl.u32 %v481, 16
        %v731 = vor.u32 %v729, %v727
        %v733 = vshll.u32 %v482, 16
        %v735 = vrot.slane %v733, 1
        %v736 = vsel %vm484, %v731, %v735
        %v737 = vshrl.u32 %v482, 16
        %v739 = vor.u32 %v737, %v735
        %v741 = vshll.u32 %v483, 16
        %v743 = vrot.slane %v741, 1
        %v744 = vsel %vm484, %v739, %v743
        %vm745 = vcmask 31744
        %v747 = vsel %vm745, %v496, 0
        %v750 = vsel %vm745, %v504, 0
        %v753 = vsel %vm745, %v512, 0
        %v756 = vsel %vm745, %v520, 0
        %v759 = vsel %vm745, %v528, 0
        %v762 = vsel %vm745, %v536, 0
        %v765 = vsel %vm745, %v544, 0
        %v768 = vsel %vm745, %v552, 0
        %v771 = vsel %vm745, %v560, 0
        %v774 = vsel %vm745, %v568, 0
        %v777 = vsel %vm745, %v576, 0
        %v780 = vsel %vm745, %v584, 0
        %v783 = vsel %vm745, %v592, 0
        %v786 = vsel %vm745, %v600, 0
        %v789 = vsel %vm745, %v608, 0
        %v792 = vsel %vm745, %v616, 0
        %v795 = vsel %vm745, %v624, 0
        %v798 = vsel %vm745, %v632, 0
        %v801 = vsel %vm745, %v640, 0
        %v804 = vsel %vm745, %v648, 0
        %v807 = vsel %vm745, %v656, 0
        %v810 = vsel %vm745, %v664, 0
        %v813 = vsel %vm745, %v672, 0
        %v816 = vsel %vm745, %v680, 0
        %v819 = vsel %vm745, %v688, 0
        %v822 = vsel %vm745, %v696, 0
        %v825 = vsel %vm745, %v704, 0
        %v828 = vsel %vm745, %v712, 0
        %v831 = vsel %vm745, %v720, 0
        %v834 = vsel %vm745, %v728, 0
        %v837 = vsel %vm745, %v736, 0
        %v840 = vsel %vm745, %v744, 0
        %vm842 = vcmask 1041408
        %v844 = vsel %vm842, %v320, 0
        %846 = vmatprep.subr.bf16.mxu0 0
        %847 = vmatpush1.bf16.msra.mxu0 0
        %848 = vmatprep.subr.bf16.mxu0 0
        %849 = vmatpush1.bf16.msra.mxu0 0
        %850 = vmatprep.subr.bf16.mxu0 0
        %851 = vmatpush1.bf16.msra.mxu0 0
        %852 = vmatprep.subr.bf16.mxu0 0
        %853 = vmatpush1.bf16.msra.mxu0 0
        %854 = vmatprep.subr.bf16.mxu0 0
        %855 = vmatpush1.bf16.msra.mxu0 0
        %856 = vmatprep.subr.bf16.mxu0 0
        %857 = vmatpush1.bf16.msra.mxu0 0
        %858 = vmatprep.subr.bf16.mxu0 0
        %859 = vmatpush1.bf16.msra.mxu0 0
        %860 = vmatprep.subr.bf16.mxu0 0
        %861 = vmatpush1.bf16.msra.mxu0 %v844
        %862 = vmatprep.subr.bf16.mxu0 0
        %863 = vmatpush2.bf16.msra.mxu0 0
        %864 = vmatprep.subr.bf16.mxu0 0
        %865 = vmatpush2.bf16.msra.mxu0 0
        %866 = vmatprep.subr.bf16.mxu0 0
        %867 = vmatpush2.bf16.msra.mxu0 0
        %868 = vmatprep.subr.bf16.mxu0 0
        %869 = vmatpush2.bf16.msra.mxu0 0
        %870 = vmatprep.subr.bf16.mxu0 0
        %871 = vmatpush2.bf16.msra.mxu0 0
        %872 = vmatprep.subr.bf16.mxu0 0
        %873 = vmatpush2.bf16.msra.mxu0 0
        %874 = vmatprep.subr.bf16.mxu0 0
        %875 = vmatpush2.bf16.msra.mxu0 0
        %876 = vmatprep.subr.bf16.mxu0 0
        %877 = vmatpush2.bf16.msra.mxu0 0
        %878 = vmatprep.mubr.bf16.mxu0 0
        %879 = vmatmul.mubr.bf16.gmra.mxu0 %v747
        %v880 = vpop.f32.mrf.mxu0
        %v881 = vadd.f32 0.0, %v880
        %v882 = vpop.f32.mrf.mxu0
        %v883 = vpop.f32.mrf.mxu0
        %v884 = vadd.f32 0.0, %v883
        %v885 = vpop.f32.mrf.mxu0
        %886 = vmatprep.mubr.bf16.mxu0 0
        %887 = vmatmul.mubr.bf16.gmra.mxu0 %v750
        %v888 = vpop.f32.mrf.mxu0
        %v889 = vadd.f32 0.0, %v888
        %v890 = vpop.f32.mrf.mxu0
        %v891 = vpop.f32.mrf.mxu0
        %v892 = vadd.f32 0.0, %v891
        %v893 = vpop.f32.mrf.mxu0
        %894 = vmatprep.mubr.bf16.mxu0 0
        %895 = vmatmul.mubr.bf16.gmra.mxu0 %v753
        %v896 = vpop.f32.mrf.mxu0
        %v897 = vadd.f32 0.0, %v896
        %v898 = vpop.f32.mrf.mxu0
        %v899 = vpop.f32.mrf.mxu0
        %v900 = vadd.f32 0.0, %v899
        %v901 = vpop.f32.mrf.mxu0
        %902 = vmatprep.mubr.bf16.mxu0 0
        %903 = vmatmul.mubr.bf16.gmra.mxu0 %v756
        %v904 = vpop.f32.mrf.mxu0
        %v905 = vadd.f32 0.0, %v904
        %v906 = vpop.f32.mrf.mxu0
        %v907 = vpop.f32.mrf.mxu0
        %v908 = vadd.f32 0.0, %v907
        %v909 = vpop.f32.mrf.mxu0
        %910 = vmatprep.mubr.bf16.mxu0 0
        %911 = vmatmul.mubr.bf16.gmra.mxu0 %v759
        %v912 = vpop.f32.mrf.mxu0
        %v913 = vadd.f32 0.0, %v912
        %v914 = vpop.f32.mrf.mxu0
        %v915 = vpop.f32.mrf.mxu0
        %v916 = vadd.f32 0.0, %v915
        %v917 = vpop.f32.mrf.mxu0
        %918 = vmatprep.mubr.bf16.mxu0 0
        %919 = vmatmul.mubr.bf16.gmra.mxu0 %v762
        %v920 = vpop.f32.mrf.mxu0
        %v921 = vadd.f32 0.0, %v920
        %v922 = vpop.f32.mrf.mxu0
        %v923 = vpop.f32.mrf.mxu0
        %v924 = vadd.f32 0.0, %v923
        %v925 = vpop.f32.mrf.mxu0
        %926 = vmatprep.mubr.bf16.mxu0 0
        %927 = vmatmul.mubr.bf16.gmra.mxu0 %v765
        %v928 = vpop.f32.mrf.mxu0
        %v929 = vadd.f32 0.0, %v928
        %v930 = vpop.f32.mrf.mxu0
        %v931 = vpop.f32.mrf.mxu0
        %v932 = vadd.f32 0.0, %v931
        %v933 = vpop.f32.mrf.mxu0
        %934 = vmatprep.mubr.bf16.mxu0 0
        %935 = vmatmul.mubr.bf16.gmra.mxu0 %v768
        %v936 = vpop.f32.mrf.mxu0
        %v937 = vadd.f32 0.0, %v936
        %v938 = vpop.f32.mrf.mxu0
        %v939 = vpop.f32.mrf.mxu0
        %v940 = vadd.f32 0.0, %v939
        %v941 = vpop.f32.mrf.mxu0
        %942 = vmatprep.mubr.bf16.mxu0 0
        %943 = vmatmul.mubr.bf16.gmra.mxu0 %v771
        %v944 = vpop.f32.mrf.mxu0
        %v945 = vadd.f32 0.0, %v944
        %v946 = vpop.f32.mrf.mxu0
        %v947 = vpop.f32.mrf.mxu0
        %v948 = vadd.f32 0.0, %v947
        %v949 = vpop.f32.mrf.mxu0
        %950 = vmatprep.mubr.bf16.mxu0 0
        %951 = vmatmul.mubr.bf16.gmra.mxu0 %v774
        %v952 = vpop.f32.mrf.mxu0
        %v953 = vadd.f32 0.0, %v952
        %v954 = vpop.f32.mrf.mxu0
        %v955 = vpop.f32.mrf.mxu0
        %v956 = vadd.f32 0.0, %v955
        %v957 = vpop.f32.mrf.mxu0
        %958 = vmatprep.mubr.bf16.mxu0 0
        %959 = vmatmul.mubr.bf16.gmra.mxu0 %v777
        %v960 = vpop.f32.mrf.mxu0
        %v961 = vadd.f32 0.0, %v960
        %v962 = vpop.f32.mrf.mxu0
        %v963 = vpop.f32.mrf.mxu0
        %v964 = vadd.f32 0.0, %v963
        %v965 = vpop.f32.mrf.mxu0
        %966 = vmatprep.mubr.bf16.mxu0 0
        %967 = vmatmul.mubr.bf16.gmra.mxu0 %v780
        %v968 = vpop.f32.mrf.mxu0
        %v969 = vadd.f32 0.0, %v968
        %v970 = vpop.f32.mrf.mxu0
        %v971 = vpop.f32.mrf.mxu0
        %v972 = vadd.f32 0.0, %v971
        %v973 = vpop.f32.mrf.mxu0
        %974 = vmatprep.mubr.bf16.mxu0 0
        %975 = vmatmul.mubr.bf16.gmra.mxu0 %v783
        %v976 = vpop.f32.mrf.mxu0
        %v977 = vadd.f32 0.0, %v976
        %v978 = vpop.f32.mrf.mxu0
        %v979 = vpop.f32.mrf.mxu0
        %v980 = vadd.f32 0.0, %v979
        %v981 = vpop.f32.mrf.mxu0
        %982 = vmatprep.mubr.bf16.mxu0 0
        %983 = vmatmul.mubr.bf16.gmra.mxu0 %v786
        %v984 = vpop.f32.mrf.mxu0
        %v985 = vadd.f32 0.0, %v984
        %v986 = vpop.f32.mrf.mxu0
        %v987 = vpop.f32.mrf.mxu0
        %v988 = vadd.f32 0.0, %v987
        %v989 = vpop.f32.mrf.mxu0
        %990 = vmatprep.mubr.bf16.mxu0 0
        %991 = vmatmul.mubr.bf16.gmra.mxu0 %v789
        %v992 = vpop.f32.mrf.mxu0
        %v993 = vadd.f32 0.0, %v992
        %v994 = vpop.f32.mrf.mxu0
        %v995 = vpop.f32.mrf.mxu0
        %v996 = vadd.f32 0.0, %v995
        %v997 = vpop.f32.mrf.mxu0
        %998 = vmatprep.mubr.bf16.mxu0 0
        %999 = vmatmul.mubr.bf16.gmra.mxu0 %v792
        %v1000 = vpop.f32.mrf.mxu0
        %v1001 = vadd.f32 0.0, %v1000
        %v1002 = vpop.f32.mrf.mxu0
        %v1003 = vpop.f32.mrf.mxu0
        %v1004 = vadd.f32 0.0, %v1003
        %v1005 = vpop.f32.mrf.mxu0
        %1006 = vmatprep.mubr.bf16.mxu0 0
        %1007 = vmatmul.mubr.bf16.gmra.mxu0 %v795
        %v1008 = vpop.f32.mrf.mxu0
        %v1009 = vadd.f32 0.0, %v1008
        %v1010 = vpop.f32.mrf.mxu0
        %v1011 = vpop.f32.mrf.mxu0
        %v1012 = vadd.f32 0.0, %v1011
        %v1013 = vpop.f32.mrf.mxu0
        %1014 = vmatprep.mubr.bf16.mxu0 0
        %1015 = vmatmul.mubr.bf16.gmra.mxu0 %v798
        %v1016 = vpop.f32.mrf.mxu0
        %v1017 = vadd.f32 0.0, %v1016
        %v1018 = vpop.f32.mrf.mxu0
        %v1019 = vpop.f32.mrf.mxu0
        %v1020 = vadd.f32 0.0, %v1019
        %v1021 = vpop.f32.mrf.mxu0
        %1022 = vmatprep.mubr.bf16.mxu0 0
        %1023 = vmatmul.mubr.bf16.gmra.mxu0 %v801
        %v1024 = vpop.f32.mrf.mxu0
        %v1025 = vadd.f32 0.0, %v1024
        %v1026 = vpop.f32.mrf.mxu0
        %v1027 = vpop.f32.mrf.mxu0
        %v1028 = vadd.f32 0.0, %v1027
        %v1029 = vpop.f32.mrf.mxu0
        %1030 = vmatprep.mubr.bf16.mxu0 0
        %1031 = vmatmul.mubr.bf16.gmra.mxu0 %v804
        %v1032 = vpop.f32.mrf.mxu0
        %v1033 = vadd.f32 0.0, %v1032
        %v1034 = vpop.f32.mrf.mxu0
        %v1035 = vpop.f32.mrf.mxu0
        %v1036 = vadd.f32 0.0, %v1035
        %v1037 = vpop.f32.mrf.mxu0
        %1038 = vmatprep.mubr.bf16.mxu0 0
        %1039 = vmatmul.mubr.bf16.gmra.mxu0 %v807
        %v1040 = vpop.f32.mrf.mxu0
        %v1041 = vadd.f32 0.0, %v1040
        %v1042 = vpop.f32.mrf.mxu0
        %v1043 = vpop.f32.mrf.mxu0
        %v1044 = vadd.f32 0.0, %v1043
        %v1045 = vpop.f32.mrf.mxu0
        %1046 = vmatprep.mubr.bf16.mxu0 0
        %1047 = vmatmul.mubr.bf16.gmra.mxu0 %v810
        %v1048 = vpop.f32.mrf.mxu0
        %v1049 = vadd.f32 0.0, %v1048
        %v1050 = vpop.f32.mrf.mxu0
        %v1051 = vpop.f32.mrf.mxu0
        %v1052 = vadd.f32 0.0, %v1051
        %v1053 = vpop.f32.mrf.mxu0
        %1054 = vmatprep.mubr.bf16.mxu0 0
        %1055 = vmatmul.mubr.bf16.gmra.mxu0 %v813
        %v1056 = vpop.f32.mrf.mxu0
        %v1057 = vadd.f32 0.0, %v1056
        %v1058 = vpop.f32.mrf.mxu0
        %v1059 = vpop.f32.mrf.mxu0
        %v1060 = vadd.f32 0.0, %v1059
        %v1061 = vpop.f32.mrf.mxu0
        %1062 = vmatprep.mubr.bf16.mxu0 0
        %1063 = vmatmul.mubr.bf16.gmra.mxu0 %v816
        %v1064 = vpop.f32.mrf.mxu0
        %v1065 = vadd.f32 0.0, %v1064
        %v1066 = vpop.f32.mrf.mxu0
        %v1067 = vpop.f32.mrf.mxu0
        %v1068 = vadd.f32 0.0, %v1067
        %v1069 = vpop.f32.mrf.mxu0
        %1070 = vmatprep.mubr.bf16.mxu0 0
        %1071 = vmatmul.mubr.bf16.gmra.mxu0 %v819
        %v1072 = vpop.f32.mrf.mxu0
        %v1073 = vadd.f32 0.0, %v1072
        %v1074 = vpop.f32.mrf.mxu0
        %v1075 = vpop.f32.mrf.mxu0
        %v1076 = vadd.f32 0.0, %v1075
        %v1077 = vpop.f32.mrf.mxu0
        %1078 = vmatprep.mubr.bf16.mxu0 0
        %1079 = vmatmul.mubr.bf16.gmra.mxu0 %v822
        %v1080 = vpop.f32.mrf.mxu0
        %v1081 = vadd.f32 0.0, %v1080
        %v1082 = vpop.f32.mrf.mxu0
        %v1083 = vpop.f32.mrf.mxu0
        %v1084 = vadd.f32 0.0, %v1083
        %v1085 = vpop.f32.mrf.mxu0
        %1086 = vmatprep.mubr.bf16.mxu0 0
        %1087 = vmatmul.mubr.bf16.gmra.mxu0 %v825
        %v1088 = vpop.f32.mrf.mxu0
        %v1089 = vadd.f32 0.0, %v1088
        %v1090 = vpop.f32.mrf.mxu0
        %v1091 = vpop.f32.mrf.mxu0
        %v1092 = vadd.f32 0.0, %v1091
        %v1093 = vpop.f32.mrf.mxu0
        %1094 = vmatprep.mubr.bf16.mxu0 0
        %1095 = vmatmul.mubr.bf16.gmra.mxu0 %v828
        %v1096 = vpop.f32.mrf.mxu0
        %v1097 = vadd.f32 0.0, %v1096
        %v1098 = vpop.f32.mrf.mxu0
        %v1099 = vpop.f32.mrf.mxu0
        %v1100 = vadd.f32 0.0, %v1099
        %v1101 = vpop.f32.mrf.mxu0
        %1102 = vmatprep.mubr.bf16.mxu0 0
        %1103 = vmatmul.mubr.bf16.gmra.mxu0 %v831
        %v1104 = vpop.f32.mrf.mxu0
        %v1105 = vadd.f32 0.0, %v1104
        %v1106 = vpop.f32.mrf.mxu0
        %v1107 = vpop.f32.mrf.mxu0
        %v1108 = vadd.f32 0.0, %v1107
        %v1109 = vpop.f32.mrf.mxu0
        %1110 = vmatprep.mubr.bf16.mxu0 0
        %1111 = vmatmul.mubr.bf16.gmra.mxu0 %v834
        %v1112 = vpop.f32.mrf.mxu0
        %v1113 = vadd.f32 0.0, %v1112
        %v1114 = vpop.f32.mrf.mxu0
        %v1115 = vpop.f32.mrf.mxu0
        %v1116 = vadd.f32 0.0, %v1115
        %v1117 = vpop.f32.mrf.mxu0
        %1118 = vmatprep.mubr.bf16.mxu0 0
        %1119 = vmatmul.mubr.bf16.gmra.mxu0 %v837
        %v1120 = vpop.f32.mrf.mxu0
        %v1121 = vadd.f32 0.0, %v1120
        %v1122 = vpop.f32.mrf.mxu0
        %v1123 = vpop.f32.mrf.mxu0
        %v1124 = vadd.f32 0.0, %v1123
        %v1125 = vpop.f32.mrf.mxu0
        %1126 = vmatprep.mubr.bf16.mxu0 0
        %1127 = vmatmul.mubr.bf16.gmra.mxu0 %v840
        %v1128 = vpop.f32.mrf.mxu0
        %v1129 = vadd.f32 0.0, %v1128
        %v1130 = vpop.f32.mrf.mxu0
        %v1131 = vpop.f32.mrf.mxu0
        %v1132 = vadd.f32 0.0, %v1131
        %v1133 = vpop.f32.mrf.mxu0
        %1134 = vdwg.mxu0
        %v1135 = vsel %vm745, %v451, 0
        %v1137 = vsel %vm745, %v452, 0
        %v1139 = vsel %vm745, %v453, 0
        %v1141 = vsel %vm745, %v454, 0
        %v1143 = vsel %vm745, %v455, 0
        %v1145 = vsel %vm745, %v456, 0
        %v1147 = vsel %vm745, %v457, 0
        %v1149 = vsel %vm745, %v458, 0
        %v1151 = vsel %vm745, %v459, 0
        %v1153 = vsel %vm745, %v460, 0
        %v1155 = vsel %vm745, %v461, 0
        %v1157 = vsel %vm745, %v462, 0
        %v1159 = vsel %vm745, %v463, 0
        %v1161 = vsel %vm745, %v464, 0
        %v1163 = vsel %vm745, %v465, 0
        %v1165 = vsel %vm745, %v466, 0
        %v1167 = vsel %vm745, %v467, 0
        %v1169 = vsel %vm745, %v468, 0
        %v1171 = vsel %vm745, %v469, 0
        %v1173 = vsel %vm745, %v470, 0
        %v1175 = vsel %vm745, %v471, 0
        %v1177 = vsel %vm745, %v472, 0
        %v1179 = vsel %vm745, %v473, 0
        %v1181 = vsel %vm745, %v474, 0
        %v1183 = vsel %vm745, %v475, 0
        %v1185 = vsel %vm745, %v476, 0
        %v1187 = vsel %vm745, %v477, 0
        %v1189 = vsel %vm745, %v478, 0
        %v1191 = vsel %vm745, %v479, 0
        %v1193 = vsel %vm745, %v480, 0
        %v1195 = vsel %vm745, %v481, 0
        %v1197 = vsel %vm745, %v482, 0
        %v1200 = vsel %vm842, %v317, 0
        %1202 = vmatprep.subr.bf16.mxu0 0
        %1203 = vmatpush1.bf16.msra.mxu0 0
        %1204 = vmatprep.subr.bf16.mxu0 0
        %1205 = vmatpush1.bf16.msra.mxu0 0
        %1206 = vmatprep.subr.bf16.mxu0 0
        %1207 = vmatpush1.bf16.msra.mxu0 0
        %1208 = vmatprep.subr.bf16.mxu0 0
        %1209 = vmatpush1.bf16.msra.mxu0 0
        %1210 = vmatprep.subr.bf16.mxu0 0
        %1211 = vmatpush1.bf16.msra.mxu0 0
        %1212 = vmatprep.subr.bf16.mxu0 0
        %1213 = vmatpush1.bf16.msra.mxu0 0
        %1214 = vmatprep.subr.bf16.mxu0 0
        %1215 = vmatpush1.bf16.msra.mxu0 0
        %1216 = vmatprep.subr.bf16.mxu0 0
        %1217 = vmatpush1.bf16.msra.mxu0 %v1200
        %1218 = vmatprep.subr.bf16.mxu0 0
        %1219 = vmatpush2.bf16.msra.mxu0 0
        %1220 = vmatprep.subr.bf16.mxu0 0
        %1221 = vmatpush2.bf16.msra.mxu0 0
        %1222 = vmatprep.subr.bf16.mxu0 0
        %1223 = vmatpush2.bf16.msra.mxu0 0
        %1224 = vmatprep.subr.bf16.mxu0 0
        %1225 = vmatpush2.bf16.msra.mxu0 0
        %1226 = vmatprep.subr.bf16.mxu0 0
        %1227 = vmatpush2.bf16.msra.mxu0 0
        %1228 = vmatprep.subr.bf16.mxu0 0
        %1229 = vmatpush2.bf16.msra.mxu0 0
        %1230 = vmatprep.subr.bf16.mxu0 0
        %1231 = vmatpush2.bf16.msra.mxu0 0
        %1232 = vmatprep.subr.bf16.mxu0 0
        %1233 = vmatpush2.bf16.msra.mxu0 0
        %1234 = vmatprep.mubr.bf16.mxu0 0
        %1235 = vmatmul.mubr.bf16.gmra.mxu0 %v1135
        %v1236 = vpop.f32.mrf.mxu0
        %v1237 = vadd.f32 %v881, %v1236
        %v1238 = vpop.f32.mrf.mxu0
        %v1239 = vpop.f32.mrf.mxu0
        %v1240 = vadd.f32 %v884, %v1239
        %v1241 = vpop.f32.mrf.mxu0
        %1242 = vmatprep.mubr.bf16.mxu0 0
        %1243 = vmatmul.mubr.bf16.gmra.mxu0 %v1137
        %v1244 = vpop.f32.mrf.mxu0
        %v1245 = vadd.f32 %v889, %v1244
        %v1246 = vpop.f32.mrf.mxu0
        %v1247 = vpop.f32.mrf.mxu0
        %v1248 = vadd.f32 %v892, %v1247
        %v1249 = vpop.f32.mrf.mxu0
        %1250 = vmatprep.mubr.bf16.mxu0 0
        %1251 = vmatmul.mubr.bf16.gmra.mxu0 %v1139
        %v1252 = vpop.f32.mrf.mxu0
        %v1253 = vadd.f32 %v897, %v1252
        %v1254 = vpop.f32.mrf.mxu0
        %v1255 = vpop.f32.mrf.mxu0
        %v1256 = vadd.f32 %v900, %v1255
        %v1257 = vpop.f32.mrf.mxu0
        %1258 = vmatprep.mubr.bf16.mxu0 0
        %1259 = vmatmul.mubr.bf16.gmra.mxu0 %v1141
        %v1260 = vpop.f32.mrf.mxu0
        %v1261 = vadd.f32 %v905, %v1260
        %v1262 = vpop.f32.mrf.mxu0
        %v1263 = vpop.f32.mrf.mxu0
        %v1264 = vadd.f32 %v908, %v1263
        %v1265 = vpop.f32.mrf.mxu0
        %1266 = vmatprep.mubr.bf16.mxu0 0
        %1267 = vmatmul.mubr.bf16.gmra.mxu0 %v1143
        %v1268 = vpop.f32.mrf.mxu0
        %v1269 = vadd.f32 %v913, %v1268
        %v1270 = vpop.f32.mrf.mxu0
        %v1271 = vpop.f32.mrf.mxu0
        %v1272 = vadd.f32 %v916, %v1271
        %v1273 = vpop.f32.mrf.mxu0
        %1274 = vmatprep.mubr.bf16.mxu0 0
        %1275 = vmatmul.mubr.bf16.gmra.mxu0 %v1145
        %v1276 = vpop.f32.mrf.mxu0
        %v1277 = vadd.f32 %v921, %v1276
        %v1278 = vpop.f32.mrf.mxu0
        %v1279 = vpop.f32.mrf.mxu0
        %v1280 = vadd.f32 %v924, %v1279
        %v1281 = vpop.f32.mrf.mxu0
        %1282 = vmatprep.mubr.bf16.mxu0 0
        %1283 = vmatmul.mubr.bf16.gmra.mxu0 %v1147
        %v1284 = vpop.f32.mrf.mxu0
        %v1285 = vadd.f32 %v929, %v1284
        %v1286 = vpop.f32.mrf.mxu0
        %v1287 = vpop.f32.mrf.mxu0
        %v1288 = vadd.f32 %v932, %v1287
        %v1289 = vpop.f32.mrf.mxu0
        %1290 = vmatprep.mubr.bf16.mxu0 0
        %1291 = vmatmul.mubr.bf16.gmra.mxu0 %v1149
        %v1292 = vpop.f32.mrf.mxu0
        %v1293 = vadd.f32 %v937, %v1292
        %v1294 = vpop.f32.mrf.mxu0
        %v1295 = vpop.f32.mrf.mxu0
        %v1296 = vadd.f32 %v940, %v1295
        %v1297 = vpop.f32.mrf.mxu0
        %1298 = vmatprep.mubr.bf16.mxu0 0
        %1299 = vmatmul.mubr.bf16.gmra.mxu0 %v1151
        %v1300 = vpop.f32.mrf.mxu0
        %v1301 = vadd.f32 %v945, %v1300
        %v1302 = vpop.f32.mrf.mxu0
        %v1303 = vpop.f32.mrf.mxu0
        %v1304 = vadd.f32 %v948, %v1303
        %v1305 = vpop.f32.mrf.mxu0
        %1306 = vmatprep.mubr.bf16.mxu0 0
        %1307 = vmatmul.mubr.bf16.gmra.mxu0 %v1153
        %v1308 = vpop.f32.mrf.mxu0
        %v1309 = vadd.f32 %v953, %v1308
        %v1310 = vpop.f32.mrf.mxu0
        %v1311 = vpop.f32.mrf.mxu0
        %v1312 = vadd.f32 %v956, %v1311
        %v1313 = vpop.f32.mrf.mxu0
        %1314 = vmatprep.mubr.bf16.mxu0 0
        %1315 = vmatmul.mubr.bf16.gmra.mxu0 %v1155
        %v1316 = vpop.f32.mrf.mxu0
        %v1317 = vadd.f32 %v961, %v1316
        %v1318 = vpop.f32.mrf.mxu0
        %v1319 = vpop.f32.mrf.mxu0
        %v1320 = vadd.f32 %v964, %v1319
        %v1321 = vpop.f32.mrf.mxu0
        %1322 = vmatprep.mubr.bf16.mxu0 0
        %1323 = vmatmul.mubr.bf16.gmra.mxu0 %v1157
        %v1324 = vpop.f32.mrf.mxu0
        %v1325 = vadd.f32 %v969, %v1324
        %v1326 = vpop.f32.mrf.mxu0
        %v1327 = vpop.f32.mrf.mxu0
        %v1328 = vadd.f32 %v972, %v1327
        %v1329 = vpop.f32.mrf.mxu0
        %1330 = vmatprep.mubr.bf16.mxu0 0
        %1331 = vmatmul.mubr.bf16.gmra.mxu0 %v1159
        %v1332 = vpop.f32.mrf.mxu0
        %v1333 = vadd.f32 %v977, %v1332
        %v1334 = vpop.f32.mrf.mxu0
        %v1335 = vpop.f32.mrf.mxu0
        %v1336 = vadd.f32 %v980, %v1335
        %v1337 = vpop.f32.mrf.mxu0
        %1338 = vmatprep.mubr.bf16.mxu0 0
        %1339 = vmatmul.mubr.bf16.gmra.mxu0 %v1161
        %v1340 = vpop.f32.mrf.mxu0
        %v1341 = vadd.f32 %v985, %v1340
        %v1342 = vpop.f32.mrf.mxu0
        %v1343 = vpop.f32.mrf.mxu0
        %v1344 = vadd.f32 %v988, %v1343
        %v1345 = vpop.f32.mrf.mxu0
        %1346 = vmatprep.mubr.bf16.mxu0 0
        %1347 = vmatmul.mubr.bf16.gmra.mxu0 %v1163
        %v1348 = vpop.f32.mrf.mxu0
        %v1349 = vadd.f32 %v993, %v1348
        %v1350 = vpop.f32.mrf.mxu0
        %v1351 = vpop.f32.mrf.mxu0
        %v1352 = vadd.f32 %v996, %v1351
        %v1353 = vpop.f32.mrf.mxu0
        %1354 = vmatprep.mubr.bf16.mxu0 0
        %1355 = vmatmul.mubr.bf16.gmra.mxu0 %v1165
        %v1356 = vpop.f32.mrf.mxu0
        %v1357 = vadd.f32 %v1001, %v1356
        %v1358 = vpop.f32.mrf.mxu0
        %v1359 = vpop.f32.mrf.mxu0
        %v1360 = vadd.f32 %v1004, %v1359
        %v1361 = vpop.f32.mrf.mxu0
        %1362 = vmatprep.mubr.bf16.mxu0 0
        %1363 = vmatmul.mubr.bf16.gmra.mxu0 %v1167
        %v1364 = vpop.f32.mrf.mxu0
        %v1365 = vadd.f32 %v1009, %v1364
        %v1366 = vpop.f32.mrf.mxu0
        %v1367 = vpop.f32.mrf.mxu0
        %v1368 = vadd.f32 %v1012, %v1367
        %v1369 = vpop.f32.mrf.mxu0
        %1370 = vmatprep.mubr.bf16.mxu0 0
        %1371 = vmatmul.mubr.bf16.gmra.mxu0 %v1169
        %v1372 = vpop.f32.mrf.mxu0
        %v1373 = vadd.f32 %v1017, %v1372
        %v1374 = vpop.f32.mrf.mxu0
        %v1375 = vpop.f32.mrf.mxu0
        %v1376 = vadd.f32 %v1020, %v1375
        %v1377 = vpop.f32.mrf.mxu0
        %1378 = vmatprep.mubr.bf16.mxu0 0
        %1379 = vmatmul.mubr.bf16.gmra.mxu0 %v1171
        %v1380 = vpop.f32.mrf.mxu0
        %v1381 = vadd.f32 %v1025, %v1380
        %v1382 = vpop.f32.mrf.mxu0
        %v1383 = vpop.f32.mrf.mxu0
        %v1384 = vadd.f32 %v1028, %v1383
        %v1385 = vpop.f32.mrf.mxu0
        %1386 = vmatprep.mubr.bf16.mxu0 0
        %1387 = vmatmul.mubr.bf16.gmra.mxu0 %v1173
        %v1388 = vpop.f32.mrf.mxu0
        %v1389 = vadd.f32 %v1033, %v1388
        %v1390 = vpop.f32.mrf.mxu0
        %v1391 = vpop.f32.mrf.mxu0
        %v1392 = vadd.f32 %v1036, %v1391
        %v1393 = vpop.f32.mrf.mxu0
        %1394 = vmatprep.mubr.bf16.mxu0 0
        %1395 = vmatmul.mubr.bf16.gmra.mxu0 %v1175
        %v1396 = vpop.f32.mrf.mxu0
        %v1397 = vadd.f32 %v1041, %v1396
        %v1398 = vpop.f32.mrf.mxu0
        %v1399 = vpop.f32.mrf.mxu0
        %v1400 = vadd.f32 %v1044, %v1399
        %v1401 = vpop.f32.mrf.mxu0
        %1402 = vmatprep.mubr.bf16.mxu0 0
        %1403 = vmatmul.mubr.bf16.gmra.mxu0 %v1177
        %v1404 = vpop.f32.mrf.mxu0
        %v1405 = vadd.f32 %v1049, %v1404
        %v1406 = vpop.f32.mrf.mxu0
        %v1407 = vpop.f32.mrf.mxu0
        %v1408 = vadd.f32 %v1052, %v1407
        %v1409 = vpop.f32.mrf.mxu0
        %1410 = vmatprep.mubr.bf16.mxu0 0
        %1411 = vmatmul.mubr.bf16.gmra.mxu0 %v1179
        %v1412 = vpop.f32.mrf.mxu0
        %v1413 = vadd.f32 %v1057, %v1412
        %v1414 = vpop.f32.mrf.mxu0
        %v1415 = vpop.f32.mrf.mxu0
        %v1416 = vadd.f32 %v1060, %v1415
        %v1417 = vpop.f32.mrf.mxu0
        %1418 = vmatprep.mubr.bf16.mxu0 0
        %1419 = vmatmul.mubr.bf16.gmra.mxu0 %v1181
        %v1420 = vpop.f32.mrf.mxu0
        %v1421 = vadd.f32 %v1065, %v1420
        %v1422 = vpop.f32.mrf.mxu0
        %v1423 = vpop.f32.mrf.mxu0
        %v1424 = vadd.f32 %v1068, %v1423
        %v1425 = vpop.f32.mrf.mxu0
        %1426 = vmatprep.mubr.bf16.mxu0 0
        %1427 = vmatmul.mubr.bf16.gmra.mxu0 %v1183
        %v1428 = vpop.f32.mrf.mxu0
        %v1429 = vadd.f32 %v1073, %v1428
        %v1430 = vpop.f32.mrf.mxu0
        %v1431 = vpop.f32.mrf.mxu0
        %v1432 = vadd.f32 %v1076, %v1431
        %v1433 = vpop.f32.mrf.mxu0
        %1434 = vmatprep.mubr.bf16.mxu0 0
        %1435 = vmatmul.mubr.bf16.gmra.mxu0 %v1185
        %v1436 = vpop.f32.mrf.mxu0
        %v1437 = vadd.f32 %v1081, %v1436
        %v1438 = vpop.f32.mrf.mxu0
        %v1439 = vpop.f32.mrf.mxu0
        %v1440 = vadd.f32 %v1084, %v1439
        %v1441 = vpop.f32.mrf.mxu0
        %1442 = vmatprep.mubr.bf16.mxu0 0
        %1443 = vmatmul.mubr.bf16.gmra.mxu0 %v1187
        %v1444 = vpop.f32.mrf.mxu0
        %v1445 = vadd.f32 %v1089, %v1444
        %v1446 = vpop.f32.mrf.mxu0
        %v1447 = vpop.f32.mrf.mxu0
        %v1448 = vadd.f32 %v1092, %v1447
        %v1449 = vpop.f32.mrf.mxu0
        %1450 = vmatprep.mubr.bf16.mxu0 0
        %1451 = vmatmul.mubr.bf16.gmra.mxu0 %v1189
        %v1452 = vpop.f32.mrf.mxu0
        %v1453 = vadd.f32 %v1097, %v1452
        %v1454 = vpop.f32.mrf.mxu0
        %v1455 = vpop.f32.mrf.mxu0
        %v1456 = vadd.f32 %v1100, %v1455
        %v1457 = vpop.f32.mrf.mxu0
        %1458 = vmatprep.mubr.bf16.mxu0 0
        %1459 = vmatmul.mubr.bf16.gmra.mxu0 %v1191
        %v1460 = vpop.f32.mrf.mxu0
        %v1461 = vadd.f32 %v1105, %v1460
        %v1462 = vpop.f32.mrf.mxu0
        %v1463 = vpop.f32.mrf.mxu0
        %v1464 = vadd.f32 %v1108, %v1463
        %v1465 = vpop.f32.mrf.mxu0
        %1466 = vmatprep.mubr.bf16.mxu0 0
        %1467 = vmatmul.mubr.bf16.gmra.mxu0 %v1193
        %v1468 = vpop.f32.mrf.mxu0
        %v1469 = vadd.f32 %v1113, %v1468
        %v1470 = vpop.f32.mrf.mxu0
        %v1471 = vpop.f32.mrf.mxu0
        %v1472 = vadd.f32 %v1116, %v1471
        %v1473 = vpop.f32.mrf.mxu0
        %1474 = vmatprep.mubr.bf16.mxu0 0
        %1475 = vmatmul.mubr.bf16.gmra.mxu0 %v1195
        %v1476 = vpop.f32.mrf.mxu0
        %v1477 = vadd.f32 %v1121, %v1476
        %v1478 = vpop.f32.mrf.mxu0
        %v1479 = vpop.f32.mrf.mxu0
        %v1480 = vadd.f32 %v1124, %v1479
        %v1481 = vpop.f32.mrf.mxu0
        %1482 = vmatprep.mubr.bf16.mxu0 0
        %1483 = vmatmul.mubr.bf16.gmra.mxu0 %v1197
        %v1484 = vpop.f32.mrf.mxu0
        %v1485 = vadd.f32 %v1129, %v1484
        %v1486 = vpop.f32.mrf.mxu0
        %v1487 = vpop.f32.mrf.mxu0
        %v1488 = vadd.f32 %v1132, %v1487
        %v1489 = vpop.f32.mrf.mxu0
        %1490 = vdwg.mxu0
        %v1491 = vld [vmem:[%s250] sm:$0xe]
        %s1492 = scalar_lea.vmem %s1, 4
        %v1493 = vld [vmem:[%s1492] sm:$0x3]
        %v1495 = vunpack.c.l.b16 %v1491
        %v1496 = vpack.c.b16 %v387, %v1495
        %vm1497 = vcmask 1046528
        %v1498 = vrot.slane %v1496, 1
        %v1499 = vrot.slane %v452, 1
        %v1500 = vsel %vm1497, %v1498, %v1499
        %v1501 = vrot.slane %v453, 1
        %v1502 = vsel %vm1497, %v1499, %v1501
        %v1503 = vrot.slane %v454, 1
        %v1504 = vsel %vm1497, %v1501, %v1503
        %v1505 = vrot.slane %v455, 1
        %v1506 = vsel %vm1497, %v1503, %v1505
        %v1507 = vrot.slane %v456, 1
        %v1508 = vsel %vm1497, %v1505, %v1507
        %v1509 = vrot.slane %v457, 1
        %v1510 = vsel %vm1497, %v1507, %v1509
        %v1511 = vrot.slane %v458, 1
        %v1512 = vsel %vm1497, %v1509, %v1511
        %v1513 = vrot.slane %v459, 1
        %v1514 = vsel %vm1497, %v1511, %v1513
        %v1515 = vrot.slane %v460, 1
        %v1516 = vsel %vm1497, %v1513, %v1515
        %v1517 = vrot.slane %v461, 1
        %v1518 = vsel %vm1497, %v1515, %v1517
        %v1519 = vrot.slane %v462, 1
        %v1520 = vsel %vm1497, %v1517, %v1519
        %v1521 = vrot.slane %v463, 1
        %v1522 = vsel %vm1497, %v1519, %v1521
        %v1523 = vrot.slane %v464, 1
        %v1524 = vsel %vm1497, %v1521, %v1523
        %v1525 = vrot.slane %v465, 1
        %v1526 = vsel %vm1497, %v1523, %v1525
        %v1527 = vrot.slane %v466, 1
        %v1528 = vsel %vm1497, %v1525, %v1527
        %v1529 = vrot.slane %v467, 1
        %v1530 = vsel %vm1497, %v1527, %v1529
        %v1531 = vrot.slane %v468, 1
        %v1532 = vsel %vm1497, %v1529, %v1531
        %v1533 = vrot.slane %v469, 1
        %v1534 = vsel %vm1497, %v1531, %v1533
        %v1535 = vrot.slane %v470, 1
        %v1536 = vsel %vm1497, %v1533, %v1535
        %v1537 = vrot.slane %v471, 1
        %v1538 = vsel %vm1497, %v1535, %v1537
        %v1539 = vrot.slane %v472, 1
        %v1540 = vsel %vm1497, %v1537, %v1539
        %v1541 = vrot.slane %v473, 1
        %v1542 = vsel %vm1497, %v1539, %v1541
        %v1543 = vrot.slane %v474, 1
        %v1544 = vsel %vm1497, %v1541, %v1543
        %v1545 = vrot.slane %v475, 1
        %v1546 = vsel %vm1497, %v1543, %v1545
        %v1547 = vrot.slane %v476, 1
        %v1548 = vsel %vm1497, %v1545, %v1547
        %v1549 = vrot.slane %v477, 1
        %v1550 = vsel %vm1497, %v1547, %v1549
        %v1551 = vrot.slane %v478, 1
        %v1552 = vsel %vm1497, %v1549, %v1551
        %v1553 = vrot.slane %v479, 1
        %v1554 = vsel %vm1497, %v1551, %v1553
        %v1555 = vrot.slane %v480, 1
        %v1556 = vsel %vm1497, %v1553, %v1555
        %v1557 = vrot.slane %v481, 1
        %v1558 = vsel %vm1497, %v1555, %v1557
        %v1559 = vrot.slane %v482, 1
        %v1560 = vsel %vm1497, %v1557, %v1559
        %v1561 = vrot.slane %v483, 1
        %v1562 = vsel %vm1497, %v1559, %v1561
        %v1564 = vsel %vm745, %v1500, 0
        %v1567 = vsel %vm745, %v1502, 0
        %v1570 = vsel %vm745, %v1504, 0
        %v1573 = vsel %vm745, %v1506, 0
        %v1576 = vsel %vm745, %v1508, 0
        %v1579 = vsel %vm745, %v1510, 0
        %v1582 = vsel %vm745, %v1512, 0
        %v1585 = vsel %vm745, %v1514, 0
        %v1588 = vsel %vm745, %v1516, 0
        %v1591 = vsel %vm745, %v1518, 0
        %v1594 = vsel %vm745, %v1520, 0
        %v1597 = vsel %vm745, %v1522, 0
        %v1600 = vsel %vm745, %v1524, 0
        %v1603 = vsel %vm745, %v1526, 0
        %v1606 = vsel %vm745, %v1528, 0
        %v1609 = vsel %vm745, %v1530, 0
        %v1612 = vsel %vm745, %v1532, 0
        %v1615 = vsel %vm745, %v1534, 0
        %v1618 = vsel %vm745, %v1536, 0
        %v1621 = vsel %vm745, %v1538, 0
        %v1624 = vsel %vm745, %v1540, 0
        %v1627 = vsel %vm745, %v1542, 0
        %v1630 = vsel %vm745, %v1544, 0
        %v1633 = vsel %vm745, %v1546, 0
        %v1636 = vsel %vm745, %v1548, 0
        %v1639 = vsel %vm745, %v1550, 0
        %v1642 = vsel %vm745, %v1552, 0
        %v1645 = vsel %vm745, %v1554, 0
        %v1648 = vsel %vm745, %v1556, 0
        %v1651 = vsel %vm745, %v1558, 0
        %v1654 = vsel %vm745, %v1560, 0
        %v1657 = vsel %vm745, %v1562, 0
        %v1660 = vsel %vm842, %v1493, 0
        %1662 = vmatprep.subr.bf16.mxu0 0
        %1663 = vmatpush1.bf16.msra.mxu0 0
        %1664 = vmatprep.subr.bf16.mxu0 0
        %1665 = vmatpush1.bf16.msra.mxu0 0
        %1666 = vmatprep.subr.bf16.mxu0 0
        %1667 = vmatpush1.bf16.msra.mxu0 0
        %1668 = vmatprep.subr.bf16.mxu0 0
        %1669 = vmatpush1.bf16.msra.mxu0 0
        %1670 = vmatprep.subr.bf16.mxu0 0
        %1671 = vmatpush1.bf16.msra.mxu0 0
        %1672 = vmatprep.subr.bf16.mxu0 0
        %1673 = vmatpush1.bf16.msra.mxu0 0
        %1674 = vmatprep.subr.bf16.mxu0 0
        %1675 = vmatpush1.bf16.msra.mxu0 0
        %1676 = vmatprep.subr.bf16.mxu0 0
        %1677 = vmatpush1.bf16.msra.mxu0 %v1660
        %1678 = vmatprep.subr.bf16.mxu0 0
        %1679 = vmatpush2.bf16.msra.mxu0 0
        %1680 = vmatprep.subr.bf16.mxu0 0
        %1681 = vmatpush2.bf16.msra.mxu0 0
        %1682 = vmatprep.subr.bf16.mxu0 0
        %1683 = vmatpush2.bf16.msra.mxu0 0
        %1684 = vmatprep.subr.bf16.mxu0 0
        %1685 = vmatpush2.bf16.msra.mxu0 0
        %1686 = vmatprep.subr.bf16.mxu0 0
        %1687 = vmatpush2.bf16.msra.mxu0 0
        %1688 = vmatprep.subr.bf16.mxu0 0
        %1689 = vmatpush2.bf16.msra.mxu0 0
        %1690 = vmatprep.subr.bf16.mxu0 0
        %1691 = vmatpush2.bf16.msra.mxu0 0
        %1692 = vmatprep.subr.bf16.mxu0 0
        %1693 = vmatpush2.bf16.msra.mxu0 0
        %1694 = vmatprep.mubr.bf16.mxu0 0
        %1695 = vmatmul.mubr.bf16.gmra.mxu0 %v1564
        %v1696 = vpop.f32.mrf.mxu0
        %v1697 = vadd.f32 0.0, %v1696
        %v1698 = vpop.f32.mrf.mxu0
        %v1699 = vpop.f32.mrf.mxu0
        %v1700 = vadd.f32 0.0, %v1699
        %v1701 = vpop.f32.mrf.mxu0
        %1702 = vmatprep.mubr.bf16.mxu0 0
        %1703 = vmatmul.mubr.bf16.gmra.mxu0 %v1567
        %v1704 = vpop.f32.mrf.mxu0
        %v1705 = vadd.f32 0.0, %v1704
        %v1706 = vpop.f32.mrf.mxu0
        %v1707 = vpop.f32.mrf.mxu0
        %v1708 = vadd.f32 0.0, %v1707
        %v1709 = vpop.f32.mrf.mxu0
        %1710 = vmatprep.mubr.bf16.mxu0 0
        %1711 = vmatmul.mubr.bf16.gmra.mxu0 %v1570
        %v1712 = vpop.f32.mrf.mxu0
        %v1713 = vadd.f32 0.0, %v1712
        %v1714 = vpop.f32.mrf.mxu0
        %v1715 = vpop.f32.mrf.mxu0
        %v1716 = vadd.f32 0.0, %v1715
        %v1717 = vpop.f32.mrf.mxu0
        %1718 = vmatprep.mubr.bf16.mxu0 0
        %1719 = vmatmul.mubr.bf16.gmra.mxu0 %v1573
        %v1720 = vpop.f32.mrf.mxu0
        %v1721 = vadd.f32 0.0, %v1720
        %v1722 = vpop.f32.mrf.mxu0
        %v1723 = vpop.f32.mrf.mxu0
        %v1724 = vadd.f32 0.0, %v1723
        %v1725 = vpop.f32.mrf.mxu0
        %1726 = vmatprep.mubr.bf16.mxu0 0
        %1727 = vmatmul.mubr.bf16.gmra.mxu0 %v1576
        %v1728 = vpop.f32.mrf.mxu0
        %v1729 = vadd.f32 0.0, %v1728
        %v1730 = vpop.f32.mrf.mxu0
        %v1731 = vpop.f32.mrf.mxu0
        %v1732 = vadd.f32 0.0, %v1731
        %v1733 = vpop.f32.mrf.mxu0
        %1734 = vmatprep.mubr.bf16.mxu0 0
        %1735 = vmatmul.mubr.bf16.gmra.mxu0 %v1579
        %v1736 = vpop.f32.mrf.mxu0
        %v1737 = vadd.f32 0.0, %v1736
        %v1738 = vpop.f32.mrf.mxu0
        %v1739 = vpop.f32.mrf.mxu0
        %v1740 = vadd.f32 0.0, %v1739
        %v1741 = vpop.f32.mrf.mxu0
        %1742 = vmatprep.mubr.bf16.mxu0 0
        %1743 = vmatmul.mubr.bf16.gmra.mxu0 %v1582
        %v1744 = vpop.f32.mrf.mxu0
        %v1745 = vadd.f32 0.0, %v1744
        %v1746 = vpop.f32.mrf.mxu0
        %v1747 = vpop.f32.mrf.mxu0
        %v1748 = vadd.f32 0.0, %v1747
        %v1749 = vpop.f32.mrf.mxu0
        %1750 = vmatprep.mubr.bf16.mxu0 0
        %1751 = vmatmul.mubr.bf16.gmra.mxu0 %v1585
        %v1752 = vpop.f32.mrf.mxu0
        %v1753 = vadd.f32 0.0, %v1752
        %v1754 = vpop.f32.mrf.mxu0
        %v1755 = vpop.f32.mrf.mxu0
        %v1756 = vadd.f32 0.0, %v1755
        %v1757 = vpop.f32.mrf.mxu0
        %1758 = vmatprep.mubr.bf16.mxu0 0
        %1759 = vmatmul.mubr.bf16.gmra.mxu0 %v1588
        %v1760 = vpop.f32.mrf.mxu0
        %v1761 = vadd.f32 0.0, %v1760
        %v1762 = vpop.f32.mrf.mxu0
        %v1763 = vpop.f32.mrf.mxu0
        %v1764 = vadd.f32 0.0, %v1763
        %v1765 = vpop.f32.mrf.mxu0
        %1766 = vmatprep.mubr.bf16.mxu0 0
        %1767 = vmatmul.mubr.bf16.gmra.mxu0 %v1591
        %v1768 = vpop.f32.mrf.mxu0
        %v1769 = vadd.f32 0.0, %v1768
        %v1770 = vpop.f32.mrf.mxu0
        %v1771 = vpop.f32.mrf.mxu0
        %v1772 = vadd.f32 0.0, %v1771
        %v1773 = vpop.f32.mrf.mxu0
        %1774 = vmatprep.mubr.bf16.mxu0 0
        %1775 = vmatmul.mubr.bf16.gmra.mxu0 %v1594
        %v1776 = vpop.f32.mrf.mxu0
        %v1777 = vadd.f32 0.0, %v1776
        %v1778 = vpop.f32.mrf.mxu0
        %v1779 = vpop.f32.mrf.mxu0
        %v1780 = vadd.f32 0.0, %v1779
        %v1781 = vpop.f32.mrf.mxu0
        %1782 = vmatprep.mubr.bf16.mxu0 0
        %1783 = vmatmul.mubr.bf16.gmra.mxu0 %v1597
        %v1784 = vpop.f32.mrf.mxu0
        %v1785 = vadd.f32 0.0, %v1784
        %v1786 = vpop.f32.mrf.mxu0
        %v1787 = vpop.f32.mrf.mxu0
        %v1788 = vadd.f32 0.0, %v1787
        %v1789 = vpop.f32.mrf.mxu0
        %1790 = vmatprep.mubr.bf16.mxu0 0
        %1791 = vmatmul.mubr.bf16.gmra.mxu0 %v1600
        %v1792 = vpop.f32.mrf.mxu0
        %v1793 = vadd.f32 0.0, %v1792
        %v1794 = vpop.f32.mrf.mxu0
        %v1795 = vpop.f32.mrf.mxu0
        %v1796 = vadd.f32 0.0, %v1795
        %v1797 = vpop.f32.mrf.mxu0
        %1798 = vmatprep.mubr.bf16.mxu0 0
        %1799 = vmatmul.mubr.bf16.gmra.mxu0 %v1603
        %v1800 = vpop.f32.mrf.mxu0
        %v1801 = vadd.f32 0.0, %v1800
        %v1802 = vpop.f32.mrf.mxu0
        %v1803 = vpop.f32.mrf.mxu0
        %v1804 = vadd.f32 0.0, %v1803
        %v1805 = vpop.f32.mrf.mxu0
        %1806 = vmatprep.mubr.bf16.mxu0 0
        %1807 = vmatmul.mubr.bf16.gmra.mxu0 %v1606
        %v1808 = vpop.f32.mrf.mxu0
        %v1809 = vadd.f32 0.0, %v1808
        %v1810 = vpop.f32.mrf.mxu0
        %v1811 = vpop.f32.mrf.mxu0
        %v1812 = vadd.f32 0.0, %v1811
        %v1813 = vpop.f32.mrf.mxu0
        %1814 = vmatprep.mubr.bf16.mxu0 0
        %1815 = vmatmul.mubr.bf16.gmra.mxu0 %v1609
        %v1816 = vpop.f32.mrf.mxu0
        %v1817 = vadd.f32 0.0, %v1816
        %v1818 = vpop.f32.mrf.mxu0
        %v1819 = vpop.f32.mrf.mxu0
        %v1820 = vadd.f32 0.0, %v1819
        %v1821 = vpop.f32.mrf.mxu0
        %1822 = vmatprep.mubr.bf16.mxu0 0
        %1823 = vmatmul.mubr.bf16.gmra.mxu0 %v1612
        %v1824 = vpop.f32.mrf.mxu0
        %v1825 = vadd.f32 0.0, %v1824
        %v1826 = vpop.f32.mrf.mxu0
        %v1827 = vpop.f32.mrf.mxu0
        %v1828 = vadd.f32 0.0, %v1827
        %v1829 = vpop.f32.mrf.mxu0
        %1830 = vmatprep.mubr.bf16.mxu0 0
        %1831 = vmatmul.mubr.bf16.gmra.mxu0 %v1615
        %v1832 = vpop.f32.mrf.mxu0
        %v1833 = vadd.f32 0.0, %v1832
        %v1834 = vpop.f32.mrf.mxu0
        %v1835 = vpop.f32.mrf.mxu0
        %v1836 = vadd.f32 0.0, %v1835
        %v1837 = vpop.f32.mrf.mxu0
        %1838 = vmatprep.mubr.bf16.mxu0 0
        %1839 = vmatmul.mubr.bf16.gmra.mxu0 %v1618
        %v1840 = vpop.f32.mrf.mxu0
        %v1841 = vadd.f32 0.0, %v1840
        %v1842 = vpop.f32.mrf.mxu0
        %v1843 = vpop.f32.mrf.mxu0
        %v1844 = vadd.f32 0.0, %v1843
        %v1845 = vpop.f32.mrf.mxu0
        %1846 = vmatprep.mubr.bf16.mxu0 0
        %1847 = vmatmul.mubr.bf16.gmra.mxu0 %v1621
        %v1848 = vpop.f32.mrf.mxu0
        %v1849 = vadd.f32 0.0, %v1848
        %v1850 = vpop.f32.mrf.mxu0
        %v1851 = vpop.f32.mrf.mxu0
        %v1852 = vadd.f32 0.0, %v1851
        %v1853 = vpop.f32.mrf.mxu0
        %1854 = vmatprep.mubr.bf16.mxu0 0
        %1855 = vmatmul.mubr.bf16.gmra.mxu0 %v1624
        %v1856 = vpop.f32.mrf.mxu0
        %v1857 = vadd.f32 0.0, %v1856
        %v1858 = vpop.f32.mrf.mxu0
        %v1859 = vpop.f32.mrf.mxu0
        %v1860 = vadd.f32 0.0, %v1859
        %v1861 = vpop.f32.mrf.mxu0
        %1862 = vmatprep.mubr.bf16.mxu0 0
        %1863 = vmatmul.mubr.bf16.gmra.mxu0 %v1627
        %v1864 = vpop.f32.mrf.mxu0
        %v1865 = vadd.f32 0.0, %v1864
        %v1866 = vpop.f32.mrf.mxu0
        %v1867 = vpop.f32.mrf.mxu0
        %v1868 = vadd.f32 0.0, %v1867
        %v1869 = vpop.f32.mrf.mxu0
        %1870 = vmatprep.mubr.bf16.mxu0 0
        %1871 = vmatmul.mubr.bf16.gmra.mxu0 %v1630
        %v1872 = vpop.f32.mrf.mxu0
        %v1873 = vadd.f32 0.0, %v1872
        %v1874 = vpop.f32.mrf.mxu0
        %v1875 = vpop.f32.mrf.mxu0
        %v1876 = vadd.f32 0.0, %v1875
        %v1877 = vpop.f32.mrf.mxu0
        %1878 = vmatprep.mubr.bf16.mxu0 0
        %1879 = vmatmul.mubr.bf16.gmra.mxu0 %v1633
        %v1880 = vpop.f32.mrf.mxu0
        %v1881 = vadd.f32 0.0, %v1880
        %v1882 = vpop.f32.mrf.mxu0
        %v1883 = vpop.f32.mrf.mxu0
        %v1884 = vadd.f32 0.0, %v1883
        %v1885 = vpop.f32.mrf.mxu0
        %1886 = vmatprep.mubr.bf16.mxu0 0
        %1887 = vmatmul.mubr.bf16.gmra.mxu0 %v1636
        %v1888 = vpop.f32.mrf.mxu0
        %v1889 = vadd.f32 0.0, %v1888
        %v1890 = vpop.f32.mrf.mxu0
        %v1891 = vpop.f32.mrf.mxu0
        %v1892 = vadd.f32 0.0, %v1891
        %v1893 = vpop.f32.mrf.mxu0
        %1894 = vmatprep.mubr.bf16.mxu0 0
        %1895 = vmatmul.mubr.bf16.gmra.mxu0 %v1639
        %v1896 = vpop.f32.mrf.mxu0
        %v1897 = vadd.f32 0.0, %v1896
        %v1898 = vpop.f32.mrf.mxu0
        %v1899 = vpop.f32.mrf.mxu0
        %v1900 = vadd.f32 0.0, %v1899
        %v1901 = vpop.f32.mrf.mxu0
        %1902 = vmatprep.mubr.bf16.mxu0 0
        %1903 = vmatmul.mubr.bf16.gmra.mxu0 %v1642
        %v1904 = vpop.f32.mrf.mxu0
        %v1905 = vadd.f32 0.0, %v1904
        %v1906 = vpop.f32.mrf.mxu0
        %v1907 = vpop.f32.mrf.mxu0
        %v1908 = vadd.f32 0.0, %v1907
        %v1909 = vpop.f32.mrf.mxu0
        %1910 = vmatprep.mubr.bf16.mxu0 0
        %1911 = vmatmul.mubr.bf16.gmra.mxu0 %v1645
        %v1912 = vpop.f32.mrf.mxu0
        %v1913 = vadd.f32 0.0, %v1912
        %v1914 = vpop.f32.mrf.mxu0
        %v1915 = vpop.f32.mrf.mxu0
        %v1916 = vadd.f32 0.0, %v1915
        %v1917 = vpop.f32.mrf.mxu0
        %1918 = vmatprep.mubr.bf16.mxu0 0
        %1919 = vmatmul.mubr.bf16.gmra.mxu0 %v1648
        %v1920 = vpop.f32.mrf.mxu0
        %v1921 = vadd.f32 0.0, %v1920
        %v1922 = vpop.f32.mrf.mxu0
        %v1923 = vpop.f32.mrf.mxu0
        %v1924 = vadd.f32 0.0, %v1923
        %v1925 = vpop.f32.mrf.mxu0
        %1926 = vmatprep.mubr.bf16.mxu0 0
        %1927 = vmatmul.mubr.bf16.gmra.mxu0 %v1651
        %v1928 = vpop.f32.mrf.mxu0
        %v1929 = vadd.f32 0.0, %v1928
        %v1930 = vpop.f32.mrf.mxu0
        %v1931 = vpop.f32.mrf.mxu0
        %v1932 = vadd.f32 0.0, %v1931
        %v1933 = vpop.f32.mrf.mxu0
        %1934 = vmatprep.mubr.bf16.mxu0 0
        %1935 = vmatmul.mubr.bf16.gmra.mxu0 %v1654
        %v1936 = vpop.f32.mrf.mxu0
        %v1937 = vadd.f32 0.0, %v1936
        %v1938 = vpop.f32.mrf.mxu0
        %v1939 = vpop.f32.mrf.mxu0
        %v1940 = vadd.f32 0.0, %v1939
        %v1941 = vpop.f32.mrf.mxu0
        %1942 = vmatprep.mubr.bf16.mxu0 0
        %1943 = vmatmul.mubr.bf16.gmra.mxu0 %v1657
        %v1944 = vpop.f32.mrf.mxu0
        %v1945 = vadd.f32 0.0, %v1944
        %v1946 = vpop.f32.mrf.mxu0
        %v1947 = vpop.f32.mrf.mxu0
        %v1948 = vadd.f32 0.0, %v1947
        %v1949 = vpop.f32.mrf.mxu0
        %1950 = vdwg.mxu0
        %v1951 = vadd.f32 %v1237, %v1697
        %v1952 = vadd.f32 %v1240, %v1700
        %v1953 = vadd.f32 %v1245, %v1705
        %v1954 = vadd.f32 %v1248, %v1708
        %v1955 = vadd.f32 %v1253, %v1713
        %v1956 = vadd.f32 %v1256, %v1716
        %v1957 = vadd.f32 %v1261, %v1721
        %v1958 = vadd.f32 %v1264, %v1724
        %v1959 = vadd.f32 %v1269, %v1729
        %v1960 = vadd.f32 %v1272, %v1732
        %v1961 = vadd.f32 %v1277, %v1737
        %v1962 = vadd.f32 %v1280, %v1740
        %v1963 = vadd.f32 %v1285, %v1745
        %v1964 = vadd.f32 %v1288, %v1748
        %v1965 = vadd.f32 %v1293, %v1753
        %v1966 = vadd.f32 %v1296, %v1756
        %v1967 = vadd.f32 %v1301, %v1761
        %v1968 = vadd.f32 %v1304, %v1764
        %v1969 = vadd.f32 %v1309, %v1769
        %v1970 = vadd.f32 %v1312, %v1772
        %v1971 = vadd.f32 %v1317, %v1777
        %v1972 = vadd.f32 %v1320, %v1780
        %v1973 = vadd.f32 %v1325, %v1785
        %v1974 = vadd.f32 %v1328, %v1788
        %v1975 = vadd.f32 %v1333, %v1793
        %v1976 = vadd.f32 %v1336, %v1796
        %v1977 = vadd.f32 %v1341, %v1801
        %v1978 = vadd.f32 %v1344, %v1804
        %v1979 = vadd.f32 %v1349, %v1809
        %v1980 = vadd.f32 %v1352, %v1812
        %v1981 = vadd.f32 %v1357, %v1817
        %v1982 = vadd.f32 %v1360, %v1820
        %v1983 = vadd.f32 %v1365, %v1825
        %v1984 = vadd.f32 %v1368, %v1828
        %v1985 = vadd.f32 %v1373, %v1833
        %v1986 = vadd.f32 %v1376, %v1836
        %v1987 = vadd.f32 %v1381, %v1841
        %v1988 = vadd.f32 %v1384, %v1844
        %v1989 = vadd.f32 %v1389, %v1849
        %v1990 = vadd.f32 %v1392, %v1852
        %v1991 = vadd.f32 %v1397, %v1857
        %v1992 = vadd.f32 %v1400, %v1860
        %v1993 = vadd.f32 %v1405, %v1865
        %v1994 = vadd.f32 %v1408, %v1868
        %v1995 = vadd.f32 %v1413, %v1873
        %v1996 = vadd.f32 %v1416, %v1876
        %v1997 = vadd.f32 %v1421, %v1881
        %v1998 = vadd.f32 %v1424, %v1884
        %v1999 = vadd.f32 %v1429, %v1889
        %v2000 = vadd.f32 %v1432, %v1892
        %v2001 = vadd.f32 %v1437, %v1897
        %v2002 = vadd.f32 %v1440, %v1900
        %v2003 = vadd.f32 %v1445, %v1905
        %v2004 = vadd.f32 %v1448, %v1908
        %v2005 = vadd.f32 %v1453, %v1913
        %v2006 = vadd.f32 %v1456, %v1916
        %v2007 = vadd.f32 %v1461, %v1921
        %v2008 = vadd.f32 %v1464, %v1924
        %v2009 = vadd.f32 %v1469, %v1929
        %v2010 = vadd.f32 %v1472, %v1932
        %v2011 = vadd.f32 %v1477, %v1937
        %v2012 = vadd.f32 %v1480, %v1940
        %v2013 = vadd.f32 %v1485, %v1945
        %v2014 = vadd.f32 %v1488, %v1948
        %v2015 = vld [vmem:[%s250 + $0x10] sm:$0xf]
        %v2016 = vld [vmem:[%s250 + $0x14] sm:$0xf]
        %v2017 = vld [vmem:[%s250 + $0x18] sm:$0xf]
        %v2018 = vld [vmem:[%s250 + $0x1c] sm:$0xf]
        %v2019 = vld [vmem:[%s250 + $0x20] sm:$0xf]
        %v2020 = vld [vmem:[%s250 + $0x24] sm:$0xf]
        %v2021 = vld [vmem:[%s250 + $0x28] sm:$0xf]
        %v2022 = vld [vmem:[%s250 + $0x2c] sm:$0xf]
        %v2023 = vld [vmem:[%s250 + $0x30] sm:$0xf]
        %v2024 = vld [vmem:[%s250 + $0x34] sm:$0xf]
        %v2025 = vld [vmem:[%s250 + $0x38] sm:$0xf]
        %v2026 = vld [vmem:[%s250 + $0x3c] sm:$0xf]
        %v2027 = vld [vmem:[%s250 + $0x40] sm:$0xf]
        %v2028 = vld [vmem:[%s250 + $0x44] sm:$0xf]
        %v2029 = vld [vmem:[%s250 + $0x48] sm:$0xf]
        %v2030 = vld [vmem:[%s250 + $0x4c] sm:$0xf]
        %v2031 = vld [vmem:[%s250 + $0x50] sm:$0xf]
        %v2032 = vld [vmem:[%s250 + $0x54] sm:$0xf]
        %v2033 = vld [vmem:[%s250 + $0x58] sm:$0xf]
        %v2034 = vld [vmem:[%s250 + $0x5c] sm:$0xf]
        %v2035 = vld [vmem:[%s250 + $0x60] sm:$0xf]
        %v2036 = vld [vmem:[%s250 + $0x64] sm:$0xf]
        %v2037 = vld [vmem:[%s250 + $0x68] sm:$0xf]
        %v2038 = vld [vmem:[%s250 + $0x6c] sm:$0xf]
        %v2039 = vld [vmem:[%s250 + $0x70] sm:$0xf]
        %v2040 = vld [vmem:[%s250 + $0x74] sm:$0xf]
        %v2041 = vld [vmem:[%s250 + $0x78] sm:$0xf]
        %v2042 = vld [vmem:[%s250 + $0x7c] sm:$0xf]
        %v2043 = vld [vmem:[%s250 + $0x80] sm:$0xf]
        %v2044 = vld [vmem:[%s250 + $0x84] sm:$0xf]
        %v2045 = vld [vmem:[%s250 + $0x88] sm:$0xf]
        %v2046 = vld [vmem:[%s250 + $0x8c] sm:$0xf]
        %v2047 = vld [vmem:[%s250 + $0x90] sm:$0xf]
        %v2048 = vld [vmem:[%s250 + $0x94] sm:$0xf]
        %v2049 = vld [vmem:[%s250 + $0x98] sm:$0xf]
        %v2050 = vld [vmem:[%s250 + $0x9c] sm:$0xf]
        %v2051 = vld [vmem:[%s250 + $0xa0] sm:$0xf]
        %v2052 = vld [vmem:[%s250 + $0xa4] sm:$0xf]
        %v2053 = vld [vmem:[%s250 + $0xa8] sm:$0xf]
        %v2054 = vld [vmem:[%s250 + $0xac] sm:$0xf]
        %v2055 = vld [vmem:[%s250 + $0xb0] sm:$0xf]
        %v2056 = vld [vmem:[%s250 + $0xb4] sm:$0xf]
        %v2057 = vld [vmem:[%s250 + $0xb8] sm:$0xf]
        %v2058 = vld [vmem:[%s250 + $0xbc] sm:$0xf]
        %v2059 = vld [vmem:[%s250 + $0xc0] sm:$0xf]
        %v2060 = vld [vmem:[%s250 + $0xc4] sm:$0xf]
        %v2061 = vld [vmem:[%s250 + $0xc8] sm:$0xf]
        %v2062 = vld [vmem:[%s250 + $0xcc] sm:$0xf]
        %v2063 = vld [vmem:[%s250 + $0xd0] sm:$0xf]
        %v2064 = vld [vmem:[%s250 + $0xd4] sm:$0xf]
        %v2065 = vld [vmem:[%s250 + $0xd8] sm:$0xf]
        %v2066 = vld [vmem:[%s250 + $0xdc] sm:$0xf]
        %v2067 = vld [vmem:[%s250 + $0xe0] sm:$0xf]
        %v2068 = vld [vmem:[%s250 + $0xe4] sm:$0xf]
        %v2069 = vld [vmem:[%s250 + $0xe8] sm:$0xf]
        %v2070 = vld [vmem:[%s250 + $0xec] sm:$0xf]
        %v2071 = vld [vmem:[%s250 + $0xf0] sm:$0xf]
        %v2072 = vld [vmem:[%s250 + $0xf4] sm:$0xf]
        %v2073 = vld [vmem:[%s250 + $0xf8] sm:$0xf]
        %v2074 = vld [vmem:[%s250 + $0xfc] sm:$0xf]
        %v2075 = vld [vmem:[%s250 + $0x100] sm:$0xf]
        %v2076 = vld [vmem:[%s250 + $0x104] sm:$0xf]
        %v2077 = vld [vmem:[%s250 + $0x108] sm:$0xf]
        %v2078 = vld [vmem:[%s250 + $0x10c] sm:$0xf]
        %s2079 = scalar_lea.vmem %s1, 6
        %v2080 = vld [vmem:[%s2079] sm:$0x3]
        %v2145 = vunpack.c.l.b16 %v2015
        %v2146 = vunpack.c.l.b16 %v2016
        %v2147 = vunpack.c.l.b16 %v2017
        %v2148 = vunpack.c.l.b16 %v2018
        %v2149 = vunpack.c.l.b16 %v2019
        %v2150 = vunpack.c.l.b16 %v2020
        %v2151 = vunpack.c.l.b16 %v2021
        %v2152 = vunpack.c.l.b16 %v2022
        %v2153 = vunpack.c.l.b16 %v2023
        %v2154 = vunpack.c.l.b16 %v2024
        %v2155 = vunpack.c.l.b16 %v2025
        %v2156 = vunpack.c.l.b16 %v2026
        %v2157 = vunpack.c.l.b16 %v2027
        %v2158 = vunpack.c.l.b16 %v2028
        %v2159 = vunpack.c.l.b16 %v2029
        %v2160 = vunpack.c.l.b16 %v2030
        %v2161 = vunpack.c.l.b16 %v2031
        %v2162 = vunpack.c.l.b16 %v2032
        %v2163 = vunpack.c.l.b16 %v2033
        %v2164 = vunpack.c.l.b16 %v2034
        %v2165 = vunpack.c.l.b16 %v2035
        %v2166 = vunpack.c.l.b16 %v2036
        %v2167 = vunpack.c.l.b16 %v2037
        %v2168 = vunpack.c.l.b16 %v2038
        %v2169 = vunpack.c.l.b16 %v2039
        %v2170 = vunpack.c.l.b16 %v2040
        %v2171 = vunpack.c.l.b16 %v2041
        %v2172 = vunpack.c.l.b16 %v2042
        %v2173 = vunpack.c.l.b16 %v2043
        %v2174 = vunpack.c.l.b16 %v2044
        %v2175 = vunpack.c.l.b16 %v2045
        %v2176 = vunpack.c.l.b16 %v2046
        %v2177 = vunpack.c.l.b16 %v2047
        %v2178 = vunpack.c.l.b16 %v2048
        %v2179 = vunpack.c.l.b16 %v2049
        %v2180 = vunpack.c.l.b16 %v2050
        %v2181 = vunpack.c.l.b16 %v2051
        %v2182 = vunpack.c.l.b16 %v2052
        %v2183 = vunpack.c.l.b16 %v2053
        %v2184 = vunpack.c.l.b16 %v2054
        %v2185 = vunpack.c.l.b16 %v2055
        %v2186 = vunpack.c.l.b16 %v2056
        %v2187 = vunpack.c.l.b16 %v2057
        %v2188 = vunpack.c.l.b16 %v2058
        %v2189 = vunpack.c.l.b16 %v2059
        %v2190 = vunpack.c.l.b16 %v2060
        %v2191 = vunpack.c.l.b16 %v2061
        %v2192 = vunpack.c.l.b16 %v2062
        %v2193 = vunpack.c.l.b16 %v2063
        %v2194 = vunpack.c.l.b16 %v2064
        %v2195 = vunpack.c.l.b16 %v2065
        %v2196 = vunpack.c.l.b16 %v2066
        %v2197 = vunpack.c.l.b16 %v2067
        %v2198 = vunpack.c.l.b16 %v2068
        %v2199 = vunpack.c.l.b16 %v2069
        %v2200 = vunpack.c.l.b16 %v2070
        %v2201 = vunpack.c.l.b16 %v2071
        %v2202 = vunpack.c.l.b16 %v2072
        %v2203 = vunpack.c.l.b16 %v2073
        %v2204 = vunpack.c.l.b16 %v2074
        %v2205 = vunpack.c.l.b16 %v2075
        %v2206 = vunpack.c.l.b16 %v2076
        %v2207 = vunpack.c.l.b16 %v2077
        %v2208 = vunpack.c.l.b16 %v2078
        %v2209 = vpack.c.b16 %v2146, %v2145
        %v2210 = vpack.c.b16 %v2148, %v2147
        %v2211 = vpack.c.b16 %v2150, %v2149
        %v2212 = vpack.c.b16 %v2152, %v2151
        %v2213 = vpack.c.b16 %v2154, %v2153
        %v2214 = vpack.c.b16 %v2156, %v2155
        %v2215 = vpack.c.b16 %v2158, %v2157
        %v2216 = vpack.c.b16 %v2160, %v2159
        %v2217 = vpack.c.b16 %v2162, %v2161
        %v2218 = vpack.c.b16 %v2164, %v2163
        %v2219 = vpack.c.b16 %v2166, %v2165
        %v2220 = vpack.c.b16 %v2168, %v2167
        %v2221 = vpack.c.b16 %v2170, %v2169
        %v2222 = vpack.c.b16 %v2172, %v2171
        %v2223 = vpack.c.b16 %v2174, %v2173
        %v2224 = vpack.c.b16 %v2176, %v2175
        %v2225 = vpack.c.b16 %v2178, %v2177
        %v2226 = vpack.c.b16 %v2180, %v2179
        %v2227 = vpack.c.b16 %v2182, %v2181
        %v2228 = vpack.c.b16 %v2184, %v2183
        %v2229 = vpack.c.b16 %v2186, %v2185
        %v2230 = vpack.c.b16 %v2188, %v2187
        %v2231 = vpack.c.b16 %v2190, %v2189
        %v2232 = vpack.c.b16 %v2192, %v2191
        %v2233 = vpack.c.b16 %v2194, %v2193
        %v2234 = vpack.c.b16 %v2196, %v2195
        %v2235 = vpack.c.b16 %v2198, %v2197
        %v2236 = vpack.c.b16 %v2200, %v2199
        %v2237 = vpack.c.b16 %v2202, %v2201
        %v2238 = vpack.c.b16 %v2204, %v2203
        %v2239 = vpack.c.b16 %v2206, %v2205
        %v2240 = vpack.c.b16 %v2208, %v2207
        %v2242 = vsel %vm745, %v2209, 0
        %v2245 = vsel %vm745, %v2210, 0
        %v2248 = vsel %vm745, %v2211, 0
        %v2251 = vsel %vm745, %v2212, 0
        %v2254 = vsel %vm745, %v2213, 0
        %v2257 = vsel %vm745, %v2214, 0
        %v2260 = vsel %vm745, %v2215, 0
        %v2263 = vsel %vm745, %v2216, 0
        %v2266 = vsel %vm745, %v2217, 0
        %v2269 = vsel %vm745, %v2218, 0
        %v2272 = vsel %vm745, %v2219, 0
        %v2275 = vsel %vm745, %v2220, 0
        %v2278 = vsel %vm745, %v2221, 0
        %v2281 = vsel %vm745, %v2222, 0
        %v2284 = vsel %vm745, %v2223, 0
        %v2287 = vsel %vm745, %v2224, 0
        %v2290 = vsel %vm745, %v2225, 0
        %v2293 = vsel %vm745, %v2226, 0
        %v2296 = vsel %vm745, %v2227, 0
        %v2299 = vsel %vm745, %v2228, 0
        %v2302 = vsel %vm745, %v2229, 0
        %v2305 = vsel %vm745, %v2230, 0
        %v2308 = vsel %vm745, %v2231, 0
        %v2311 = vsel %vm745, %v2232, 0
        %v2314 = vsel %vm745, %v2233, 0
        %v2317 = vsel %vm745, %v2234, 0
        %v2320 = vsel %vm745, %v2235, 0
        %v2323 = vsel %vm745, %v2236, 0
        %v2326 = vsel %vm745, %v2237, 0
        %v2329 = vsel %vm745, %v2238, 0
        %v2332 = vsel %vm745, %v2239, 0
        %v2335 = vsel %vm745, %v2240, 0
        %v2338 = vsel %vm842, %v2080, 0
        %2340 = vmatprep.subr.bf16.mxu0 0
        %2341 = vmatpush1.bf16.msra.mxu0 0
        %2342 = vmatprep.subr.bf16.mxu0 0
        %2343 = vmatpush1.bf16.msra.mxu0 0
        %2344 = vmatprep.subr.bf16.mxu0 0
        %2345 = vmatpush1.bf16.msra.mxu0 0
        %2346 = vmatprep.subr.bf16.mxu0 0
        %2347 = vmatpush1.bf16.msra.mxu0 0
        %2348 = vmatprep.subr.bf16.mxu0 0
        %2349 = vmatpush1.bf16.msra.mxu0 0
        %2350 = vmatprep.subr.bf16.mxu0 0
        %2351 = vmatpush1.bf16.msra.mxu0 0
        %2352 = vmatprep.subr.bf16.mxu0 0
        %2353 = vmatpush1.bf16.msra.mxu0 0
        %2354 = vmatprep.subr.bf16.mxu0 0
        %2355 = vmatpush1.bf16.msra.mxu0 %v2338
        %2356 = vmatprep.subr.bf16.mxu0 0
        %2357 = vmatpush2.bf16.msra.mxu0 0
        %2358 = vmatprep.subr.bf16.mxu0 0
        %2359 = vmatpush2.bf16.msra.mxu0 0
        %2360 = vmatprep.subr.bf16.mxu0 0
        %2361 = vmatpush2.bf16.msra.mxu0 0
        %2362 = vmatprep.subr.bf16.mxu0 0
        %2363 = vmatpush2.bf16.msra.mxu0 0
        %2364 = vmatprep.subr.bf16.mxu0 0
        %2365 = vmatpush2.bf16.msra.mxu0 0
        %2366 = vmatprep.subr.bf16.mxu0 0
        %2367 = vmatpush2.bf16.msra.mxu0 0
        %2368 = vmatprep.subr.bf16.mxu0 0
        %2369 = vmatpush2.bf16.msra.mxu0 0
        %2370 = vmatprep.subr.bf16.mxu0 0
        %2371 = vmatpush2.bf16.msra.mxu0 0
        %2372 = vmatprep.mubr.bf16.mxu0 0
        %2373 = vmatmul.mubr.bf16.gmra.mxu0 %v2242
        %v2374 = vpop.f32.mrf.mxu0
        %v2375 = vadd.f32 0.0, %v2374
        %v2376 = vpop.f32.mrf.mxu0
        %v2377 = vpop.f32.mrf.mxu0
        %v2378 = vadd.f32 0.0, %v2377
        %v2379 = vpop.f32.mrf.mxu0
        %2380 = vmatprep.mubr.bf16.mxu0 0
        %2381 = vmatmul.mubr.bf16.gmra.mxu0 %v2245
        %v2382 = vpop.f32.mrf.mxu0
        %v2383 = vadd.f32 0.0, %v2382
        %v2384 = vpop.f32.mrf.mxu0
        %v2385 = vpop.f32.mrf.mxu0
        %v2386 = vadd.f32 0.0, %v2385
        %v2387 = vpop.f32.mrf.mxu0
        %2388 = vmatprep.mubr.bf16.mxu0 0
        %2389 = vmatmul.mubr.bf16.gmra.mxu0 %v2248
        %v2390 = vpop.f32.mrf.mxu0
        %v2391 = vadd.f32 0.0, %v2390
        %v2392 = vpop.f32.mrf.mxu0
        %v2393 = vpop.f32.mrf.mxu0
        %v2394 = vadd.f32 0.0, %v2393
        %v2395 = vpop.f32.mrf.mxu0
        %2396 = vmatprep.mubr.bf16.mxu0 0
        %2397 = vmatmul.mubr.bf16.gmra.mxu0 %v2251
        %v2398 = vpop.f32.mrf.mxu0
        %v2399 = vadd.f32 0.0, %v2398
        %v2400 = vpop.f32.mrf.mxu0
        %v2401 = vpop.f32.mrf.mxu0
        %v2402 = vadd.f32 0.0, %v2401
        %v2403 = vpop.f32.mrf.mxu0
        %2404 = vmatprep.mubr.bf16.mxu0 0
        %2405 = vmatmul.mubr.bf16.gmra.mxu0 %v2254
        %v2406 = vpop.f32.mrf.mxu0
        %v2407 = vadd.f32 0.0, %v2406
        %v2408 = vpop.f32.mrf.mxu0
        %v2409 = vpop.f32.mrf.mxu0
        %v2410 = vadd.f32 0.0, %v2409
        %v2411 = vpop.f32.mrf.mxu0
        %2412 = vmatprep.mubr.bf16.mxu0 0
        %2413 = vmatmul.mubr.bf16.gmra.mxu0 %v2257
        %v2414 = vpop.f32.mrf.mxu0
        %v2415 = vadd.f32 0.0, %v2414
        %v2416 = vpop.f32.mrf.mxu0
        %v2417 = vpop.f32.mrf.mxu0
        %v2418 = vadd.f32 0.0, %v2417
        %v2419 = vpop.f32.mrf.mxu0
        %2420 = vmatprep.mubr.bf16.mxu0 0
        %2421 = vmatmul.mubr.bf16.gmra.mxu0 %v2260
        %v2422 = vpop.f32.mrf.mxu0
        %v2423 = vadd.f32 0.0, %v2422
        %v2424 = vpop.f32.mrf.mxu0
        %v2425 = vpop.f32.mrf.mxu0
        %v2426 = vadd.f32 0.0, %v2425
        %v2427 = vpop.f32.mrf.mxu0
        %2428 = vmatprep.mubr.bf16.mxu0 0
        %2429 = vmatmul.mubr.bf16.gmra.mxu0 %v2263
        %v2430 = vpop.f32.mrf.mxu0
        %v2431 = vadd.f32 0.0, %v2430
        %v2432 = vpop.f32.mrf.mxu0
        %v2433 = vpop.f32.mrf.mxu0
        %v2434 = vadd.f32 0.0, %v2433
        %v2435 = vpop.f32.mrf.mxu0
        %2436 = vmatprep.mubr.bf16.mxu0 0
        %2437 = vmatmul.mubr.bf16.gmra.mxu0 %v2266
        %v2438 = vpop.f32.mrf.mxu0
        %v2439 = vadd.f32 0.0, %v2438
        %v2440 = vpop.f32.mrf.mxu0
        %v2441 = vpop.f32.mrf.mxu0
        %v2442 = vadd.f32 0.0, %v2441
        %v2443 = vpop.f32.mrf.mxu0
        %2444 = vmatprep.mubr.bf16.mxu0 0
        %2445 = vmatmul.mubr.bf16.gmra.mxu0 %v2269
        %v2446 = vpop.f32.mrf.mxu0
        %v2447 = vadd.f32 0.0, %v2446
        %v2448 = vpop.f32.mrf.mxu0
        %v2449 = vpop.f32.mrf.mxu0
        %v2450 = vadd.f32 0.0, %v2449
        %v2451 = vpop.f32.mrf.mxu0
        %2452 = vmatprep.mubr.bf16.mxu0 0
        %2453 = vmatmul.mubr.bf16.gmra.mxu0 %v2272
        %v2454 = vpop.f32.mrf.mxu0
        %v2455 = vadd.f32 0.0, %v2454
        %v2456 = vpop.f32.mrf.mxu0
        %v2457 = vpop.f32.mrf.mxu0
        %v2458 = vadd.f32 0.0, %v2457
        %v2459 = vpop.f32.mrf.mxu0
        %2460 = vmatprep.mubr.bf16.mxu0 0
        %2461 = vmatmul.mubr.bf16.gmra.mxu0 %v2275
        %v2462 = vpop.f32.mrf.mxu0
        %v2463 = vadd.f32 0.0, %v2462
        %v2464 = vpop.f32.mrf.mxu0
        %v2465 = vpop.f32.mrf.mxu0
        %v2466 = vadd.f32 0.0, %v2465
        %v2467 = vpop.f32.mrf.mxu0
        %2468 = vmatprep.mubr.bf16.mxu0 0
        %2469 = vmatmul.mubr.bf16.gmra.mxu0 %v2278
        %v2470 = vpop.f32.mrf.mxu0
        %v2471 = vadd.f32 0.0, %v2470
        %v2472 = vpop.f32.mrf.mxu0
        %v2473 = vpop.f32.mrf.mxu0
        %v2474 = vadd.f32 0.0, %v2473
        %v2475 = vpop.f32.mrf.mxu0
        %2476 = vmatprep.mubr.bf16.mxu0 0
        %2477 = vmatmul.mubr.bf16.gmra.mxu0 %v2281
        %v2478 = vpop.f32.mrf.mxu0
        %v2479 = vadd.f32 0.0, %v2478
        %v2480 = vpop.f32.mrf.mxu0
        %v2481 = vpop.f32.mrf.mxu0
        %v2482 = vadd.f32 0.0, %v2481
        %v2483 = vpop.f32.mrf.mxu0
        %2484 = vmatprep.mubr.bf16.mxu0 0
        %2485 = vmatmul.mubr.bf16.gmra.mxu0 %v2284
        %v2486 = vpop.f32.mrf.mxu0
        %v2487 = vadd.f32 0.0, %v2486
        %v2488 = vpop.f32.mrf.mxu0
        %v2489 = vpop.f32.mrf.mxu0
        %v2490 = vadd.f32 0.0, %v2489
        %v2491 = vpop.f32.mrf.mxu0
        %2492 = vmatprep.mubr.bf16.mxu0 0
        %2493 = vmatmul.mubr.bf16.gmra.mxu0 %v2287
        %v2494 = vpop.f32.mrf.mxu0
        %v2495 = vadd.f32 0.0, %v2494
        %v2496 = vpop.f32.mrf.mxu0
        %v2497 = vpop.f32.mrf.mxu0
        %v2498 = vadd.f32 0.0, %v2497
        %v2499 = vpop.f32.mrf.mxu0
        %2500 = vmatprep.mubr.bf16.mxu0 0
        %2501 = vmatmul.mubr.bf16.gmra.mxu0 %v2290
        %v2502 = vpop.f32.mrf.mxu0
        %v2503 = vadd.f32 0.0, %v2502
        %v2504 = vpop.f32.mrf.mxu0
        %v2505 = vpop.f32.mrf.mxu0
        %v2506 = vadd.f32 0.0, %v2505
        %v2507 = vpop.f32.mrf.mxu0
        %2508 = vmatprep.mubr.bf16.mxu0 0
        %2509 = vmatmul.mubr.bf16.gmra.mxu0 %v2293
        %v2510 = vpop.f32.mrf.mxu0
        %v2511 = vadd.f32 0.0, %v2510
        %v2512 = vpop.f32.mrf.mxu0
        %v2513 = vpop.f32.mrf.mxu0
        %v2514 = vadd.f32 0.0, %v2513
        %v2515 = vpop.f32.mrf.mxu0
        %2516 = vmatprep.mubr.bf16.mxu0 0
        %2517 = vmatmul.mubr.bf16.gmra.mxu0 %v2296
        %v2518 = vpop.f32.mrf.mxu0
        %v2519 = vadd.f32 0.0, %v2518
        %v2520 = vpop.f32.mrf.mxu0
        %v2521 = vpop.f32.mrf.mxu0
        %v2522 = vadd.f32 0.0, %v2521
        %v2523 = vpop.f32.mrf.mxu0
        %2524 = vmatprep.mubr.bf16.mxu0 0
        %2525 = vmatmul.mubr.bf16.gmra.mxu0 %v2299
        %v2526 = vpop.f32.mrf.mxu0
        %v2527 = vadd.f32 0.0, %v2526
        %v2528 = vpop.f32.mrf.mxu0
        %v2529 = vpop.f32.mrf.mxu0
        %v2530 = vadd.f32 0.0, %v2529
        %v2531 = vpop.f32.mrf.mxu0
        %2532 = vmatprep.mubr.bf16.mxu0 0
        %2533 = vmatmul.mubr.bf16.gmra.mxu0 %v2302
        %v2534 = vpop.f32.mrf.mxu0
        %v2535 = vadd.f32 0.0, %v2534
        %v2536 = vpop.f32.mrf.mxu0
        %v2537 = vpop.f32.mrf.mxu0
        %v2538 = vadd.f32 0.0, %v2537
        %v2539 = vpop.f32.mrf.mxu0
        %2540 = vmatprep.mubr.bf16.mxu0 0
        %2541 = vmatmul.mubr.bf16.gmra.mxu0 %v2305
        %v2542 = vpop.f32.mrf.mxu0
        %v2543 = vadd.f32 0.0, %v2542
        %v2544 = vpop.f32.mrf.mxu0
        %v2545 = vpop.f32.mrf.mxu0
        %v2546 = vadd.f32 0.0, %v2545
        %v2547 = vpop.f32.mrf.mxu0
        %2548 = vmatprep.mubr.bf16.mxu0 0
        %2549 = vmatmul.mubr.bf16.gmra.mxu0 %v2308
        %v2550 = vpop.f32.mrf.mxu0
        %v2551 = vadd.f32 0.0, %v2550
        %v2552 = vpop.f32.mrf.mxu0
        %v2553 = vpop.f32.mrf.mxu0
        %v2554 = vadd.f32 0.0, %v2553
        %v2555 = vpop.f32.mrf.mxu0
        %2556 = vmatprep.mubr.bf16.mxu0 0
        %2557 = vmatmul.mubr.bf16.gmra.mxu0 %v2311
        %v2558 = vpop.f32.mrf.mxu0
        %v2559 = vadd.f32 0.0, %v2558
        %v2560 = vpop.f32.mrf.mxu0
        %v2561 = vpop.f32.mrf.mxu0
        %v2562 = vadd.f32 0.0, %v2561
        %v2563 = vpop.f32.mrf.mxu0
        %2564 = vmatprep.mubr.bf16.mxu0 0
        %2565 = vmatmul.mubr.bf16.gmra.mxu0 %v2314
        %v2566 = vpop.f32.mrf.mxu0
        %v2567 = vadd.f32 0.0, %v2566
        %v2568 = vpop.f32.mrf.mxu0
        %v2569 = vpop.f32.mrf.mxu0
        %v2570 = vadd.f32 0.0, %v2569
        %v2571 = vpop.f32.mrf.mxu0
        %2572 = vmatprep.mubr.bf16.mxu0 0
        %2573 = vmatmul.mubr.bf16.gmra.mxu0 %v2317
        %v2574 = vpop.f32.mrf.mxu0
        %v2575 = vadd.f32 0.0, %v2574
        %v2576 = vpop.f32.mrf.mxu0
        %v2577 = vpop.f32.mrf.mxu0
        %v2578 = vadd.f32 0.0, %v2577
        %v2579 = vpop.f32.mrf.mxu0
        %2580 = vmatprep.mubr.bf16.mxu0 0
        %2581 = vmatmul.mubr.bf16.gmra.mxu0 %v2320
        %v2582 = vpop.f32.mrf.mxu0
        %v2583 = vadd.f32 0.0, %v2582
        %v2584 = vpop.f32.mrf.mxu0
        %v2585 = vpop.f32.mrf.mxu0
        %v2586 = vadd.f32 0.0, %v2585
        %v2587 = vpop.f32.mrf.mxu0
        %2588 = vmatprep.mubr.bf16.mxu0 0
        %2589 = vmatmul.mubr.bf16.gmra.mxu0 %v2323
        %v2590 = vpop.f32.mrf.mxu0
        %v2591 = vadd.f32 0.0, %v2590
        %v2592 = vpop.f32.mrf.mxu0
        %v2593 = vpop.f32.mrf.mxu0
        %v2594 = vadd.f32 0.0, %v2593
        %v2595 = vpop.f32.mrf.mxu0
        %2596 = vmatprep.mubr.bf16.mxu0 0
        %2597 = vmatmul.mubr.bf16.gmra.mxu0 %v2326
        %v2598 = vpop.f32.mrf.mxu0
        %v2599 = vadd.f32 0.0, %v2598
        %v2600 = vpop.f32.mrf.mxu0
        %v2601 = vpop.f32.mrf.mxu0
        %v2602 = vadd.f32 0.0, %v2601
        %v2603 = vpop.f32.mrf.mxu0
        %2604 = vmatprep.mubr.bf16.mxu0 0
        %2605 = vmatmul.mubr.bf16.gmra.mxu0 %v2329
        %v2606 = vpop.f32.mrf.mxu0
        %v2607 = vadd.f32 0.0, %v2606
        %v2608 = vpop.f32.mrf.mxu0
        %v2609 = vpop.f32.mrf.mxu0
        %v2610 = vadd.f32 0.0, %v2609
        %v2611 = vpop.f32.mrf.mxu0
        %2612 = vmatprep.mubr.bf16.mxu0 0
        %2613 = vmatmul.mubr.bf16.gmra.mxu0 %v2332
        %v2614 = vpop.f32.mrf.mxu0
        %v2615 = vadd.f32 0.0, %v2614
        %v2616 = vpop.f32.mrf.mxu0
        %v2617 = vpop.f32.mrf.mxu0
        %v2618 = vadd.f32 0.0, %v2617
        %v2619 = vpop.f32.mrf.mxu0
        %2620 = vmatprep.mubr.bf16.mxu0 0
        %2621 = vmatmul.mubr.bf16.gmra.mxu0 %v2335
        %v2622 = vpop.f32.mrf.mxu0
        %v2623 = vadd.f32 0.0, %v2622
        %v2624 = vpop.f32.mrf.mxu0
        %v2625 = vpop.f32.mrf.mxu0
        %v2626 = vadd.f32 0.0, %v2625
        %v2627 = vpop.f32.mrf.mxu0
        %2628 = vdwg.mxu0
        %v2629 = vadd.f32 %v1951, %v2375
        %v2630 = vadd.f32 %v1952, %v2378
        %v2631 = vadd.f32 %v1953, %v2383
        %v2632 = vadd.f32 %v1954, %v2386
        %v2633 = vadd.f32 %v1955, %v2391
        %v2634 = vadd.f32 %v1956, %v2394
        %v2635 = vadd.f32 %v1957, %v2399
        %v2636 = vadd.f32 %v1958, %v2402
        %v2637 = vadd.f32 %v1959, %v2407
        %v2638 = vadd.f32 %v1960, %v2410
        %v2639 = vadd.f32 %v1961, %v2415
        %v2640 = vadd.f32 %v1962, %v2418
        %v2641 = vadd.f32 %v1963, %v2423
        %v2642 = vadd.f32 %v1964, %v2426
        %v2643 = vadd.f32 %v1965, %v2431
        %v2644 = vadd.f32 %v1966, %v2434
        %v2645 = vadd.f32 %v1967, %v2439
        %v2646 = vadd.f32 %v1968, %v2442
        %v2647 = vadd.f32 %v1969, %v2447
        %v2648 = vadd.f32 %v1970, %v2450
        %v2649 = vadd.f32 %v1971, %v2455
        %v2650 = vadd.f32 %v1972, %v2458
        %v2651 = vadd.f32 %v1973, %v2463
        %v2652 = vadd.f32 %v1974, %v2466
        %v2653 = vadd.f32 %v1975, %v2471
        %v2654 = vadd.f32 %v1976, %v2474
        %v2655 = vadd.f32 %v1977, %v2479
        %v2656 = vadd.f32 %v1978, %v2482
        %v2657 = vadd.f32 %v1979, %v2487
        %v2658 = vadd.f32 %v1980, %v2490
        %v2659 = vadd.f32 %v1981, %v2495
        %v2660 = vadd.f32 %v1982, %v2498
        %v2661 = vadd.f32 %v1983, %v2503
        %v2662 = vadd.f32 %v1984, %v2506
        %v2663 = vadd.f32 %v1985, %v2511
        %v2664 = vadd.f32 %v1986, %v2514
        %v2665 = vadd.f32 %v1987, %v2519
        %v2666 = vadd.f32 %v1988, %v2522
        %v2667 = vadd.f32 %v1989, %v2527
        %v2668 = vadd.f32 %v1990, %v2530
        %v2669 = vadd.f32 %v1991, %v2535
        %v2670 = vadd.f32 %v1992, %v2538
        %v2671 = vadd.f32 %v1993, %v2543
        %v2672 = vadd.f32 %v1994, %v2546
        %v2673 = vadd.f32 %v1995, %v2551
        %v2674 = vadd.f32 %v1996, %v2554
        %v2675 = vadd.f32 %v1997, %v2559
        %v2676 = vadd.f32 %v1998, %v2562
        %v2677 = vadd.f32 %v1999, %v2567
        %v2678 = vadd.f32 %v2000, %v2570
        %v2679 = vadd.f32 %v2001, %v2575
        %v2680 = vadd.f32 %v2002, %v2578
        %v2681 = vadd.f32 %v2003, %v2583
        %v2682 = vadd.f32 %v2004, %v2586
        %v2683 = vadd.f32 %v2005, %v2591
        %v2684 = vadd.f32 %v2006, %v2594
        %v2685 = vadd.f32 %v2007, %v2599
        %v2686 = vadd.f32 %v2008, %v2602
        %v2687 = vadd.f32 %v2009, %v2607
        %v2688 = vadd.f32 %v2010, %v2610
        %v2689 = vadd.f32 %v2011, %v2615
        %v2690 = vadd.f32 %v2012, %v2618
        %v2691 = vadd.f32 %v2013, %v2623
        %v2692 = vadd.f32 %v2014, %v2626
        %v2693 = vld [vmem:[%s250 + $0x10] sm:$0xf]
        %v2694 = vld [vmem:[%s250 + $0x14] sm:$0xf]
        %v2695 = vld [vmem:[%s250 + $0x18] sm:$0xf]
        %v2696 = vld [vmem:[%s250 + $0x1c] sm:$0xf]
        %v2697 = vld [vmem:[%s250 + $0x20] sm:$0xf]
        %v2698 = vld [vmem:[%s250 + $0x24] sm:$0xf]
        %v2699 = vld [vmem:[%s250 + $0x28] sm:$0xf]
        %v2700 = vld [vmem:[%s250 + $0x2c] sm:$0xf]
        %v2701 = vld [vmem:[%s250 + $0x30] sm:$0xf]
        %v2702 = vld [vmem:[%s250 + $0x34] sm:$0xf]
        %v2703 = vld [vmem:[%s250 + $0x38] sm:$0xf]
        %v2704 = vld [vmem:[%s250 + $0x3c] sm:$0xf]
        %v2705 = vld [vmem:[%s250 + $0x40] sm:$0xf]
        %v2706 = vld [vmem:[%s250 + $0x44] sm:$0xf]
        %v2707 = vld [vmem:[%s250 + $0x48] sm:$0xf]
        %v2708 = vld [vmem:[%s250 + $0x4c] sm:$0xf]
        %v2709 = vld [vmem:[%s250 + $0x50] sm:$0xf]
        %v2710 = vld [vmem:[%s250 + $0x54] sm:$0xf]
        %v2711 = vld [vmem:[%s250 + $0x58] sm:$0xf]
        %v2712 = vld [vmem:[%s250 + $0x5c] sm:$0xf]
        %v2713 = vld [vmem:[%s250 + $0x60] sm:$0xf]
        %v2714 = vld [vmem:[%s250 + $0x64] sm:$0xf]
        %v2715 = vld [vmem:[%s250 + $0x68] sm:$0xf]
        %v2716 = vld [vmem:[%s250 + $0x6c] sm:$0xf]
        %v2717 = vld [vmem:[%s250 + $0x70] sm:$0xf]
        %v2718 = vld [vmem:[%s250 + $0x74] sm:$0xf]
        %v2719 = vld [vmem:[%s250 + $0x78] sm:$0xf]
        %v2720 = vld [vmem:[%s250 + $0x7c] sm:$0xf]
        %v2721 = vld [vmem:[%s250 + $0x80] sm:$0xf]
        %v2722 = vld [vmem:[%s250 + $0x84] sm:$0xf]
        %v2723 = vld [vmem:[%s250 + $0x88] sm:$0xf]
        %v2724 = vld [vmem:[%s250 + $0x8c] sm:$0xf]
        %v2725 = vld [vmem:[%s250 + $0x90] sm:$0xf]
        %v2726 = vld [vmem:[%s250 + $0x94] sm:$0xf]
        %v2727 = vld [vmem:[%s250 + $0x98] sm:$0xf]
        %v2728 = vld [vmem:[%s250 + $0x9c] sm:$0xf]
        %v2729 = vld [vmem:[%s250 + $0xa0] sm:$0xf]
        %v2730 = vld [vmem:[%s250 + $0xa4] sm:$0xf]
        %v2731 = vld [vmem:[%s250 + $0xa8] sm:$0xf]
        %v2732 = vld [vmem:[%s250 + $0xac] sm:$0xf]
        %v2733 = vld [vmem:[%s250 + $0xb0] sm:$0xf]
        %v2734 = vld [vmem:[%s250 + $0xb4] sm:$0xf]
        %v2735 = vld [vmem:[%s250 + $0xb8] sm:$0xf]
        %v2736 = vld [vmem:[%s250 + $0xbc] sm:$0xf]
        %v2737 = vld [vmem:[%s250 + $0xc0] sm:$0xf]
        %v2738 = vld [vmem:[%s250 + $0xc4] sm:$0xf]
        %v2739 = vld [vmem:[%s250 + $0xc8] sm:$0xf]
        %v2740 = vld [vmem:[%s250 + $0xcc] sm:$0xf]
        %v2741 = vld [vmem:[%s250 + $0xd0] sm:$0xf]
        %v2742 = vld [vmem:[%s250 + $0xd4] sm:$0xf]
        %v2743 = vld [vmem:[%s250 + $0xd8] sm:$0xf]
        %v2744 = vld [vmem:[%s250 + $0xdc] sm:$0xf]
        %v2745 = vld [vmem:[%s250 + $0xe0] sm:$0xf]
        %v2746 = vld [vmem:[%s250 + $0xe4] sm:$0xf]
        %v2747 = vld [vmem:[%s250 + $0xe8] sm:$0xf]
        %v2748 = vld [vmem:[%s250 + $0xec] sm:$0xf]
        %v2749 = vld [vmem:[%s250 + $0xf0] sm:$0xf]
        %v2750 = vld [vmem:[%s250 + $0xf4] sm:$0xf]
        %v2751 = vld [vmem:[%s250 + $0xf8] sm:$0xf]
        %v2752 = vld [vmem:[%s250 + $0xfc] sm:$0xf]
        %v2753 = vld [vmem:[%s250 + $0x100] sm:$0xf]
        %v2754 = vld [vmem:[%s250 + $0x104] sm:$0xf]
        %v2755 = vld [vmem:[%s250 + $0x108] sm:$0xf]
        %v2756 = vld [vmem:[%s250 + $0x10c] sm:$0xf]
        %v2757 = vld [vmem:[%s250 + $0x110] sm:$0x1]
        %s2758 = scalar_lea.vmem %s1, 8
        %v2759 = vld [vmem:[%s2758] sm:$0x3]
        %v2825 = vunpack.c.l.b16 %v2693
        %v2826 = vunpack.c.l.b16 %v2694
        %v2827 = vunpack.c.l.b16 %v2695
        %v2828 = vunpack.c.l.b16 %v2696
        %v2829 = vunpack.c.l.b16 %v2697
        %v2830 = vunpack.c.l.b16 %v2698
        %v2831 = vunpack.c.l.b16 %v2699
        %v2832 = vunpack.c.l.b16 %v2700
        %v2833 = vunpack.c.l.b16 %v2701
        %v2834 = vunpack.c.l.b16 %v2702
        %v2835 = vunpack.c.l.b16 %v2703
        %v2836 = vunpack.c.l.b16 %v2704
        %v2837 = vunpack.c.l.b16 %v2705
        %v2838 = vunpack.c.l.b16 %v2706
        %v2839 = vunpack.c.l.b16 %v2707
        %v2840 = vunpack.c.l.b16 %v2708
        %v2841 = vunpack.c.l.b16 %v2709
        %v2842 = vunpack.c.l.b16 %v2710
        %v2843 = vunpack.c.l.b16 %v2711
        %v2844 = vunpack.c.l.b16 %v2712
        %v2845 = vunpack.c.l.b16 %v2713
        %v2846 = vunpack.c.l.b16 %v2714
        %v2847 = vunpack.c.l.b16 %v2715
        %v2848 = vunpack.c.l.b16 %v2716
        %v2849 = vunpack.c.l.b16 %v2717
        %v2850 = vunpack.c.l.b16 %v2718
        %v2851 = vunpack.c.l.b16 %v2719
        %v2852 = vunpack.c.l.b16 %v2720
        %v2853 = vunpack.c.l.b16 %v2721
        %v2854 = vunpack.c.l.b16 %v2722
        %v2855 = vunpack.c.l.b16 %v2723
        %v2856 = vunpack.c.l.b16 %v2724
        %v2857 = vunpack.c.l.b16 %v2725
        %v2858 = vunpack.c.l.b16 %v2726
        %v2859 = vunpack.c.l.b16 %v2727
        %v2860 = vunpack.c.l.b16 %v2728
        %v2861 = vunpack.c.l.b16 %v2729
        %v2862 = vunpack.c.l.b16 %v2730
        %v2863 = vunpack.c.l.b16 %v2731
        %v2864 = vunpack.c.l.b16 %v2732
        %v2865 = vunpack.c.l.b16 %v2733
        %v2866 = vunpack.c.l.b16 %v2734
        %v2867 = vunpack.c.l.b16 %v2735
        %v2868 = vunpack.c.l.b16 %v2736
        %v2869 = vunpack.c.l.b16 %v2737
        %v2870 = vunpack.c.l.b16 %v2738
        %v2871 = vunpack.c.l.b16 %v2739
        %v2872 = vunpack.c.l.b16 %v2740
        %v2873 = vunpack.c.l.b16 %v2741
        %v2874 = vunpack.c.l.b16 %v2742
        %v2875 = vunpack.c.l.b16 %v2743
        %v2876 = vunpack.c.l.b16 %v2744
        %v2877 = vunpack.c.l.b16 %v2745
        %v2878 = vunpack.c.l.b16 %v2746
        %v2879 = vunpack.c.l.b16 %v2747
        %v2880 = vunpack.c.l.b16 %v2748
        %v2881 = vunpack.c.l.b16 %v2749
        %v2882 = vunpack.c.l.b16 %v2750
        %v2883 = vunpack.c.l.b16 %v2751
        %v2884 = vunpack.c.l.b16 %v2752
        %v2885 = vunpack.c.l.b16 %v2753
        %v2886 = vunpack.c.l.b16 %v2754
        %v2887 = vunpack.c.l.b16 %v2755
        %v2888 = vunpack.c.l.b16 %v2756
        %v2889 = vunpack.c.l.b16 %v2757
        %v2890 = vpack.c.b16 %v2826, %v2825
        %v2891 = vpack.c.b16 %v2828, %v2827
        %v2892 = vpack.c.b16 %v2830, %v2829
        %v2893 = vpack.c.b16 %v2832, %v2831
        %v2894 = vpack.c.b16 %v2834, %v2833
        %v2895 = vpack.c.b16 %v2836, %v2835
        %v2896 = vpack.c.b16 %v2838, %v2837
        %v2897 = vpack.c.b16 %v2840, %v2839
        %v2898 = vpack.c.b16 %v2842, %v2841
        %v2899 = vpack.c.b16 %v2844, %v2843
        %v2900 = vpack.c.b16 %v2846, %v2845
        %v2901 = vpack.c.b16 %v2848, %v2847
        %v2902 = vpack.c.b16 %v2850, %v2849
        %v2903 = vpack.c.b16 %v2852, %v2851
        %v2904 = vpack.c.b16 %v2854, %v2853
        %v2905 = vpack.c.b16 %v2856, %v2855
        %v2906 = vpack.c.b16 %v2858, %v2857
        %v2907 = vpack.c.b16 %v2860, %v2859
        %v2908 = vpack.c.b16 %v2862, %v2861
        %v2909 = vpack.c.b16 %v2864, %v2863
        %v2910 = vpack.c.b16 %v2866, %v2865
        %v2911 = vpack.c.b16 %v2868, %v2867
        %v2912 = vpack.c.b16 %v2870, %v2869
        %v2913 = vpack.c.b16 %v2872, %v2871
        %v2914 = vpack.c.b16 %v2874, %v2873
        %v2915 = vpack.c.b16 %v2876, %v2875
        %v2916 = vpack.c.b16 %v2878, %v2877
        %v2917 = vpack.c.b16 %v2880, %v2879
        %v2918 = vpack.c.b16 %v2882, %v2881
        %v2919 = vpack.c.b16 %v2884, %v2883
        %v2920 = vpack.c.b16 %v2886, %v2885
        %v2921 = vpack.c.b16 %v2888, %v2887
        %v2922 = vpack.c.b16 %v2889, %v2889
        %v2924 = vshrl.u32 %v2890, 16
        %v2926 = vshll.u32 %v2890, 16
        %v2928 = vrot.slane %v2926, 1
        %v2929 = vor.u32 %v2924, %v2928
        %v2931 = vshll.u32 %v2891, 16
        %v2933 = vrot.slane %v2931, 1
        %v2934 = vsel %vm484, %v2929, %v2933
        %v2935 = vshrl.u32 %v2891, 16
        %v2937 = vor.u32 %v2935, %v2933
        %v2939 = vshll.u32 %v2892, 16
        %v2941 = vrot.slane %v2939, 1
        %v2942 = vsel %vm484, %v2937, %v2941
        %v2943 = vshrl.u32 %v2892, 16
        %v2945 = vor.u32 %v2943, %v2941
        %v2947 = vshll.u32 %v2893, 16
        %v2949 = vrot.slane %v2947, 1
        %v2950 = vsel %vm484, %v2945, %v2949
        %v2951 = vshrl.u32 %v2893, 16
        %v2953 = vor.u32 %v2951, %v2949
        %v2955 = vshll.u32 %v2894, 16
        %v2957 = vrot.slane %v2955, 1
        %v2958 = vsel %vm484, %v2953, %v2957
        %v2959 = vshrl.u32 %v2894, 16
        %v2961 = vor.u32 %v2959, %v2957
        %v2963 = vshll.u32 %v2895, 16
        %v2965 = vrot.slane %v2963, 1
        %v2966 = vsel %vm484, %v2961, %v2965
        %v2967 = vshrl.u32 %v2895, 16
        %v2969 = vor.u32 %v2967, %v2965
        %v2971 = vshll.u32 %v2896, 16
        %v2973 = vrot.slane %v2971, 1
        %v2974 = vsel %vm484, %v2969, %v2973
        %v2975 = vshrl.u32 %v2896, 16
        %v2977 = vor.u32 %v2975, %v2973
        %v2979 = vshll.u32 %v2897, 16
        %v2981 = vrot.slane %v2979, 1
        %v2982 = vsel %vm484, %v2977, %v2981
        %v2983 = vshrl.u32 %v2897, 16
        %v2985 = vor.u32 %v2983, %v2981
        %v2987 = vshll.u32 %v2898, 16
        %v2989 = vrot.slane %v2987, 1
        %v2990 = vsel %vm484, %v2985, %v2989
        %v2991 = vshrl.u32 %v2898, 16
        %v2993 = vor.u32 %v2991, %v2989
        %v2995 = vshll.u32 %v2899, 16
        %v2997 = vrot.slane %v2995, 1
        %v2998 = vsel %vm484, %v2993, %v2997
        %v2999 = vshrl.u32 %v2899, 16
        %v3001 = vor.u32 %v2999, %v2997
        %v3003 = vshll.u32 %v2900, 16
        %v3005 = vrot.slane %v3003, 1
        %v3006 = vsel %vm484, %v3001, %v3005
        %v3007 = vshrl.u32 %v2900, 16
        %v3009 = vor.u32 %v3007, %v3005
        %v3011 = vshll.u32 %v2901, 16
        %v3013 = vrot.slane %v3011, 1
        %v3014 = vsel %vm484, %v3009, %v3013
        %v3015 = vshrl.u32 %v2901, 16
        %v3017 = vor.u32 %v3015, %v3013
        %v3019 = vshll.u32 %v2902, 16
        %v3021 = vrot.slane %v3019, 1
        %v3022 = vsel %vm484, %v3017, %v3021
        %v3023 = vshrl.u32 %v2902, 16
        %v3025 = vor.u32 %v3023, %v3021
        %v3027 = vshll.u32 %v2903, 16
        %v3029 = vrot.slane %v3027, 1
        %v3030 = vsel %vm484, %v3025, %v3029
        %v3031 = vshrl.u32 %v2903, 16
        %v3033 = vor.u32 %v3031, %v3029
        %v3035 = vshll.u32 %v2904, 16
        %v3037 = vrot.slane %v3035, 1
        %v3038 = vsel %vm484, %v3033, %v3037
        %v3039 = vshrl.u32 %v2904, 16
        %v3041 = vor.u32 %v3039, %v3037
        %v3043 = vshll.u32 %v2905, 16
        %v3045 = vrot.slane %v3043, 1
        %v3046 = vsel %vm484, %v3041, %v3045
        %v3047 = vshrl.u32 %v2905, 16
        %v3049 = vor.u32 %v3047, %v3045
        %v3051 = vshll.u32 %v2906, 16
        %v3053 = vrot.slane %v3051, 1
        %v3054 = vsel %vm484, %v3049, %v3053
        %v3055 = vshrl.u32 %v2906, 16
        %v3057 = vor.u32 %v3055, %v3053
        %v3059 = vshll.u32 %v2907, 16
        %v3061 = vrot.slane %v3059, 1
        %v3062 = vsel %vm484, %v3057, %v3061
        %v3063 = vshrl.u32 %v2907, 16
        %v3065 = vor.u32 %v3063, %v3061
        %v3067 = vshll.u32 %v2908, 16
        %v3069 = vrot.slane %v3067, 1
        %v3070 = vsel %vm484, %v3065, %v3069
        %v3071 = vshrl.u32 %v2908, 16
        %v3073 = vor.u32 %v3071, %v3069
        %v3075 = vshll.u32 %v2909, 16
        %v3077 = vrot.slane %v3075, 1
        %v3078 = vsel %vm484, %v3073, %v3077
        %v3079 = vshrl.u32 %v2909, 16
        %v3081 = vor.u32 %v3079, %v3077
        %v3083 = vshll.u32 %v2910, 16
        %v3085 = vrot.slane %v3083, 1
        %v3086 = vsel %vm484, %v3081, %v3085
        %v3087 = vshrl.u32 %v2910, 16
        %v3089 = vor.u32 %v3087, %v3085
        %v3091 = vshll.u32 %v2911, 16
        %v3093 = vrot.slane %v3091, 1
        %v3094 = vsel %vm484, %v3089, %v3093
        %v3095 = vshrl.u32 %v2911, 16
        %v3097 = vor.u32 %v3095, %v3093
        %v3099 = vshll.u32 %v2912, 16
        %v3101 = vrot.slane %v3099, 1
        %v3102 = vsel %vm484, %v3097, %v3101
        %v3103 = vshrl.u32 %v2912, 16
        %v3105 = vor.u32 %v3103, %v3101
        %v3107 = vshll.u32 %v2913, 16
        %v3109 = vrot.slane %v3107, 1
        %v3110 = vsel %vm484, %v3105, %v3109
        %v3111 = vshrl.u32 %v2913, 16
        %v3113 = vor.u32 %v3111, %v3109
        %v3115 = vshll.u32 %v2914, 16
        %v3117 = vrot.slane %v3115, 1
        %v3118 = vsel %vm484, %v3113, %v3117
        %v3119 = vshrl.u32 %v2914, 16
        %v3121 = vor.u32 %v3119, %v3117
        %v3123 = vshll.u32 %v2915, 16
        %v3125 = vrot.slane %v3123, 1
        %v3126 = vsel %vm484, %v3121, %v3125
        %v3127 = vshrl.u32 %v2915, 16
        %v3129 = vor.u32 %v3127, %v3125
        %v3131 = vshll.u32 %v2916, 16
        %v3133 = vrot.slane %v3131, 1
        %v3134 = vsel %vm484, %v3129, %v3133
        %v3135 = vshrl.u32 %v2916, 16
        %v3137 = vor.u32 %v3135, %v3133
        %v3139 = vshll.u32 %v2917, 16
        %v3141 = vrot.slane %v3139, 1
        %v3142 = vsel %vm484, %v3137, %v3141
        %v3143 = vshrl.u32 %v2917, 16
        %v3145 = vor.u32 %v3143, %v3141
        %v3147 = vshll.u32 %v2918, 16
        %v3149 = vrot.slane %v3147, 1
        %v3150 = vsel %vm484, %v3145, %v3149
        %v3151 = vshrl.u32 %v2918, 16
        %v3153 = vor.u32 %v3151, %v3149
        %v3155 = vshll.u32 %v2919, 16
        %v3157 = vrot.slane %v3155, 1
        %v3158 = vsel %vm484, %v3153, %v3157
        %v3159 = vshrl.u32 %v2919, 16
        %v3161 = vor.u32 %v3159, %v3157
        %v3163 = vshll.u32 %v2920, 16
        %v3165 = vrot.slane %v3163, 1
        %v3166 = vsel %vm484, %v3161, %v3165
        %v3167 = vshrl.u32 %v2920, 16
        %v3169 = vor.u32 %v3167, %v3165
        %v3171 = vshll.u32 %v2921, 16
        %v3173 = vrot.slane %v3171, 1
        %v3174 = vsel %vm484, %v3169, %v3173
        %v3175 = vshrl.u32 %v2921, 16
        %v3177 = vor.u32 %v3175, %v3173
        %v3179 = vshll.u32 %v2922, 16
        %v3181 = vrot.slane %v3179, 1
        %v3182 = vsel %vm484, %v3177, %v3181
        %v3184 = vsel %vm745, %v2934, 0
        %v3187 = vsel %vm745, %v2942, 0
        %v3190 = vsel %vm745, %v2950, 0
        %v3193 = vsel %vm745, %v2958, 0
        %v3196 = vsel %vm745, %v2966, 0
        %v3199 = vsel %vm745, %v2974, 0
        %v3202 = vsel %vm745, %v2982, 0
        %v3205 = vsel %vm745, %v2990, 0
        %v3208 = vsel %vm745, %v2998, 0
        %v3211 = vsel %vm745, %v3006, 0
        %v3214 = vsel %vm745, %v3014, 0
        %v3217 = vsel %vm745, %v3022, 0
        %v3220 = vsel %vm745, %v3030, 0
        %v3223 = vsel %vm745, %v3038, 0
        %v3226 = vsel %vm745, %v3046, 0
        %v3229 = vsel %vm745, %v3054, 0
        %v3232 = vsel %vm745, %v3062, 0
        %v3235 = vsel %vm745, %v3070, 0
        %v3238 = vsel %vm745, %v3078, 0
        %v3241 = vsel %vm745, %v3086, 0
        %v3244 = vsel %vm745, %v3094, 0
        %v3247 = vsel %vm745, %v3102, 0
        %v3250 = vsel %vm745, %v3110, 0
        %v3253 = vsel %vm745, %v3118, 0
        %v3256 = vsel %vm745, %v3126, 0
        %v3259 = vsel %vm745, %v3134, 0
        %v3262 = vsel %vm745, %v3142, 0
        %v3265 = vsel %vm745, %v3150, 0
        %v3268 = vsel %vm745, %v3158, 0
        %v3271 = vsel %vm745, %v3166, 0
        %v3274 = vsel %vm745, %v3174, 0
        %v3277 = vsel %vm745, %v3182, 0
        %v3280 = vsel %vm842, %v2759, 0
        %3282 = vmatprep.subr.bf16.mxu0 0
        %3283 = vmatpush1.bf16.msra.mxu0 0
        %3284 = vmatprep.subr.bf16.mxu0 0
        %3285 = vmatpush1.bf16.msra.mxu0 0
        %3286 = vmatprep.subr.bf16.mxu0 0
        %3287 = vmatpush1.bf16.msra.mxu0 0
        %3288 = vmatprep.subr.bf16.mxu0 0
        %3289 = vmatpush1.bf16.msra.mxu0 0
        %3290 = vmatprep.subr.bf16.mxu0 0
        %3291 = vmatpush1.bf16.msra.mxu0 0
        %3292 = vmatprep.subr.bf16.mxu0 0
        %3293 = vmatpush1.bf16.msra.mxu0 0
        %3294 = vmatprep.subr.bf16.mxu0 0
        %3295 = vmatpush1.bf16.msra.mxu0 0
        %3296 = vmatprep.subr.bf16.mxu0 0
        %3297 = vmatpush1.bf16.msra.mxu0 %v3280
        %3298 = vmatprep.subr.bf16.mxu0 0
        %3299 = vmatpush2.bf16.msra.mxu0 0
        %3300 = vmatprep.subr.bf16.mxu0 0
        %3301 = vmatpush2.bf16.msra.mxu0 0
        %3302 = vmatprep.subr.bf16.mxu0 0
        %3303 = vmatpush2.bf16.msra.mxu0 0
        %3304 = vmatprep.subr.bf16.mxu0 0
        %3305 = vmatpush2.bf16.msra.mxu0 0
        %3306 = vmatprep.subr.bf16.mxu0 0
        %3307 = vmatpush2.bf16.msra.mxu0 0
        %3308 = vmatprep.subr.bf16.mxu0 0
        %3309 = vmatpush2.bf16.msra.mxu0 0
        %3310 = vmatprep.subr.bf16.mxu0 0
        %3311 = vmatpush2.bf16.msra.mxu0 0
        %3312 = vmatprep.subr.bf16.mxu0 0
        %3313 = vmatpush2.bf16.msra.mxu0 0
        %3314 = vmatprep.mubr.bf16.mxu0 0
        %3315 = vmatmul.mubr.bf16.gmra.mxu0 %v3184
        %v3316 = vpop.f32.mrf.mxu0
        %v3317 = vadd.f32 0.0, %v3316
        %v3318 = vpop.f32.mrf.mxu0
        %v3319 = vpop.f32.mrf.mxu0
        %v3320 = vadd.f32 0.0, %v3319
        %v3321 = vpop.f32.mrf.mxu0
        %3322 = vmatprep.mubr.bf16.mxu0 0
        %3323 = vmatmul.mubr.bf16.gmra.mxu0 %v3187
        %v3324 = vpop.f32.mrf.mxu0
        %v3325 = vadd.f32 0.0, %v3324
        %v3326 = vpop.f32.mrf.mxu0
        %v3327 = vpop.f32.mrf.mxu0
        %v3328 = vadd.f32 0.0, %v3327
        %v3329 = vpop.f32.mrf.mxu0
        %3330 = vmatprep.mubr.bf16.mxu0 0
        %3331 = vmatmul.mubr.bf16.gmra.mxu0 %v3190
        %v3332 = vpop.f32.mrf.mxu0
        %v3333 = vadd.f32 0.0, %v3332
        %v3334 = vpop.f32.mrf.mxu0
        %v3335 = vpop.f32.mrf.mxu0
        %v3336 = vadd.f32 0.0, %v3335
        %v3337 = vpop.f32.mrf.mxu0
        %3338 = vmatprep.mubr.bf16.mxu0 0
        %3339 = vmatmul.mubr.bf16.gmra.mxu0 %v3193
        %v3340 = vpop.f32.mrf.mxu0
        %v3341 = vadd.f32 0.0, %v3340
        %v3342 = vpop.f32.mrf.mxu0
        %v3343 = vpop.f32.mrf.mxu0
        %v3344 = vadd.f32 0.0, %v3343
        %v3345 = vpop.f32.mrf.mxu0
        %3346 = vmatprep.mubr.bf16.mxu0 0
        %3347 = vmatmul.mubr.bf16.gmra.mxu0 %v3196
        %v3348 = vpop.f32.mrf.mxu0
        %v3349 = vadd.f32 0.0, %v3348
        %v3350 = vpop.f32.mrf.mxu0
        %v3351 = vpop.f32.mrf.mxu0
        %v3352 = vadd.f32 0.0, %v3351
        %v3353 = vpop.f32.mrf.mxu0
        %3354 = vmatprep.mubr.bf16.mxu0 0
        %3355 = vmatmul.mubr.bf16.gmra.mxu0 %v3199
        %v3356 = vpop.f32.mrf.mxu0
        %v3357 = vadd.f32 0.0, %v3356
        %v3358 = vpop.f32.mrf.mxu0
        %v3359 = vpop.f32.mrf.mxu0
        %v3360 = vadd.f32 0.0, %v3359
        %v3361 = vpop.f32.mrf.mxu0
        %3362 = vmatprep.mubr.bf16.mxu0 0
        %3363 = vmatmul.mubr.bf16.gmra.mxu0 %v3202
        %v3364 = vpop.f32.mrf.mxu0
        %v3365 = vadd.f32 0.0, %v3364
        %v3366 = vpop.f32.mrf.mxu0
        %v3367 = vpop.f32.mrf.mxu0
        %v3368 = vadd.f32 0.0, %v3367
        %v3369 = vpop.f32.mrf.mxu0
        %3370 = vmatprep.mubr.bf16.mxu0 0
        %3371 = vmatmul.mubr.bf16.gmra.mxu0 %v3205
        %v3372 = vpop.f32.mrf.mxu0
        %v3373 = vadd.f32 0.0, %v3372
        %v3374 = vpop.f32.mrf.mxu0
        %v3375 = vpop.f32.mrf.mxu0
        %v3376 = vadd.f32 0.0, %v3375
        %v3377 = vpop.f32.mrf.mxu0
        %3378 = vmatprep.mubr.bf16.mxu0 0
        %3379 = vmatmul.mubr.bf16.gmra.mxu0 %v3208
        %v3380 = vpop.f32.mrf.mxu0
        %v3381 = vadd.f32 0.0, %v3380
        %v3382 = vpop.f32.mrf.mxu0
        %v3383 = vpop.f32.mrf.mxu0
        %v3384 = vadd.f32 0.0, %v3383
        %v3385 = vpop.f32.mrf.mxu0
        %3386 = vmatprep.mubr.bf16.mxu0 0
        %3387 = vmatmul.mubr.bf16.gmra.mxu0 %v3211
        %v3388 = vpop.f32.mrf.mxu0
        %v3389 = vadd.f32 0.0, %v3388
        %v3390 = vpop.f32.mrf.mxu0
        %v3391 = vpop.f32.mrf.mxu0
        %v3392 = vadd.f32 0.0, %v3391
        %v3393 = vpop.f32.mrf.mxu0
        %3394 = vmatprep.mubr.bf16.mxu0 0
        %3395 = vmatmul.mubr.bf16.gmra.mxu0 %v3214
        %v3396 = vpop.f32.mrf.mxu0
        %v3397 = vadd.f32 0.0, %v3396
        %v3398 = vpop.f32.mrf.mxu0
        %v3399 = vpop.f32.mrf.mxu0
        %v3400 = vadd.f32 0.0, %v3399
        %v3401 = vpop.f32.mrf.mxu0
        %3402 = vmatprep.mubr.bf16.mxu0 0
        %3403 = vmatmul.mubr.bf16.gmra.mxu0 %v3217
        %v3404 = vpop.f32.mrf.mxu0
        %v3405 = vadd.f32 0.0, %v3404
        %v3406 = vpop.f32.mrf.mxu0
        %v3407 = vpop.f32.mrf.mxu0
        %v3408 = vadd.f32 0.0, %v3407
        %v3409 = vpop.f32.mrf.mxu0
        %3410 = vmatprep.mubr.bf16.mxu0 0
        %3411 = vmatmul.mubr.bf16.gmra.mxu0 %v3220
        %v3412 = vpop.f32.mrf.mxu0
        %v3413 = vadd.f32 0.0, %v3412
        %v3414 = vpop.f32.mrf.mxu0
        %v3415 = vpop.f32.mrf.mxu0
        %v3416 = vadd.f32 0.0, %v3415
        %v3417 = vpop.f32.mrf.mxu0
        %3418 = vmatprep.mubr.bf16.mxu0 0
        %3419 = vmatmul.mubr.bf16.gmra.mxu0 %v3223
        %v3420 = vpop.f32.mrf.mxu0
        %v3421 = vadd.f32 0.0, %v3420
        %v3422 = vpop.f32.mrf.mxu0
        %v3423 = vpop.f32.mrf.mxu0
        %v3424 = vadd.f32 0.0, %v3423
        %v3425 = vpop.f32.mrf.mxu0
        %3426 = vmatprep.mubr.bf16.mxu0 0
        %3427 = vmatmul.mubr.bf16.gmra.mxu0 %v3226
        %v3428 = vpop.f32.mrf.mxu0
        %v3429 = vadd.f32 0.0, %v3428
        %v3430 = vpop.f32.mrf.mxu0
        %v3431 = vpop.f32.mrf.mxu0
        %v3432 = vadd.f32 0.0, %v3431
        %v3433 = vpop.f32.mrf.mxu0
        %3434 = vmatprep.mubr.bf16.mxu0 0
        %3435 = vmatmul.mubr.bf16.gmra.mxu0 %v3229
        %v3436 = vpop.f32.mrf.mxu0
        %v3437 = vadd.f32 0.0, %v3436
        %v3438 = vpop.f32.mrf.mxu0
        %v3439 = vpop.f32.mrf.mxu0
        %v3440 = vadd.f32 0.0, %v3439
        %v3441 = vpop.f32.mrf.mxu0
        %3442 = vmatprep.mubr.bf16.mxu0 0
        %3443 = vmatmul.mubr.bf16.gmra.mxu0 %v3232
        %v3444 = vpop.f32.mrf.mxu0
        %v3445 = vadd.f32 0.0, %v3444
        %v3446 = vpop.f32.mrf.mxu0
        %v3447 = vpop.f32.mrf.mxu0
        %v3448 = vadd.f32 0.0, %v3447
        %v3449 = vpop.f32.mrf.mxu0
        %3450 = vmatprep.mubr.bf16.mxu0 0
        %3451 = vmatmul.mubr.bf16.gmra.mxu0 %v3235
        %v3452 = vpop.f32.mrf.mxu0
        %v3453 = vadd.f32 0.0, %v3452
        %v3454 = vpop.f32.mrf.mxu0
        %v3455 = vpop.f32.mrf.mxu0
        %v3456 = vadd.f32 0.0, %v3455
        %v3457 = vpop.f32.mrf.mxu0
        %3458 = vmatprep.mubr.bf16.mxu0 0
        %3459 = vmatmul.mubr.bf16.gmra.mxu0 %v3238
        %v3460 = vpop.f32.mrf.mxu0
        %v3461 = vadd.f32 0.0, %v3460
        %v3462 = vpop.f32.mrf.mxu0
        %v3463 = vpop.f32.mrf.mxu0
        %v3464 = vadd.f32 0.0, %v3463
        %v3465 = vpop.f32.mrf.mxu0
        %3466 = vmatprep.mubr.bf16.mxu0 0
        %3467 = vmatmul.mubr.bf16.gmra.mxu0 %v3241
        %v3468 = vpop.f32.mrf.mxu0
        %v3469 = vadd.f32 0.0, %v3468
        %v3470 = vpop.f32.mrf.mxu0
        %v3471 = vpop.f32.mrf.mxu0
        %v3472 = vadd.f32 0.0, %v3471
        %v3473 = vpop.f32.mrf.mxu0
        %3474 = vmatprep.mubr.bf16.mxu0 0
        %3475 = vmatmul.mubr.bf16.gmra.mxu0 %v3244
        %v3476 = vpop.f32.mrf.mxu0
        %v3477 = vadd.f32 0.0, %v3476
        %v3478 = vpop.f32.mrf.mxu0
        %v3479 = vpop.f32.mrf.mxu0
        %v3480 = vadd.f32 0.0, %v3479
        %v3481 = vpop.f32.mrf.mxu0
        %3482 = vmatprep.mubr.bf16.mxu0 0
        %3483 = vmatmul.mubr.bf16.gmra.mxu0 %v3247
        %v3484 = vpop.f32.mrf.mxu0
        %v3485 = vadd.f32 0.0, %v3484
        %v3486 = vpop.f32.mrf.mxu0
        %v3487 = vpop.f32.mrf.mxu0
        %v3488 = vadd.f32 0.0, %v3487
        %v3489 = vpop.f32.mrf.mxu0
        %3490 = vmatprep.mubr.bf16.mxu0 0
        %3491 = vmatmul.mubr.bf16.gmra.mxu0 %v3250
        %v3492 = vpop.f32.mrf.mxu0
        %v3493 = vadd.f32 0.0, %v3492
        %v3494 = vpop.f32.mrf.mxu0
        %v3495 = vpop.f32.mrf.mxu0
        %v3496 = vadd.f32 0.0, %v3495
        %v3497 = vpop.f32.mrf.mxu0
        %3498 = vmatprep.mubr.bf16.mxu0 0
        %3499 = vmatmul.mubr.bf16.gmra.mxu0 %v3253
        %v3500 = vpop.f32.mrf.mxu0
        %v3501 = vadd.f32 0.0, %v3500
        %v3502 = vpop.f32.mrf.mxu0
        %v3503 = vpop.f32.mrf.mxu0
        %v3504 = vadd.f32 0.0, %v3503
        %v3505 = vpop.f32.mrf.mxu0
        %3506 = vmatprep.mubr.bf16.mxu0 0
        %3507 = vmatmul.mubr.bf16.gmra.mxu0 %v3256
        %v3508 = vpop.f32.mrf.mxu0
        %v3509 = vadd.f32 0.0, %v3508
        %v3510 = vpop.f32.mrf.mxu0
        %v3511 = vpop.f32.mrf.mxu0
        %v3512 = vadd.f32 0.0, %v3511
        %v3513 = vpop.f32.mrf.mxu0
        %3514 = vmatprep.mubr.bf16.mxu0 0
        %3515 = vmatmul.mubr.bf16.gmra.mxu0 %v3259
        %v3516 = vpop.f32.mrf.mxu0
        %v3517 = vadd.f32 0.0, %v3516
        %v3518 = vpop.f32.mrf.mxu0
        %v3519 = vpop.f32.mrf.mxu0
        %v3520 = vadd.f32 0.0, %v3519
        %v3521 = vpop.f32.mrf.mxu0
        %3522 = vmatprep.mubr.bf16.mxu0 0
        %3523 = vmatmul.mubr.bf16.gmra.mxu0 %v3262
        %v3524 = vpop.f32.mrf.mxu0
        %v3525 = vadd.f32 0.0, %v3524
        %v3526 = vpop.f32.mrf.mxu0
        %v3527 = vpop.f32.mrf.mxu0
        %v3528 = vadd.f32 0.0, %v3527
        %v3529 = vpop.f32.mrf.mxu0
        %3530 = vmatprep.mubr.bf16.mxu0 0
        %3531 = vmatmul.mubr.bf16.gmra.mxu0 %v3265
        %v3532 = vpop.f32.mrf.mxu0
        %v3533 = vadd.f32 0.0, %v3532
        %v3534 = vpop.f32.mrf.mxu0
        %v3535 = vpop.f32.mrf.mxu0
        %v3536 = vadd.f32 0.0, %v3535
        %v3537 = vpop.f32.mrf.mxu0
        %3538 = vmatprep.mubr.bf16.mxu0 0
        %3539 = vmatmul.mubr.bf16.gmra.mxu0 %v3268
        %v3540 = vpop.f32.mrf.mxu0
        %v3541 = vadd.f32 0.0, %v3540
        %v3542 = vpop.f32.mrf.mxu0
        %v3543 = vpop.f32.mrf.mxu0
        %v3544 = vadd.f32 0.0, %v3543
        %v3545 = vpop.f32.mrf.mxu0
        %3546 = vmatprep.mubr.bf16.mxu0 0
        %3547 = vmatmul.mubr.bf16.gmra.mxu0 %v3271
        %v3548 = vpop.f32.mrf.mxu0
        %v3549 = vadd.f32 0.0, %v3548
        %v3550 = vpop.f32.mrf.mxu0
        %v3551 = vpop.f32.mrf.mxu0
        %v3552 = vadd.f32 0.0, %v3551
        %v3553 = vpop.f32.mrf.mxu0
        %3554 = vmatprep.mubr.bf16.mxu0 0
        %3555 = vmatmul.mubr.bf16.gmra.mxu0 %v3274
        %v3556 = vpop.f32.mrf.mxu0
        %v3557 = vadd.f32 0.0, %v3556
        %v3558 = vpop.f32.mrf.mxu0
        %v3559 = vpop.f32.mrf.mxu0
        %v3560 = vadd.f32 0.0, %v3559
        %v3561 = vpop.f32.mrf.mxu0
        %3562 = vmatprep.mubr.bf16.mxu0 0
        %3563 = vmatmul.mubr.bf16.gmra.mxu0 %v3277
        %v3564 = vpop.f32.mrf.mxu0
        %v3565 = vadd.f32 0.0, %v3564
        %v3566 = vpop.f32.mrf.mxu0
        %v3567 = vpop.f32.mrf.mxu0
        %v3568 = vadd.f32 0.0, %v3567
        %v3569 = vpop.f32.mrf.mxu0
        %3570 = vdwg.mxu0
        %v3571 = vadd.f32 %v2629, %v3317
        %v3572 = vadd.f32 %v2630, %v3320
        %v3573 = vadd.f32 %v2631, %v3325
        %v3574 = vadd.f32 %v2632, %v3328
        %v3575 = vadd.f32 %v2633, %v3333
        %v3576 = vadd.f32 %v2634, %v3336
        %v3577 = vadd.f32 %v2635, %v3341
        %v3578 = vadd.f32 %v2636, %v3344
        %v3579 = vadd.f32 %v2637, %v3349
        %v3580 = vadd.f32 %v2638, %v3352
        %v3581 = vadd.f32 %v2639, %v3357
        %v3582 = vadd.f32 %v2640, %v3360
        %v3583 = vadd.f32 %v2641, %v3365
        %v3584 = vadd.f32 %v2642, %v3368
        %v3585 = vadd.f32 %v2643, %v3373
        %v3586 = vadd.f32 %v2644, %v3376
        %v3587 = vadd.f32 %v2645, %v3381
        %v3588 = vadd.f32 %v2646, %v3384
        %v3589 = vadd.f32 %v2647, %v3389
        %v3590 = vadd.f32 %v2648, %v3392
        %v3591 = vadd.f32 %v2649, %v3397
        %v3592 = vadd.f32 %v2650, %v3400
        %v3593 = vadd.f32 %v2651, %v3405
        %v3594 = vadd.f32 %v2652, %v3408
        %v3595 = vadd.f32 %v2653, %v3413
        %v3596 = vadd.f32 %v2654, %v3416
        %v3597 = vadd.f32 %v2655, %v3421
        %v3598 = vadd.f32 %v2656, %v3424
        %v3599 = vadd.f32 %v2657, %v3429
        %v3600 = vadd.f32 %v2658, %v3432
        %v3601 = vadd.f32 %v2659, %v3437
        %v3602 = vadd.f32 %v2660, %v3440
        %v3603 = vadd.f32 %v2661, %v3445
        %v3604 = vadd.f32 %v2662, %v3448
        %v3605 = vadd.f32 %v2663, %v3453
        %v3606 = vadd.f32 %v2664, %v3456
        %v3607 = vadd.f32 %v2665, %v3461
        %v3608 = vadd.f32 %v2666, %v3464
        %v3609 = vadd.f32 %v2667, %v3469
        %v3610 = vadd.f32 %v2668, %v3472
        %v3611 = vadd.f32 %v2669, %v3477
        %v3612 = vadd.f32 %v2670, %v3480
        %v3613 = vadd.f32 %v2671, %v3485
        %v3614 = vadd.f32 %v2672, %v3488
        %v3615 = vadd.f32 %v2673, %v3493
        %v3616 = vadd.f32 %v2674, %v3496
        %v3617 = vadd.f32 %v2675, %v3501
        %v3618 = vadd.f32 %v2676, %v3504
        %v3619 = vadd.f32 %v2677, %v3509
        %v3620 = vadd.f32 %v2678, %v3512
        %v3621 = vadd.f32 %v2679, %v3517
        %v3622 = vadd.f32 %v2680, %v3520
        %v3623 = vadd.f32 %v2681, %v3525
        %v3624 = vadd.f32 %v2682, %v3528
        %v3625 = vadd.f32 %v2683, %v3533
        %v3626 = vadd.f32 %v2684, %v3536
        %v3627 = vadd.f32 %v2685, %v3541
        %v3628 = vadd.f32 %v2686, %v3544
        %v3629 = vadd.f32 %v2687, %v3549
        %v3630 = vadd.f32 %v2688, %v3552
        %v3631 = vadd.f32 %v2689, %v3557
        %v3632 = vadd.f32 %v2690, %v3560
        %v3633 = vadd.f32 %v2691, %v3565
        %v3634 = vadd.f32 %v2692, %v3568
        %v3635 = vld [vmem:[%s250 + $0x10] sm:$0xe]
        %s3636 = scalar_lea.vmem %s1, 10
        %v3637 = vld [vmem:[%s3636] sm:$0x3]
        %v3639 = vunpack.c.l.b16 %v3635
        %v3640 = vpack.c.b16 %v2826, %v3639
        %v3641 = vrot.slane %v3640, 1
        %v3642 = vrot.slane %v2891, 1
        %v3643 = vsel %vm1497, %v3641, %v3642
        %v3644 = vrot.slane %v2892, 1
        %v3645 = vsel %vm1497, %v3642, %v3644
        %v3646 = vrot.slane %v2893, 1
        %v3647 = vsel %vm1497, %v3644, %v3646
        %v3648 = vrot.slane %v2894, 1
        %v3649 = vsel %vm1497, %v3646, %v3648
        %v3650 = vrot.slane %v2895, 1
        %v3651 = vsel %vm1497, %v3648, %v3650
        %v3652 = vrot.slane %v2896, 1
        %v3653 = vsel %vm1497, %v3650, %v3652
        %v3654 = vrot.slane %v2897, 1
        %v3655 = vsel %vm1497, %v3652, %v3654
        %v3656 = vrot.slane %v2898, 1
        %v3657 = vsel %vm1497, %v3654, %v3656
        %v3658 = vrot.slane %v2899, 1
        %v3659 = vsel %vm1497, %v3656, %v3658
        %v3660 = vrot.slane %v2900, 1
        %v3661 = vsel %vm1497, %v3658, %v3660
        %v3662 = vrot.slane %v2901, 1
        %v3663 = vsel %vm1497, %v3660, %v3662
        %v3664 = vrot.slane %v2902, 1
        %v3665 = vsel %vm1497, %v3662, %v3664
        %v3666 = vrot.slane %v2903, 1
        %v3667 = vsel %vm1497, %v3664, %v3666
        %v3668 = vrot.slane %v2904, 1
        %v3669 = vsel %vm1497, %v3666, %v3668
        %v3670 = vrot.slane %v2905, 1
        %v3671 = vsel %vm1497, %v3668, %v3670
        %v3672 = vrot.slane %v2906, 1
        %v3673 = vsel %vm1497, %v3670, %v3672
        %v3674 = vrot.slane %v2907, 1
        %v3675 = vsel %vm1497, %v3672, %v3674
        %v3676 = vrot.slane %v2908, 1
        %v3677 = vsel %vm1497, %v3674, %v3676
        %v3678 = vrot.slane %v2909, 1
        %v3679 = vsel %vm1497, %v3676, %v3678
        %v3680 = vrot.slane %v2910, 1
        %v3681 = vsel %vm1497, %v3678, %v3680
        %v3682 = vrot.slane %v2911, 1
        %v3683 = vsel %vm1497, %v3680, %v3682
        %v3684 = vrot.slane %v2912, 1
        %v3685 = vsel %vm1497, %v3682, %v3684
        %v3686 = vrot.slane %v2913, 1
        %v3687 = vsel %vm1497, %v3684, %v3686
        %v3688 = vrot.slane %v2914, 1
        %v3689 = vsel %vm1497, %v3686, %v3688
        %v3690 = vrot.slane %v2915, 1
        %v3691 = vsel %vm1497, %v3688, %v3690
        %v3692 = vrot.slane %v2916, 1
        %v3693 = vsel %vm1497, %v3690, %v3692
        %v3694 = vrot.slane %v2917, 1
        %v3695 = vsel %vm1497, %v3692, %v3694
        %v3696 = vrot.slane %v2918, 1
        %v3697 = vsel %vm1497, %v3694, %v3696
        %v3698 = vrot.slane %v2919, 1
        %v3699 = vsel %vm1497, %v3696, %v3698
        %v3700 = vrot.slane %v2920, 1
        %v3701 = vsel %vm1497, %v3698, %v3700
        %v3702 = vrot.slane %v2921, 1
        %v3703 = vsel %vm1497, %v3700, %v3702
        %v3704 = vrot.slane %v2922, 1
        %v3705 = vsel %vm1497, %v3702, %v3704
        %v3707 = vsel %vm745, %v3643, 0
        %v3710 = vsel %vm745, %v3645, 0
        %v3713 = vsel %vm745, %v3647, 0
        %v3716 = vsel %vm745, %v3649, 0
        %v3719 = vsel %vm745, %v3651, 0
        %v3722 = vsel %vm745, %v3653, 0
        %v3725 = vsel %vm745, %v3655, 0
        %v3728 = vsel %vm745, %v3657, 0
        %v3731 = vsel %vm745, %v3659, 0
        %v3734 = vsel %vm745, %v3661, 0
        %v3737 = vsel %vm745, %v3663, 0
        %v3740 = vsel %vm745, %v3665, 0
        %v3743 = vsel %vm745, %v3667, 0
        %v3746 = vsel %vm745, %v3669, 0
        %v3749 = vsel %vm745, %v3671, 0
        %v3752 = vsel %vm745, %v3673, 0
        %v3755 = vsel %vm745, %v3675, 0
        %v3758 = vsel %vm745, %v3677, 0
        %v3761 = vsel %vm745, %v3679, 0
        %v3764 = vsel %vm745, %v3681, 0
        %v3767 = vsel %vm745, %v3683, 0
        %v3770 = vsel %vm745, %v3685, 0
        %v3773 = vsel %vm745, %v3687, 0
        %v3776 = vsel %vm745, %v3689, 0
        %v3779 = vsel %vm745, %v3691, 0
        %v3782 = vsel %vm745, %v3693, 0
        %v3785 = vsel %vm745, %v3695, 0
        %v3788 = vsel %vm745, %v3697, 0
        %v3791 = vsel %vm745, %v3699, 0
        %v3794 = vsel %vm745, %v3701, 0
        %v3797 = vsel %vm745, %v3703, 0
        %v3800 = vsel %vm745, %v3705, 0
        %v3803 = vsel %vm842, %v3637, 0
        %3805 = vmatprep.subr.bf16.mxu0 0
        %3806 = vmatpush1.bf16.msra.mxu0 0
        %3807 = vmatprep.subr.bf16.mxu0 0
        %3808 = vmatpush1.bf16.msra.mxu0 0
        %3809 = vmatprep.subr.bf16.mxu0 0
        %3810 = vmatpush1.bf16.msra.mxu0 0
        %3811 = vmatprep.subr.bf16.mxu0 0
        %3812 = vmatpush1.bf16.msra.mxu0 0
        %3813 = vmatprep.subr.bf16.mxu0 0
        %3814 = vmatpush1.bf16.msra.mxu0 0
        %3815 = vmatprep.subr.bf16.mxu0 0
        %3816 = vmatpush1.bf16.msra.mxu0 0
        %3817 = vmatprep.subr.bf16.mxu0 0
        %3818 = vmatpush1.bf16.msra.mxu0 0
        %3819 = vmatprep.subr.bf16.mxu0 0
        %3820 = vmatpush1.bf16.msra.mxu0 %v3803
        %3821 = vmatprep.subr.bf16.mxu0 0
        %3822 = vmatpush2.bf16.msra.mxu0 0
        %3823 = vmatprep.subr.bf16.mxu0 0
        %3824 = vmatpush2.bf16.msra.mxu0 0
        %3825 = vmatprep.subr.bf16.mxu0 0
        %3826 = vmatpush2.bf16.msra.mxu0 0
        %3827 = vmatprep.subr.bf16.mxu0 0
        %3828 = vmatpush2.bf16.msra.mxu0 0
        %3829 = vmatprep.subr.bf16.mxu0 0
        %3830 = vmatpush2.bf16.msra.mxu0 0
        %3831 = vmatprep.subr.bf16.mxu0 0
        %3832 = vmatpush2.bf16.msra.mxu0 0
        %3833 = vmatprep.subr.bf16.mxu0 0
        %3834 = vmatpush2.bf16.msra.mxu0 0
        %3835 = vmatprep.subr.bf16.mxu0 0
        %3836 = vmatpush2.bf16.msra.mxu0 0
        %3837 = vmatprep.mubr.bf16.mxu0 0
        %3838 = vmatmul.mubr.bf16.gmra.mxu0 %v3707
        %v3839 = vpop.f32.mrf.mxu0
        %v3840 = vadd.f32 0.0, %v3839
        %v3841 = vpop.f32.mrf.mxu0
        %v3842 = vpop.f32.mrf.mxu0
        %v3843 = vadd.f32 0.0, %v3842
        %v3844 = vpop.f32.mrf.mxu0
        %3845 = vmatprep.mubr.bf16.mxu0 0
        %3846 = vmatmul.mubr.bf16.gmra.mxu0 %v3710
        %v3847 = vpop.f32.mrf.mxu0
        %v3848 = vadd.f32 0.0, %v3847
        %v3849 = vpop.f32.mrf.mxu0
        %v3850 = vpop.f32.mrf.mxu0
        %v3851 = vadd.f32 0.0, %v3850
        %v3852 = vpop.f32.mrf.mxu0
        %3853 = vmatprep.mubr.bf16.mxu0 0
        %3854 = vmatmul.mubr.bf16.gmra.mxu0 %v3713
        %v3855 = vpop.f32.mrf.mxu0
        %v3856 = vadd.f32 0.0, %v3855
        %v3857 = vpop.f32.mrf.mxu0
        %v3858 = vpop.f32.mrf.mxu0
        %v3859 = vadd.f32 0.0, %v3858
        %v3860 = vpop.f32.mrf.mxu0
        %3861 = vmatprep.mubr.bf16.mxu0 0
        %3862 = vmatmul.mubr.bf16.gmra.mxu0 %v3716
        %v3863 = vpop.f32.mrf.mxu0
        %v3864 = vadd.f32 0.0, %v3863
        %v3865 = vpop.f32.mrf.mxu0
        %v3866 = vpop.f32.mrf.mxu0
        %v3867 = vadd.f32 0.0, %v3866
        %v3868 = vpop.f32.mrf.mxu0
        %3869 = vmatprep.mubr.bf16.mxu0 0
        %3870 = vmatmul.mubr.bf16.gmra.mxu0 %v3719
        %v3871 = vpop.f32.mrf.mxu0
        %v3872 = vadd.f32 0.0, %v3871
        %v3873 = vpop.f32.mrf.mxu0
        %v3874 = vpop.f32.mrf.mxu0
        %v3875 = vadd.f32 0.0, %v3874
        %v3876 = vpop.f32.mrf.mxu0
        %3877 = vmatprep.mubr.bf16.mxu0 0
        %3878 = vmatmul.mubr.bf16.gmra.mxu0 %v3722
        %v3879 = vpop.f32.mrf.mxu0
        %v3880 = vadd.f32 0.0, %v3879
        %v3881 = vpop.f32.mrf.mxu0
        %v3882 = vpop.f32.mrf.mxu0
        %v3883 = vadd.f32 0.0, %v3882
        %v3884 = vpop.f32.mrf.mxu0
        %3885 = vmatprep.mubr.bf16.mxu0 0
        %3886 = vmatmul.mubr.bf16.gmra.mxu0 %v3725
        %v3887 = vpop.f32.mrf.mxu0
        %v3888 = vadd.f32 0.0, %v3887
        %v3889 = vpop.f32.mrf.mxu0
        %v3890 = vpop.f32.mrf.mxu0
        %v3891 = vadd.f32 0.0, %v3890
        %v3892 = vpop.f32.mrf.mxu0
        %3893 = vmatprep.mubr.bf16.mxu0 0
        %3894 = vmatmul.mubr.bf16.gmra.mxu0 %v3728
        %v3895 = vpop.f32.mrf.mxu0
        %v3896 = vadd.f32 0.0, %v3895
        %v3897 = vpop.f32.mrf.mxu0
        %v3898 = vpop.f32.mrf.mxu0
        %v3899 = vadd.f32 0.0, %v3898
        %v3900 = vpop.f32.mrf.mxu0
        %3901 = vmatprep.mubr.bf16.mxu0 0
        %3902 = vmatmul.mubr.bf16.gmra.mxu0 %v3731
        %v3903 = vpop.f32.mrf.mxu0
        %v3904 = vadd.f32 0.0, %v3903
        %v3905 = vpop.f32.mrf.mxu0
        %v3906 = vpop.f32.mrf.mxu0
        %v3907 = vadd.f32 0.0, %v3906
        %v3908 = vpop.f32.mrf.mxu0
        %3909 = vmatprep.mubr.bf16.mxu0 0
        %3910 = vmatmul.mubr.bf16.gmra.mxu0 %v3734
        %v3911 = vpop.f32.mrf.mxu0
        %v3912 = vadd.f32 0.0, %v3911
        %v3913 = vpop.f32.mrf.mxu0
        %v3914 = vpop.f32.mrf.mxu0
        %v3915 = vadd.f32 0.0, %v3914
        %v3916 = vpop.f32.mrf.mxu0
        %3917 = vmatprep.mubr.bf16.mxu0 0
        %3918 = vmatmul.mubr.bf16.gmra.mxu0 %v3737
        %v3919 = vpop.f32.mrf.mxu0
        %v3920 = vadd.f32 0.0, %v3919
        %v3921 = vpop.f32.mrf.mxu0
        %v3922 = vpop.f32.mrf.mxu0
        %v3923 = vadd.f32 0.0, %v3922
        %v3924 = vpop.f32.mrf.mxu0
        %3925 = vmatprep.mubr.bf16.mxu0 0
        %3926 = vmatmul.mubr.bf16.gmra.mxu0 %v3740
        %v3927 = vpop.f32.mrf.mxu0
        %v3928 = vadd.f32 0.0, %v3927
        %v3929 = vpop.f32.mrf.mxu0
        %v3930 = vpop.f32.mrf.mxu0
        %v3931 = vadd.f32 0.0, %v3930
        %v3932 = vpop.f32.mrf.mxu0
        %3933 = vmatprep.mubr.bf16.mxu0 0
        %3934 = vmatmul.mubr.bf16.gmra.mxu0 %v3743
        %v3935 = vpop.f32.mrf.mxu0
        %v3936 = vadd.f32 0.0, %v3935
        %v3937 = vpop.f32.mrf.mxu0
        %v3938 = vpop.f32.mrf.mxu0
        %v3939 = vadd.f32 0.0, %v3938
        %v3940 = vpop.f32.mrf.mxu0
        %3941 = vmatprep.mubr.bf16.mxu0 0
        %3942 = vmatmul.mubr.bf16.gmra.mxu0 %v3746
        %v3943 = vpop.f32.mrf.mxu0
        %v3944 = vadd.f32 0.0, %v3943
        %v3945 = vpop.f32.mrf.mxu0
        %v3946 = vpop.f32.mrf.mxu0
        %v3947 = vadd.f32 0.0, %v3946
        %v3948 = vpop.f32.mrf.mxu0
        %3949 = vmatprep.mubr.bf16.mxu0 0
        %3950 = vmatmul.mubr.bf16.gmra.mxu0 %v3749
        %v3951 = vpop.f32.mrf.mxu0
        %v3952 = vadd.f32 0.0, %v3951
        %v3953 = vpop.f32.mrf.mxu0
        %v3954 = vpop.f32.mrf.mxu0
        %v3955 = vadd.f32 0.0, %v3954
        %v3956 = vpop.f32.mrf.mxu0
        %3957 = vmatprep.mubr.bf16.mxu0 0
        %3958 = vmatmul.mubr.bf16.gmra.mxu0 %v3752
        %v3959 = vpop.f32.mrf.mxu0
        %v3960 = vadd.f32 0.0, %v3959
        %v3961 = vpop.f32.mrf.mxu0
        %v3962 = vpop.f32.mrf.mxu0
        %v3963 = vadd.f32 0.0, %v3962
        %v3964 = vpop.f32.mrf.mxu0
        %3965 = vmatprep.mubr.bf16.mxu0 0
        %3966 = vmatmul.mubr.bf16.gmra.mxu0 %v3755
        %v3967 = vpop.f32.mrf.mxu0
        %v3968 = vadd.f32 0.0, %v3967
        %v3969 = vpop.f32.mrf.mxu0
        %v3970 = vpop.f32.mrf.mxu0
        %v3971 = vadd.f32 0.0, %v3970
        %v3972 = vpop.f32.mrf.mxu0
        %3973 = vmatprep.mubr.bf16.mxu0 0
        %3974 = vmatmul.mubr.bf16.gmra.mxu0 %v3758
        %v3975 = vpop.f32.mrf.mxu0
        %v3976 = vadd.f32 0.0, %v3975
        %v3977 = vpop.f32.mrf.mxu0
        %v3978 = vpop.f32.mrf.mxu0
        %v3979 = vadd.f32 0.0, %v3978
        %v3980 = vpop.f32.mrf.mxu0
        %3981 = vmatprep.mubr.bf16.mxu0 0
        %3982 = vmatmul.mubr.bf16.gmra.mxu0 %v3761
        %v3983 = vpop.f32.mrf.mxu0
        %v3984 = vadd.f32 0.0, %v3983
        %v3985 = vpop.f32.mrf.mxu0
        %v3986 = vpop.f32.mrf.mxu0
        %v3987 = vadd.f32 0.0, %v3986
        %v3988 = vpop.f32.mrf.mxu0
        %3989 = vmatprep.mubr.bf16.mxu0 0
        %3990 = vmatmul.mubr.bf16.gmra.mxu0 %v3764
        %v3991 = vpop.f32.mrf.mxu0
        %v3992 = vadd.f32 0.0, %v3991
        %v3993 = vpop.f32.mrf.mxu0
        %v3994 = vpop.f32.mrf.mxu0
        %v3995 = vadd.f32 0.0, %v3994
        %v3996 = vpop.f32.mrf.mxu0
        %3997 = vmatprep.mubr.bf16.mxu0 0
        %3998 = vmatmul.mubr.bf16.gmra.mxu0 %v3767
        %v3999 = vpop.f32.mrf.mxu0
        %v4000 = vadd.f32 0.0, %v3999
        %v4001 = vpop.f32.mrf.mxu0
        %v4002 = vpop.f32.mrf.mxu0
        %v4003 = vadd.f32 0.0, %v4002
        %v4004 = vpop.f32.mrf.mxu0
        %4005 = vmatprep.mubr.bf16.mxu0 0
        %4006 = vmatmul.mubr.bf16.gmra.mxu0 %v3770
        %v4007 = vpop.f32.mrf.mxu0
        %v4008 = vadd.f32 0.0, %v4007
        %v4009 = vpop.f32.mrf.mxu0
        %v4010 = vpop.f32.mrf.mxu0
        %v4011 = vadd.f32 0.0, %v4010
        %v4012 = vpop.f32.mrf.mxu0
        %4013 = vmatprep.mubr.bf16.mxu0 0
        %4014 = vmatmul.mubr.bf16.gmra.mxu0 %v3773
        %v4015 = vpop.f32.mrf.mxu0
        %v4016 = vadd.f32 0.0, %v4015
        %v4017 = vpop.f32.mrf.mxu0
        %v4018 = vpop.f32.mrf.mxu0
        %v4019 = vadd.f32 0.0, %v4018
        %v4020 = vpop.f32.mrf.mxu0
        %4021 = vmatprep.mubr.bf16.mxu0 0
        %4022 = vmatmul.mubr.bf16.gmra.mxu0 %v3776
        %v4023 = vpop.f32.mrf.mxu0
        %v4024 = vadd.f32 0.0, %v4023
        %v4025 = vpop.f32.mrf.mxu0
        %v4026 = vpop.f32.mrf.mxu0
        %v4027 = vadd.f32 0.0, %v4026
        %v4028 = vpop.f32.mrf.mxu0
        %4029 = vmatprep.mubr.bf16.mxu0 0
        %4030 = vmatmul.mubr.bf16.gmra.mxu0 %v3779
        %v4031 = vpop.f32.mrf.mxu0
        %v4032 = vadd.f32 0.0, %v4031
        %v4033 = vpop.f32.mrf.mxu0
        %v4034 = vpop.f32.mrf.mxu0
        %v4035 = vadd.f32 0.0, %v4034
        %v4036 = vpop.f32.mrf.mxu0
        %4037 = vmatprep.mubr.bf16.mxu0 0
        %4038 = vmatmul.mubr.bf16.gmra.mxu0 %v3782
        %v4039 = vpop.f32.mrf.mxu0
        %v4040 = vadd.f32 0.0, %v4039
        %v4041 = vpop.f32.mrf.mxu0
        %v4042 = vpop.f32.mrf.mxu0
        %v4043 = vadd.f32 0.0, %v4042
        %v4044 = vpop.f32.mrf.mxu0
        %4045 = vmatprep.mubr.bf16.mxu0 0
        %4046 = vmatmul.mubr.bf16.gmra.mxu0 %v3785
        %v4047 = vpop.f32.mrf.mxu0
        %v4048 = vadd.f32 0.0, %v4047
        %v4049 = vpop.f32.mrf.mxu0
        %v4050 = vpop.f32.mrf.mxu0
        %v4051 = vadd.f32 0.0, %v4050
        %v4052 = vpop.f32.mrf.mxu0
        %4053 = vmatprep.mubr.bf16.mxu0 0
        %4054 = vmatmul.mubr.bf16.gmra.mxu0 %v3788
        %v4055 = vpop.f32.mrf.mxu0
        %v4056 = vadd.f32 0.0, %v4055
        %v4057 = vpop.f32.mrf.mxu0
        %v4058 = vpop.f32.mrf.mxu0
        %v4059 = vadd.f32 0.0, %v4058
        %v4060 = vpop.f32.mrf.mxu0
        %4061 = vmatprep.mubr.bf16.mxu0 0
        %4062 = vmatmul.mubr.bf16.gmra.mxu0 %v3791
        %v4063 = vpop.f32.mrf.mxu0
        %v4064 = vadd.f32 0.0, %v4063
        %v4065 = vpop.f32.mrf.mxu0
        %v4066 = vpop.f32.mrf.mxu0
        %v4067 = vadd.f32 0.0, %v4066
        %v4068 = vpop.f32.mrf.mxu0
        %4069 = vmatprep.mubr.bf16.mxu0 0
        %4070 = vmatmul.mubr.bf16.gmra.mxu0 %v3794
        %v4071 = vpop.f32.mrf.mxu0
        %v4072 = vadd.f32 0.0, %v4071
        %v4073 = vpop.f32.mrf.mxu0
        %v4074 = vpop.f32.mrf.mxu0
        %v4075 = vadd.f32 0.0, %v4074
        %v4076 = vpop.f32.mrf.mxu0
        %4077 = vmatprep.mubr.bf16.mxu0 0
        %4078 = vmatmul.mubr.bf16.gmra.mxu0 %v3797
        %v4079 = vpop.f32.mrf.mxu0
        %v4080 = vadd.f32 0.0, %v4079
        %v4081 = vpop.f32.mrf.mxu0
        %v4082 = vpop.f32.mrf.mxu0
        %v4083 = vadd.f32 0.0, %v4082
        %v4084 = vpop.f32.mrf.mxu0
        %4085 = vmatprep.mubr.bf16.mxu0 0
        %4086 = vmatmul.mubr.bf16.gmra.mxu0 %v3800
        %v4087 = vpop.f32.mrf.mxu0
        %v4088 = vadd.f32 0.0, %v4087
        %v4089 = vpop.f32.mrf.mxu0
        %v4090 = vpop.f32.mrf.mxu0
        %v4091 = vadd.f32 0.0, %v4090
        %v4092 = vpop.f32.mrf.mxu0
        %4093 = vdwg.mxu0
        %v4094 = vadd.f32 %v3571, %v3840
        %v4095 = vadd.f32 %v3572, %v3843
        %v4096 = vadd.f32 %v3573, %v3848
        %v4097 = vadd.f32 %v3574, %v3851
        %v4098 = vadd.f32 %v3575, %v3856
        %v4099 = vadd.f32 %v3576, %v3859
        %v4100 = vadd.f32 %v3577, %v3864
        %v4101 = vadd.f32 %v3578, %v3867
        %v4102 = vadd.f32 %v3579, %v3872
        %v4103 = vadd.f32 %v3580, %v3875
        %v4104 = vadd.f32 %v3581, %v3880
        %v4105 = vadd.f32 %v3582, %v3883
        %v4106 = vadd.f32 %v3583, %v3888
        %v4107 = vadd.f32 %v3584, %v3891
        %v4108 = vadd.f32 %v3585, %v3896
        %v4109 = vadd.f32 %v3586, %v3899
        %v4110 = vadd.f32 %v3587, %v3904
        %v4111 = vadd.f32 %v3588, %v3907
        %v4112 = vadd.f32 %v3589, %v3912
        %v4113 = vadd.f32 %v3590, %v3915
        %v4114 = vadd.f32 %v3591, %v3920
        %v4115 = vadd.f32 %v3592, %v3923
        %v4116 = vadd.f32 %v3593, %v3928
        %v4117 = vadd.f32 %v3594, %v3931
        %v4118 = vadd.f32 %v3595, %v3936
        %v4119 = vadd.f32 %v3596, %v3939
        %v4120 = vadd.f32 %v3597, %v3944
        %v4121 = vadd.f32 %v3598, %v3947
        %v4122 = vadd.f32 %v3599, %v3952
        %v4123 = vadd.f32 %v3600, %v3955
        %v4124 = vadd.f32 %v3601, %v3960
        %v4125 = vadd.f32 %v3602, %v3963
        %v4126 = vadd.f32 %v3603, %v3968
        %v4127 = vadd.f32 %v3604, %v3971
        %v4128 = vadd.f32 %v3605, %v3976
        %v4129 = vadd.f32 %v3606, %v3979
        %v4130 = vadd.f32 %v3607, %v3984
        %v4131 = vadd.f32 %v3608, %v3987
        %v4132 = vadd.f32 %v3609, %v3992
        %v4133 = vadd.f32 %v3610, %v3995
        %v4134 = vadd.f32 %v3611, %v4000
        %v4135 = vadd.f32 %v3612, %v4003
        %v4136 = vadd.f32 %v3613, %v4008
        %v4137 = vadd.f32 %v3614, %v4011
        %v4138 = vadd.f32 %v3615, %v4016
        %v4139 = vadd.f32 %v3616, %v4019
        %v4140 = vadd.f32 %v3617, %v4024
        %v4141 = vadd.f32 %v3618, %v4027
        %v4142 = vadd.f32 %v3619, %v4032
        %v4143 = vadd.f32 %v3620, %v4035
        %v4144 = vadd.f32 %v3621, %v4040
        %v4145 = vadd.f32 %v3622, %v4043
        %v4146 = vadd.f32 %v3623, %v4048
        %v4147 = vadd.f32 %v3624, %v4051
        %v4148 = vadd.f32 %v3625, %v4056
        %v4149 = vadd.f32 %v3626, %v4059
        %v4150 = vadd.f32 %v3627, %v4064
        %v4151 = vadd.f32 %v3628, %v4067
        %v4152 = vadd.f32 %v3629, %v4072
        %v4153 = vadd.f32 %v3630, %v4075
        %v4154 = vadd.f32 %v3631, %v4080
        %v4155 = vadd.f32 %v3632, %v4083
        %v4156 = vadd.f32 %v3633, %v4088
        %v4157 = vadd.f32 %v3634, %v4091
        %v4158 = vld [vmem:[%s250 + $0x20] sm:$0xf]
        %v4159 = vld [vmem:[%s250 + $0x24] sm:$0xf]
        %v4160 = vld [vmem:[%s250 + $0x28] sm:$0xf]
        %v4161 = vld [vmem:[%s250 + $0x2c] sm:$0xf]
        %v4162 = vld [vmem:[%s250 + $0x30] sm:$0xf]
        %v4163 = vld [vmem:[%s250 + $0x34] sm:$0xf]
        %v4164 = vld [vmem:[%s250 + $0x38] sm:$0xf]
        %v4165 = vld [vmem:[%s250 + $0x3c] sm:$0xf]
        %v4166 = vld [vmem:[%s250 + $0x40] sm:$0xf]
        %v4167 = vld [vmem:[%s250 + $0x44] sm:$0xf]
        %v4168 = vld [vmem:[%s250 + $0x48] sm:$0xf]
        %v4169 = vld [vmem:[%s250 + $0x4c] sm:$0xf]
        %v4170 = vld [vmem:[%s250 + $0x50] sm:$0xf]
        %v4171 = vld [vmem:[%s250 + $0x54] sm:$0xf]
        %v4172 = vld [vmem:[%s250 + $0x58] sm:$0xf]
        %v4173 = vld [vmem:[%s250 + $0x5c] sm:$0xf]
        %v4174 = vld [vmem:[%s250 + $0x60] sm:$0xf]
        %v4175 = vld [vmem:[%s250 + $0x64] sm:$0xf]
        %v4176 = vld [vmem:[%s250 + $0x68] sm:$0xf]
        %v4177 = vld [vmem:[%s250 + $0x6c] sm:$0xf]
        %v4178 = vld [vmem:[%s250 + $0x70] sm:$0xf]
        %v4179 = vld [vmem:[%s250 + $0x74] sm:$0xf]
        %v4180 = vld [vmem:[%s250 + $0x78] sm:$0xf]
        %v4181 = vld [vmem:[%s250 + $0x7c] sm:$0xf]
        %v4182 = vld [vmem:[%s250 + $0x80] sm:$0xf]
        %v4183 = vld [vmem:[%s250 + $0x84] sm:$0xf]
        %v4184 = vld [vmem:[%s250 + $0x88] sm:$0xf]
        %v4185 = vld [vmem:[%s250 + $0x8c] sm:$0xf]
        %v4186 = vld [vmem:[%s250 + $0x90] sm:$0xf]
        %v4187 = vld [vmem:[%s250 + $0x94] sm:$0xf]
        %v4188 = vld [vmem:[%s250 + $0x98] sm:$0xf]
        %v4189 = vld [vmem:[%s250 + $0x9c] sm:$0xf]
        %v4190 = vld [vmem:[%s250 + $0xa0] sm:$0xf]
        %v4191 = vld [vmem:[%s250 + $0xa4] sm:$0xf]
        %v4192 = vld [vmem:[%s250 + $0xa8] sm:$0xf]
        %v4193 = vld [vmem:[%s250 + $0xac] sm:$0xf]
        %v4194 = vld [vmem:[%s250 + $0xb0] sm:$0xf]
        %v4195 = vld [vmem:[%s250 + $0xb4] sm:$0xf]
        %v4196 = vld [vmem:[%s250 + $0xb8] sm:$0xf]
        %v4197 = vld [vmem:[%s250 + $0xbc] sm:$0xf]
        %v4198 = vld [vmem:[%s250 + $0xc0] sm:$0xf]
        %v4199 = vld [vmem:[%s250 + $0xc4] sm:$0xf]
        %v4200 = vld [vmem:[%s250 + $0xc8] sm:$0xf]
        %v4201 = vld [vmem:[%s250 + $0xcc] sm:$0xf]
        %v4202 = vld [vmem:[%s250 + $0xd0] sm:$0xf]
        %v4203 = vld [vmem:[%s250 + $0xd4] sm:$0xf]
        %v4204 = vld [vmem:[%s250 + $0xd8] sm:$0xf]
        %v4205 = vld [vmem:[%s250 + $0xdc] sm:$0xf]
        %v4206 = vld [vmem:[%s250 + $0xe0] sm:$0xf]
        %v4207 = vld [vmem:[%s250 + $0xe4] sm:$0xf]
        %v4208 = vld [vmem:[%s250 + $0xe8] sm:$0xf]
        %v4209 = vld [vmem:[%s250 + $0xec] sm:$0xf]
        %v4210 = vld [vmem:[%s250 + $0xf0] sm:$0xf]
        %v4211 = vld [vmem:[%s250 + $0xf4] sm:$0xf]
        %v4212 = vld [vmem:[%s250 + $0xf8] sm:$0xf]
        %v4213 = vld [vmem:[%s250 + $0xfc] sm:$0xf]
        %v4214 = vld [vmem:[%s250 + $0x100] sm:$0xf]
        %v4215 = vld [vmem:[%s250 + $0x104] sm:$0xf]
        %v4216 = vld [vmem:[%s250 + $0x108] sm:$0xf]
        %v4217 = vld [vmem:[%s250 + $0x10c] sm:$0xf]
        %v4218 = vld [vmem:[%s250 + $0x110] sm:$0xf]
        %v4219 = vld [vmem:[%s250 + $0x114] sm:$0xf]
        %v4220 = vld [vmem:[%s250 + $0x118] sm:$0xf]
        %v4221 = vld [vmem:[%s250 + $0x11c] sm:$0xf]
        %s4222 = scalar_lea.vmem %s1, 12
        %v4223 = vld [vmem:[%s4222] sm:$0x3]
        %v4288 = vunpack.c.l.b16 %v4158
        %v4289 = vunpack.c.l.b16 %v4159
        %v4290 = vunpack.c.l.b16 %v4160
        %v4291 = vunpack.c.l.b16 %v4161
        %v4292 = vunpack.c.l.b16 %v4162
        %v4293 = vunpack.c.l.b16 %v4163
        %v4294 = vunpack.c.l.b16 %v4164
        %v4295 = vunpack.c.l.b16 %v4165
        %v4296 = vunpack.c.l.b16 %v4166
        %v4297 = vunpack.c.l.b16 %v4167
        %v4298 = vunpack.c.l.b16 %v4168
        %v4299 = vunpack.c.l.b16 %v4169
        %v4300 = vunpack.c.l.b16 %v4170
        %v4301 = vunpack.c.l.b16 %v4171
        %v4302 = vunpack.c.l.b16 %v4172
        %v4303 = vunpack.c.l.b16 %v4173
        %v4304 = vunpack.c.l.b16 %v4174
        %v4305 = vunpack.c.l.b16 %v4175
        %v4306 = vunpack.c.l.b16 %v4176
        %v4307 = vunpack.c.l.b16 %v4177
        %v4308 = vunpack.c.l.b16 %v4178
        %v4309 = vunpack.c.l.b16 %v4179
        %v4310 = vunpack.c.l.b16 %v4180
        %v4311 = vunpack.c.l.b16 %v4181
        %v4312 = vunpack.c.l.b16 %v4182
        %v4313 = vunpack.c.l.b16 %v4183
        %v4314 = vunpack.c.l.b16 %v4184
        %v4315 = vunpack.c.l.b16 %v4185
        %v4316 = vunpack.c.l.b16 %v4186
        %v4317 = vunpack.c.l.b16 %v4187
        %v4318 = vunpack.c.l.b16 %v4188
        %v4319 = vunpack.c.l.b16 %v4189
        %v4320 = vunpack.c.l.b16 %v4190
        %v4321 = vunpack.c.l.b16 %v4191
        %v4322 = vunpack.c.l.b16 %v4192
        %v4323 = vunpack.c.l.b16 %v4193
        %v4324 = vunpack.c.l.b16 %v4194
        %v4325 = vunpack.c.l.b16 %v4195
        %v4326 = vunpack.c.l.b16 %v4196
        %v4327 = vunpack.c.l.b16 %v4197
        %v4328 = vunpack.c.l.b16 %v4198
        %v4329 = vunpack.c.l.b16 %v4199
        %v4330 = vunpack.c.l.b16 %v4200
        %v4331 = vunpack.c.l.b16 %v4201
        %v4332 = vunpack.c.l.b16 %v4202
        %v4333 = vunpack.c.l.b16 %v4203
        %v4334 = vunpack.c.l.b16 %v4204
        %v4335 = vunpack.c.l.b16 %v4205
        %v4336 = vunpack.c.l.b16 %v4206
        %v4337 = vunpack.c.l.b16 %v4207
        %v4338 = vunpack.c.l.b16 %v4208
        %v4339 = vunpack.c.l.b16 %v4209
        %v4340 = vunpack.c.l.b16 %v4210
        %v4341 = vunpack.c.l.b16 %v4211
        %v4342 = vunpack.c.l.b16 %v4212
        %v4343 = vunpack.c.l.b16 %v4213
        %v4344 = vunpack.c.l.b16 %v4214
        %v4345 = vunpack.c.l.b16 %v4215
        %v4346 = vunpack.c.l.b16 %v4216
        %v4347 = vunpack.c.l.b16 %v4217
        %v4348 = vunpack.c.l.b16 %v4218
        %v4349 = vunpack.c.l.b16 %v4219
        %v4350 = vunpack.c.l.b16 %v4220
        %v4351 = vunpack.c.l.b16 %v4221
        %v4352 = vpack.c.b16 %v4289, %v4288
        %v4353 = vpack.c.b16 %v4291, %v4290
        %v4354 = vpack.c.b16 %v4293, %v4292
        %v4355 = vpack.c.b16 %v4295, %v4294
        %v4356 = vpack.c.b16 %v4297, %v4296
        %v4357 = vpack.c.b16 %v4299, %v4298
        %v4358 = vpack.c.b16 %v4301, %v4300
        %v4359 = vpack.c.b16 %v4303, %v4302
        %v4360 = vpack.c.b16 %v4305, %v4304
        %v4361 = vpack.c.b16 %v4307, %v4306
        %v4362 = vpack.c.b16 %v4309, %v4308
        %v4363 = vpack.c.b16 %v4311, %v4310
        %v4364 = vpack.c.b16 %v4313, %v4312
        %v4365 = vpack.c.b16 %v4315, %v4314
        %v4366 = vpack.c.b16 %v4317, %v4316
        %v4367 = vpack.c.b16 %v4319, %v4318
        %v4368 = vpack.c.b16 %v4321, %v4320
        %v4369 = vpack.c.b16 %v4323, %v4322
        %v4370 = vpack.c.b16 %v4325, %v4324
        %v4371 = vpack.c.b16 %v4327, %v4326
        %v4372 = vpack.c.b16 %v4329, %v4328
        %v4373 = vpack.c.b16 %v4331, %v4330
        %v4374 = vpack.c.b16 %v4333, %v4332
        %v4375 = vpack.c.b16 %v4335, %v4334
        %v4376 = vpack.c.b16 %v4337, %v4336
        %v4377 = vpack.c.b16 %v4339, %v4338
        %v4378 = vpack.c.b16 %v4341, %v4340
        %v4379 = vpack.c.b16 %v4343, %v4342
        %v4380 = vpack.c.b16 %v4345, %v4344
        %v4381 = vpack.c.b16 %v4347, %v4346
        %v4382 = vpack.c.b16 %v4349, %v4348
        %v4383 = vpack.c.b16 %v4351, %v4350
        %v4385 = vsel %vm745, %v4352, 0
        %v4388 = vsel %vm745, %v4353, 0
        %v4391 = vsel %vm745, %v4354, 0
        %v4394 = vsel %vm745, %v4355, 0
        %v4397 = vsel %vm745, %v4356, 0
        %v4400 = vsel %vm745, %v4357, 0
        %v4403 = vsel %vm745, %v4358, 0
        %v4406 = vsel %vm745, %v4359, 0
        %v4409 = vsel %vm745, %v4360, 0
        %v4412 = vsel %vm745, %v4361, 0
        %v4415 = vsel %vm745, %v4362, 0
        %v4418 = vsel %vm745, %v4363, 0
        %v4421 = vsel %vm745, %v4364, 0
        %v4424 = vsel %vm745, %v4365, 0
        %v4427 = vsel %vm745, %v4366, 0
        %v4430 = vsel %vm745, %v4367, 0
        %v4433 = vsel %vm745, %v4368, 0
        %v4436 = vsel %vm745, %v4369, 0
        %v4439 = vsel %vm745, %v4370, 0
        %v4442 = vsel %vm745, %v4371, 0
        %v4445 = vsel %vm745, %v4372, 0
        %v4448 = vsel %vm745, %v4373, 0
        %v4451 = vsel %vm745, %v4374, 0
        %v4454 = vsel %vm745, %v4375, 0
        %v4457 = vsel %vm745, %v4376, 0
        %v4460 = vsel %vm745, %v4377, 0
        %v4463 = vsel %vm745, %v4378, 0
        %v4466 = vsel %vm745, %v4379, 0
        %v4469 = vsel %vm745, %v4380, 0
        %v4472 = vsel %vm745, %v4381, 0
        %v4475 = vsel %vm745, %v4382, 0
        %v4478 = vsel %vm745, %v4383, 0
        %v4481 = vsel %vm842, %v4223, 0
        %4483 = vmatprep.subr.bf16.mxu0 0
        %4484 = vmatpush1.bf16.msra.mxu0 0
        %4485 = vmatprep.subr.bf16.mxu0 0
        %4486 = vmatpush1.bf16.msra.mxu0 0
        %4487 = vmatprep.subr.bf16.mxu0 0
        %4488 = vmatpush1.bf16.msra.mxu0 0
        %4489 = vmatprep.subr.bf16.mxu0 0
        %4490 = vmatpush1.bf16.msra.mxu0 0
        %4491 = vmatprep.subr.bf16.mxu0 0
        %4492 = vmatpush1.bf16.msra.mxu0 0
        %4493 = vmatprep.subr.bf16.mxu0 0
        %4494 = vmatpush1.bf16.msra.mxu0 0
        %4495 = vmatprep.subr.bf16.mxu0 0
        %4496 = vmatpush1.bf16.msra.mxu0 0
        %4497 = vmatprep.subr.bf16.mxu0 0
        %4498 = vmatpush1.bf16.msra.mxu0 %v4481
        %4499 = vmatprep.subr.bf16.mxu0 0
        %4500 = vmatpush2.bf16.msra.mxu0 0
        %4501 = vmatprep.subr.bf16.mxu0 0
        %4502 = vmatpush2.bf16.msra.mxu0 0
        %4503 = vmatprep.subr.bf16.mxu0 0
        %4504 = vmatpush2.bf16.msra.mxu0 0
        %4505 = vmatprep.subr.bf16.mxu0 0
        %4506 = vmatpush2.bf16.msra.mxu0 0
        %4507 = vmatprep.subr.bf16.mxu0 0
        %4508 = vmatpush2.bf16.msra.mxu0 0
        %4509 = vmatprep.subr.bf16.mxu0 0
        %4510 = vmatpush2.bf16.msra.mxu0 0
        %4511 = vmatprep.subr.bf16.mxu0 0
        %4512 = vmatpush2.bf16.msra.mxu0 0
        %4513 = vmatprep.subr.bf16.mxu0 0
        %4514 = vmatpush2.bf16.msra.mxu0 0
        %4515 = vmatprep.mubr.bf16.mxu0 0
        %4516 = vmatmul.mubr.bf16.gmra.mxu0 %v4385
        %v4517 = vpop.f32.mrf.mxu0
        %v4518 = vadd.f32 0.0, %v4517
        %v4519 = vpop.f32.mrf.mxu0
        %v4520 = vpop.f32.mrf.mxu0
        %v4521 = vadd.f32 0.0, %v4520
        %v4522 = vpop.f32.mrf.mxu0
        %4523 = vmatprep.mubr.bf16.mxu0 0
        %4524 = vmatmul.mubr.bf16.gmra.mxu0 %v4388
        %v4525 = vpop.f32.mrf.mxu0
        %v4526 = vadd.f32 0.0, %v4525
        %v4527 = vpop.f32.mrf.mxu0
        %v4528 = vpop.f32.mrf.mxu0
        %v4529 = vadd.f32 0.0, %v4528
        %v4530 = vpop.f32.mrf.mxu0
        %4531 = vmatprep.mubr.bf16.mxu0 0
        %4532 = vmatmul.mubr.bf16.gmra.mxu0 %v4391
        %v4533 = vpop.f32.mrf.mxu0
        %v4534 = vadd.f32 0.0, %v4533
        %v4535 = vpop.f32.mrf.mxu0
        %v4536 = vpop.f32.mrf.mxu0
        %v4537 = vadd.f32 0.0, %v4536
        %v4538 = vpop.f32.mrf.mxu0
        %4539 = vmatprep.mubr.bf16.mxu0 0
        %4540 = vmatmul.mubr.bf16.gmra.mxu0 %v4394
        %v4541 = vpop.f32.mrf.mxu0
        %v4542 = vadd.f32 0.0, %v4541
        %v4543 = vpop.f32.mrf.mxu0
        %v4544 = vpop.f32.mrf.mxu0
        %v4545 = vadd.f32 0.0, %v4544
        %v4546 = vpop.f32.mrf.mxu0
        %4547 = vmatprep.mubr.bf16.mxu0 0
        %4548 = vmatmul.mubr.bf16.gmra.mxu0 %v4397
        %v4549 = vpop.f32.mrf.mxu0
        %v4550 = vadd.f32 0.0, %v4549
        %v4551 = vpop.f32.mrf.mxu0
        %v4552 = vpop.f32.mrf.mxu0
        %v4553 = vadd.f32 0.0, %v4552
        %v4554 = vpop.f32.mrf.mxu0
        %4555 = vmatprep.mubr.bf16.mxu0 0
        %4556 = vmatmul.mubr.bf16.gmra.mxu0 %v4400
        %v4557 = vpop.f32.mrf.mxu0
        %v4558 = vadd.f32 0.0, %v4557
        %v4559 = vpop.f32.mrf.mxu0
        %v4560 = vpop.f32.mrf.mxu0
        %v4561 = vadd.f32 0.0, %v4560
        %v4562 = vpop.f32.mrf.mxu0
        %4563 = vmatprep.mubr.bf16.mxu0 0
        %4564 = vmatmul.mubr.bf16.gmra.mxu0 %v4403
        %v4565 = vpop.f32.mrf.mxu0
        %v4566 = vadd.f32 0.0, %v4565
        %v4567 = vpop.f32.mrf.mxu0
        %v4568 = vpop.f32.mrf.mxu0
        %v4569 = vadd.f32 0.0, %v4568
        %v4570 = vpop.f32.mrf.mxu0
        %4571 = vmatprep.mubr.bf16.mxu0 0
        %4572 = vmatmul.mubr.bf16.gmra.mxu0 %v4406
        %v4573 = vpop.f32.mrf.mxu0
        %v4574 = vadd.f32 0.0, %v4573
        %v4575 = vpop.f32.mrf.mxu0
        %v4576 = vpop.f32.mrf.mxu0
        %v4577 = vadd.f32 0.0, %v4576
        %v4578 = vpop.f32.mrf.mxu0
        %4579 = vmatprep.mubr.bf16.mxu0 0
        %4580 = vmatmul.mubr.bf16.gmra.mxu0 %v4409
        %v4581 = vpop.f32.mrf.mxu0
        %v4582 = vadd.f32 0.0, %v4581
        %v4583 = vpop.f32.mrf.mxu0
        %v4584 = vpop.f32.mrf.mxu0
        %v4585 = vadd.f32 0.0, %v4584
        %v4586 = vpop.f32.mrf.mxu0
        %4587 = vmatprep.mubr.bf16.mxu0 0
        %4588 = vmatmul.mubr.bf16.gmra.mxu0 %v4412
        %v4589 = vpop.f32.mrf.mxu0
        %v4590 = vadd.f32 0.0, %v4589
        %v4591 = vpop.f32.mrf.mxu0
        %v4592 = vpop.f32.mrf.mxu0
        %v4593 = vadd.f32 0.0, %v4592
        %v4594 = vpop.f32.mrf.mxu0
        %4595 = vmatprep.mubr.bf16.mxu0 0
        %4596 = vmatmul.mubr.bf16.gmra.mxu0 %v4415
        %v4597 = vpop.f32.mrf.mxu0
        %v4598 = vadd.f32 0.0, %v4597
        %v4599 = vpop.f32.mrf.mxu0
        %v4600 = vpop.f32.mrf.mxu0
        %v4601 = vadd.f32 0.0, %v4600
        %v4602 = vpop.f32.mrf.mxu0
        %4603 = vmatprep.mubr.bf16.mxu0 0
        %4604 = vmatmul.mubr.bf16.gmra.mxu0 %v4418
        %v4605 = vpop.f32.mrf.mxu0
        %v4606 = vadd.f32 0.0, %v4605
        %v4607 = vpop.f32.mrf.mxu0
        %v4608 = vpop.f32.mrf.mxu0
        %v4609 = vadd.f32 0.0, %v4608
        %v4610 = vpop.f32.mrf.mxu0
        %4611 = vmatprep.mubr.bf16.mxu0 0
        %4612 = vmatmul.mubr.bf16.gmra.mxu0 %v4421
        %v4613 = vpop.f32.mrf.mxu0
        %v4614 = vadd.f32 0.0, %v4613
        %v4615 = vpop.f32.mrf.mxu0
        %v4616 = vpop.f32.mrf.mxu0
        %v4617 = vadd.f32 0.0, %v4616
        %v4618 = vpop.f32.mrf.mxu0
        %4619 = vmatprep.mubr.bf16.mxu0 0
        %4620 = vmatmul.mubr.bf16.gmra.mxu0 %v4424
        %v4621 = vpop.f32.mrf.mxu0
        %v4622 = vadd.f32 0.0, %v4621
        %v4623 = vpop.f32.mrf.mxu0
        %v4624 = vpop.f32.mrf.mxu0
        %v4625 = vadd.f32 0.0, %v4624
        %v4626 = vpop.f32.mrf.mxu0
        %4627 = vmatprep.mubr.bf16.mxu0 0
        %4628 = vmatmul.mubr.bf16.gmra.mxu0 %v4427
        %v4629 = vpop.f32.mrf.mxu0
        %v4630 = vadd.f32 0.0, %v4629
        %v4631 = vpop.f32.mrf.mxu0
        %v4632 = vpop.f32.mrf.mxu0
        %v4633 = vadd.f32 0.0, %v4632
        %v4634 = vpop.f32.mrf.mxu0
        %4635 = vmatprep.mubr.bf16.mxu0 0
        %4636 = vmatmul.mubr.bf16.gmra.mxu0 %v4430
        %v4637 = vpop.f32.mrf.mxu0
        %v4638 = vadd.f32 0.0, %v4637
        %v4639 = vpop.f32.mrf.mxu0
        %v4640 = vpop.f32.mrf.mxu0
        %v4641 = vadd.f32 0.0, %v4640
        %v4642 = vpop.f32.mrf.mxu0
        %4643 = vmatprep.mubr.bf16.mxu0 0
        %4644 = vmatmul.mubr.bf16.gmra.mxu0 %v4433
        %v4645 = vpop.f32.mrf.mxu0
        %v4646 = vadd.f32 0.0, %v4645
        %v4647 = vpop.f32.mrf.mxu0
        %v4648 = vpop.f32.mrf.mxu0
        %v4649 = vadd.f32 0.0, %v4648
        %v4650 = vpop.f32.mrf.mxu0
        %4651 = vmatprep.mubr.bf16.mxu0 0
        %4652 = vmatmul.mubr.bf16.gmra.mxu0 %v4436
        %v4653 = vpop.f32.mrf.mxu0
        %v4654 = vadd.f32 0.0, %v4653
        %v4655 = vpop.f32.mrf.mxu0
        %v4656 = vpop.f32.mrf.mxu0
        %v4657 = vadd.f32 0.0, %v4656
        %v4658 = vpop.f32.mrf.mxu0
        %4659 = vmatprep.mubr.bf16.mxu0 0
        %4660 = vmatmul.mubr.bf16.gmra.mxu0 %v4439
        %v4661 = vpop.f32.mrf.mxu0
        %v4662 = vadd.f32 0.0, %v4661
        %v4663 = vpop.f32.mrf.mxu0
        %v4664 = vpop.f32.mrf.mxu0
        %v4665 = vadd.f32 0.0, %v4664
        %v4666 = vpop.f32.mrf.mxu0
        %4667 = vmatprep.mubr.bf16.mxu0 0
        %4668 = vmatmul.mubr.bf16.gmra.mxu0 %v4442
        %v4669 = vpop.f32.mrf.mxu0
        %v4670 = vadd.f32 0.0, %v4669
        %v4671 = vpop.f32.mrf.mxu0
        %v4672 = vpop.f32.mrf.mxu0
        %v4673 = vadd.f32 0.0, %v4672
        %v4674 = vpop.f32.mrf.mxu0
        %4675 = vmatprep.mubr.bf16.mxu0 0
        %4676 = vmatmul.mubr.bf16.gmra.mxu0 %v4445
        %v4677 = vpop.f32.mrf.mxu0
        %v4678 = vadd.f32 0.0, %v4677
        %v4679 = vpop.f32.mrf.mxu0
        %v4680 = vpop.f32.mrf.mxu0
        %v4681 = vadd.f32 0.0, %v4680
        %v4682 = vpop.f32.mrf.mxu0
        %4683 = vmatprep.mubr.bf16.mxu0 0
        %4684 = vmatmul.mubr.bf16.gmra.mxu0 %v4448
        %v4685 = vpop.f32.mrf.mxu0
        %v4686 = vadd.f32 0.0, %v4685
        %v4687 = vpop.f32.mrf.mxu0
        %v4688 = vpop.f32.mrf.mxu0
        %v4689 = vadd.f32 0.0, %v4688
        %v4690 = vpop.f32.mrf.mxu0
        %4691 = vmatprep.mubr.bf16.mxu0 0
        %4692 = vmatmul.mubr.bf16.gmra.mxu0 %v4451
        %v4693 = vpop.f32.mrf.mxu0
        %v4694 = vadd.f32 0.0, %v4693
        %v4695 = vpop.f32.mrf.mxu0
        %v4696 = vpop.f32.mrf.mxu0
        %v4697 = vadd.f32 0.0, %v4696
        %v4698 = vpop.f32.mrf.mxu0
        %4699 = vmatprep.mubr.bf16.mxu0 0
        %4700 = vmatmul.mubr.bf16.gmra.mxu0 %v4454
        %v4701 = vpop.f32.mrf.mxu0
        %v4702 = vadd.f32 0.0, %v4701
        %v4703 = vpop.f32.mrf.mxu0
        %v4704 = vpop.f32.mrf.mxu0
        %v4705 = vadd.f32 0.0, %v4704
        %v4706 = vpop.f32.mrf.mxu0
        %4707 = vmatprep.mubr.bf16.mxu0 0
        %4708 = vmatmul.mubr.bf16.gmra.mxu0 %v4457
        %v4709 = vpop.f32.mrf.mxu0
        %v4710 = vadd.f32 0.0, %v4709
        %v4711 = vpop.f32.mrf.mxu0
        %v4712 = vpop.f32.mrf.mxu0
        %v4713 = vadd.f32 0.0, %v4712
        %v4714 = vpop.f32.mrf.mxu0
        %4715 = vmatprep.mubr.bf16.mxu0 0
        %4716 = vmatmul.mubr.bf16.gmra.mxu0 %v4460
        %v4717 = vpop.f32.mrf.mxu0
        %v4718 = vadd.f32 0.0, %v4717
        %v4719 = vpop.f32.mrf.mxu0
        %v4720 = vpop.f32.mrf.mxu0
        %v4721 = vadd.f32 0.0, %v4720
        %v4722 = vpop.f32.mrf.mxu0
        %4723 = vmatprep.mubr.bf16.mxu0 0
        %4724 = vmatmul.mubr.bf16.gmra.mxu0 %v4463
        %v4725 = vpop.f32.mrf.mxu0
        %v4726 = vadd.f32 0.0, %v4725
        %v4727 = vpop.f32.mrf.mxu0
        %v4728 = vpop.f32.mrf.mxu0
        %v4729 = vadd.f32 0.0, %v4728
        %v4730 = vpop.f32.mrf.mxu0
        %4731 = vmatprep.mubr.bf16.mxu0 0
        %4732 = vmatmul.mubr.bf16.gmra.mxu0 %v4466
        %v4733 = vpop.f32.mrf.mxu0
        %v4734 = vadd.f32 0.0, %v4733
        %v4735 = vpop.f32.mrf.mxu0
        %v4736 = vpop.f32.mrf.mxu0
        %v4737 = vadd.f32 0.0, %v4736
        %v4738 = vpop.f32.mrf.mxu0
        %4739 = vmatprep.mubr.bf16.mxu0 0
        %4740 = vmatmul.mubr.bf16.gmra.mxu0 %v4469
        %v4741 = vpop.f32.mrf.mxu0
        %v4742 = vadd.f32 0.0, %v4741
        %v4743 = vpop.f32.mrf.mxu0
        %v4744 = vpop.f32.mrf.mxu0
        %v4745 = vadd.f32 0.0, %v4744
        %v4746 = vpop.f32.mrf.mxu0
        %4747 = vmatprep.mubr.bf16.mxu0 0
        %4748 = vmatmul.mubr.bf16.gmra.mxu0 %v4472
        %v4749 = vpop.f32.mrf.mxu0
        %v4750 = vadd.f32 0.0, %v4749
        %v4751 = vpop.f32.mrf.mxu0
        %v4752 = vpop.f32.mrf.mxu0
        %v4753 = vadd.f32 0.0, %v4752
        %v4754 = vpop.f32.mrf.mxu0
        %4755 = vmatprep.mubr.bf16.mxu0 0
        %4756 = vmatmul.mubr.bf16.gmra.mxu0 %v4475
        %v4757 = vpop.f32.mrf.mxu0
        %v4758 = vadd.f32 0.0, %v4757
        %v4759 = vpop.f32.mrf.mxu0
        %v4760 = vpop.f32.mrf.mxu0
        %v4761 = vadd.f32 0.0, %v4760
        %v4762 = vpop.f32.mrf.mxu0
        %4763 = vmatprep.mubr.bf16.mxu0 0
        %4764 = vmatmul.mubr.bf16.gmra.mxu0 %v4478
        %v4765 = vpop.f32.mrf.mxu0
        %v4766 = vadd.f32 0.0, %v4765
        %v4767 = vpop.f32.mrf.mxu0
        %v4768 = vpop.f32.mrf.mxu0
        %v4769 = vadd.f32 0.0, %v4768
        %v4770 = vpop.f32.mrf.mxu0
        %4771 = vdwg.mxu0
        %v4772 = vadd.f32 %v4094, %v4518
        %v4773 = vadd.f32 %v4095, %v4521
        %v4774 = vadd.f32 %v4096, %v4526
        %v4775 = vadd.f32 %v4097, %v4529
        %v4776 = vadd.f32 %v4098, %v4534
        %v4777 = vadd.f32 %v4099, %v4537
        %v4778 = vadd.f32 %v4100, %v4542
        %v4779 = vadd.f32 %v4101, %v4545
        %v4780 = vadd.f32 %v4102, %v4550
        %v4781 = vadd.f32 %v4103, %v4553
        %v4782 = vadd.f32 %v4104, %v4558
        %v4783 = vadd.f32 %v4105, %v4561
        %v4784 = vadd.f32 %v4106, %v4566
        %v4785 = vadd.f32 %v4107, %v4569
        %v4786 = vadd.f32 %v4108, %v4574
        %v4787 = vadd.f32 %v4109, %v4577
        %v4788 = vadd.f32 %v4110, %v4582
        %v4789 = vadd.f32 %v4111, %v4585
        %v4790 = vadd.f32 %v4112, %v4590
        %v4791 = vadd.f32 %v4113, %v4593
        %v4792 = vadd.f32 %v4114, %v4598
        %v4793 = vadd.f32 %v4115, %v4601
        %v4794 = vadd.f32 %v4116, %v4606
        %v4795 = vadd.f32 %v4117, %v4609
        %v4796 = vadd.f32 %v4118, %v4614
        %v4797 = vadd.f32 %v4119, %v4617
        %v4798 = vadd.f32 %v4120, %v4622
        %v4799 = vadd.f32 %v4121, %v4625
        %v4800 = vadd.f32 %v4122, %v4630
        %v4801 = vadd.f32 %v4123, %v4633
        %v4802 = vadd.f32 %v4124, %v4638
        %v4803 = vadd.f32 %v4125, %v4641
        %v4804 = vadd.f32 %v4126, %v4646
        %v4805 = vadd.f32 %v4127, %v4649
        %v4806 = vadd.f32 %v4128, %v4654
        %v4807 = vadd.f32 %v4129, %v4657
        %v4808 = vadd.f32 %v4130, %v4662
        %v4809 = vadd.f32 %v4131, %v4665
        %v4810 = vadd.f32 %v4132, %v4670
        %v4811 = vadd.f32 %v4133, %v4673
        %v4812 = vadd.f32 %v4134, %v4678
        %v4813 = vadd.f32 %v4135, %v4681
        %v4814 = vadd.f32 %v4136, %v4686
        %v4815 = vadd.f32 %v4137, %v4689
        %v4816 = vadd.f32 %v4138, %v4694
        %v4817 = vadd.f32 %v4139, %v4697
        %v4818 = vadd.f32 %v4140, %v4702
        %v4819 = vadd.f32 %v4141, %v4705
        %v4820 = vadd.f32 %v4142, %v4710
        %v4821 = vadd.f32 %v4143, %v4713
        %v4822 = vadd.f32 %v4144, %v4718
        %v4823 = vadd.f32 %v4145, %v4721
        %v4824 = vadd.f32 %v4146, %v4726
        %v4825 = vadd.f32 %v4147, %v4729
        %v4826 = vadd.f32 %v4148, %v4734
        %v4827 = vadd.f32 %v4149, %v4737
        %v4828 = vadd.f32 %v4150, %v4742
        %v4829 = vadd.f32 %v4151, %v4745
        %v4830 = vadd.f32 %v4152, %v4750
        %v4831 = vadd.f32 %v4153, %v4753
        %v4832 = vadd.f32 %v4154, %v4758
        %v4833 = vadd.f32 %v4155, %v4761
        %v4834 = vadd.f32 %v4156, %v4766
        %v4835 = vadd.f32 %v4157, %v4769
        %v4836 = vld [vmem:[%s250 + $0x20] sm:$0xf]
        %v4837 = vld [vmem:[%s250 + $0x24] sm:$0xf]
        %v4838 = vld [vmem:[%s250 + $0x28] sm:$0xf]
        %v4839 = vld [vmem:[%s250 + $0x2c] sm:$0xf]
        %v4840 = vld [vmem:[%s250 + $0x30] sm:$0xf]
        %v4841 = vld [vmem:[%s250 + $0x34] sm:$0xf]
        %v4842 = vld [vmem:[%s250 + $0x38] sm:$0xf]
        %v4843 = vld [vmem:[%s250 + $0x3c] sm:$0xf]
        %v4844 = vld [vmem:[%s250 + $0x40] sm:$0xf]
        %v4845 = vld [vmem:[%s250 + $0x44] sm:$0xf]
        %v4846 = vld [vmem:[%s250 + $0x48] sm:$0xf]
        %v4847 = vld [vmem:[%s250 + $0x4c] sm:$0xf]
        %v4848 = vld [vmem:[%s250 + $0x50] sm:$0xf]
        %v4849 = vld [vmem:[%s250 + $0x54] sm:$0xf]
        %v4850 = vld [vmem:[%s250 + $0x58] sm:$0xf]
        %v4851 = vld [vmem:[%s250 + $0x5c] sm:$0xf]
        %v4852 = vld [vmem:[%s250 + $0x60] sm:$0xf]
        %v4853 = vld [vmem:[%s250 + $0x64] sm:$0xf]
        %v4854 = vld [vmem:[%s250 + $0x68] sm:$0xf]
        %v4855 = vld [vmem:[%s250 + $0x6c] sm:$0xf]
        %v4856 = vld [vmem:[%s250 + $0x70] sm:$0xf]
        %v4857 = vld [vmem:[%s250 + $0x74] sm:$0xf]
        %v4858 = vld [vmem:[%s250 + $0x78] sm:$0xf]
        %v4859 = vld [vmem:[%s250 + $0x7c] sm:$0xf]
        %v4860 = vld [vmem:[%s250 + $0x80] sm:$0xf]
        %v4861 = vld [vmem:[%s250 + $0x84] sm:$0xf]
        %v4862 = vld [vmem:[%s250 + $0x88] sm:$0xf]
        %v4863 = vld [vmem:[%s250 + $0x8c] sm:$0xf]
        %v4864 = vld [vmem:[%s250 + $0x90] sm:$0xf]
        %v4865 = vld [vmem:[%s250 + $0x94] sm:$0xf]
        %v4866 = vld [vmem:[%s250 + $0x98] sm:$0xf]
        %v4867 = vld [vmem:[%s250 + $0x9c] sm:$0xf]
        %v4868 = vld [vmem:[%s250 + $0xa0] sm:$0xf]
        %v4869 = vld [vmem:[%s250 + $0xa4] sm:$0xf]
        %v4870 = vld [vmem:[%s250 + $0xa8] sm:$0xf]
        %v4871 = vld [vmem:[%s250 + $0xac] sm:$0xf]
        %v4872 = vld [vmem:[%s250 + $0xb0] sm:$0xf]
        %v4873 = vld [vmem:[%s250 + $0xb4] sm:$0xf]
        %v4874 = vld [vmem:[%s250 + $0xb8] sm:$0xf]
        %v4875 = vld [vmem:[%s250 + $0xbc] sm:$0xf]
        %v4876 = vld [vmem:[%s250 + $0xc0] sm:$0xf]
        %v4877 = vld [vmem:[%s250 + $0xc4] sm:$0xf]
        %v4878 = vld [vmem:[%s250 + $0xc8] sm:$0xf]
        %v4879 = vld [vmem:[%s250 + $0xcc] sm:$0xf]
        %v4880 = vld [vmem:[%s250 + $0xd0] sm:$0xf]
        %v4881 = vld [vmem:[%s250 + $0xd4] sm:$0xf]
        %v4882 = vld [vmem:[%s250 + $0xd8] sm:$0xf]
        %v4883 = vld [vmem:[%s250 + $0xdc] sm:$0xf]
        %v4884 = vld [vmem:[%s250 + $0xe0] sm:$0xf]
        %v4885 = vld [vmem:[%s250 + $0xe4] sm:$0xf]
        %v4886 = vld [vmem:[%s250 + $0xe8] sm:$0xf]
        %v4887 = vld [vmem:[%s250 + $0xec] sm:$0xf]
        %v4888 = vld [vmem:[%s250 + $0xf0] sm:$0xf]
        %v4889 = vld [vmem:[%s250 + $0xf4] sm:$0xf]
        %v4890 = vld [vmem:[%s250 + $0xf8] sm:$0xf]
        %v4891 = vld [vmem:[%s250 + $0xfc] sm:$0xf]
        %v4892 = vld [vmem:[%s250 + $0x100] sm:$0xf]
        %v4893 = vld [vmem:[%s250 + $0x104] sm:$0xf]
        %v4894 = vld [vmem:[%s250 + $0x108] sm:$0xf]
        %v4895 = vld [vmem:[%s250 + $0x10c] sm:$0xf]
        %v4896 = vld [vmem:[%s250 + $0x110] sm:$0xf]
        %v4897 = vld [vmem:[%s250 + $0x114] sm:$0xf]
        %v4898 = vld [vmem:[%s250 + $0x118] sm:$0xf]
        %v4899 = vld [vmem:[%s250 + $0x11c] sm:$0xf]
        %v4900 = vld [vmem:[%s250 + $0x120] sm:$0x1]
        %s4901 = scalar_lea.vmem %s1, 14
        %v4902 = vld [vmem:[%s4901] sm:$0x3]
        %v4968 = vunpack.c.l.b16 %v4836
        %v4969 = vunpack.c.l.b16 %v4837
        %v4970 = vunpack.c.l.b16 %v4838
        %v4971 = vunpack.c.l.b16 %v4839
        %v4972 = vunpack.c.l.b16 %v4840
        %v4973 = vunpack.c.l.b16 %v4841
        %v4974 = vunpack.c.l.b16 %v4842
        %v4975 = vunpack.c.l.b16 %v4843
        %v4976 = vunpack.c.l.b16 %v4844
        %v4977 = vunpack.c.l.b16 %v4845
        %v4978 = vunpack.c.l.b16 %v4846
        %v4979 = vunpack.c.l.b16 %v4847
        %v4980 = vunpack.c.l.b16 %v4848
        %v4981 = vunpack.c.l.b16 %v4849
        %v4982 = vunpack.c.l.b16 %v4850
        %v4983 = vunpack.c.l.b16 %v4851
        %v4984 = vunpack.c.l.b16 %v4852
        %v4985 = vunpack.c.l.b16 %v4853
        %v4986 = vunpack.c.l.b16 %v4854
        %v4987 = vunpack.c.l.b16 %v4855
        %v4988 = vunpack.c.l.b16 %v4856
        %v4989 = vunpack.c.l.b16 %v4857
        %v4990 = vunpack.c.l.b16 %v4858
        %v4991 = vunpack.c.l.b16 %v4859
        %v4992 = vunpack.c.l.b16 %v4860
        %v4993 = vunpack.c.l.b16 %v4861
        %v4994 = vunpack.c.l.b16 %v4862
        %v4995 = vunpack.c.l.b16 %v4863
        %v4996 = vunpack.c.l.b16 %v4864
        %v4997 = vunpack.c.l.b16 %v4865
        %v4998 = vunpack.c.l.b16 %v4866
        %v4999 = vunpack.c.l.b16 %v4867
        %v5000 = vunpack.c.l.b16 %v4868
        %v5001 = vunpack.c.l.b16 %v4869
        %v5002 = vunpack.c.l.b16 %v4870
        %v5003 = vunpack.c.l.b16 %v4871
        %v5004 = vunpack.c.l.b16 %v4872
        %v5005 = vunpack.c.l.b16 %v4873
        %v5006 = vunpack.c.l.b16 %v4874
        %v5007 = vunpack.c.l.b16 %v4875
        %v5008 = vunpack.c.l.b16 %v4876
        %v5009 = vunpack.c.l.b16 %v4877
        %v5010 = vunpack.c.l.b16 %v4878
        %v5011 = vunpack.c.l.b16 %v4879
        %v5012 = vunpack.c.l.b16 %v4880
        %v5013 = vunpack.c.l.b16 %v4881
        %v5014 = vunpack.c.l.b16 %v4882
        %v5015 = vunpack.c.l.b16 %v4883
        %v5016 = vunpack.c.l.b16 %v4884
        %v5017 = vunpack.c.l.b16 %v4885
        %v5018 = vunpack.c.l.b16 %v4886
        %v5019 = vunpack.c.l.b16 %v4887
        %v5020 = vunpack.c.l.b16 %v4888
        %v5021 = vunpack.c.l.b16 %v4889
        %v5022 = vunpack.c.l.b16 %v4890
        %v5023 = vunpack.c.l.b16 %v4891
        %v5024 = vunpack.c.l.b16 %v4892
        %v5025 = vunpack.c.l.b16 %v4893
        %v5026 = vunpack.c.l.b16 %v4894
        %v5027 = vunpack.c.l.b16 %v4895
        %v5028 = vunpack.c.l.b16 %v4896
        %v5029 = vunpack.c.l.b16 %v4897
        %v5030 = vunpack.c.l.b16 %v4898
        %v5031 = vunpack.c.l.b16 %v4899
        %v5032 = vunpack.c.l.b16 %v4900
        %v5033 = vpack.c.b16 %v4969, %v4968
        %v5034 = vpack.c.b16 %v4971, %v4970
        %v5035 = vpack.c.b16 %v4973, %v4972
        %v5036 = vpack.c.b16 %v4975, %v4974
        %v5037 = vpack.c.b16 %v4977, %v4976
        %v5038 = vpack.c.b16 %v4979, %v4978
        %v5039 = vpack.c.b16 %v4981, %v4980
        %v5040 = vpack.c.b16 %v4983, %v4982
        %v5041 = vpack.c.b16 %v4985, %v4984
        %v5042 = vpack.c.b16 %v4987, %v4986
        %v5043 = vpack.c.b16 %v4989, %v4988
        %v5044 = vpack.c.b16 %v4991, %v4990
        %v5045 = vpack.c.b16 %v4993, %v4992
        %v5046 = vpack.c.b16 %v4995, %v4994
        %v5047 = vpack.c.b16 %v4997, %v4996
        %v5048 = vpack.c.b16 %v4999, %v4998
        %v5049 = vpack.c.b16 %v5001, %v5000
        %v5050 = vpack.c.b16 %v5003, %v5002
        %v5051 = vpack.c.b16 %v5005, %v5004
        %v5052 = vpack.c.b16 %v5007, %v5006
        %v5053 = vpack.c.b16 %v5009, %v5008
        %v5054 = vpack.c.b16 %v5011, %v5010
        %v5055 = vpack.c.b16 %v5013, %v5012
        %v5056 = vpack.c.b16 %v5015, %v5014
        %v5057 = vpack.c.b16 %v5017, %v5016
        %v5058 = vpack.c.b16 %v5019, %v5018
        %v5059 = vpack.c.b16 %v5021, %v5020
        %v5060 = vpack.c.b16 %v5023, %v5022
        %v5061 = vpack.c.b16 %v5025, %v5024
        %v5062 = vpack.c.b16 %v5027, %v5026
        %v5063 = vpack.c.b16 %v5029, %v5028
        %v5064 = vpack.c.b16 %v5031, %v5030
        %v5065 = vpack.c.b16 %v5032, %v5032
        %v5067 = vshrl.u32 %v5033, 16
        %v5069 = vshll.u32 %v5033, 16
        %v5071 = vrot.slane %v5069, 1
        %v5072 = vor.u32 %v5067, %v5071
        %v5074 = vshll.u32 %v5034, 16
        %v5076 = vrot.slane %v5074, 1
        %v5077 = vsel %vm484, %v5072, %v5076
        %v5078 = vshrl.u32 %v5034, 16
        %v5080 = vor.u32 %v5078, %v5076
        %v5082 = vshll.u32 %v5035, 16
        %v5084 = vrot.slane %v5082, 1
        %v5085 = vsel %vm484, %v5080, %v5084
        %v5086 = vshrl.u32 %v5035, 16
        %v5088 = vor.u32 %v5086, %v5084
        %v5090 = vshll.u32 %v5036, 16
        %v5092 = vrot.slane %v5090, 1
        %v5093 = vsel %vm484, %v5088, %v5092
        %v5094 = vshrl.u32 %v5036, 16
        %v5096 = vor.u32 %v5094, %v5092
        %v5098 = vshll.u32 %v5037, 16
        %v5100 = vrot.slane %v5098, 1
        %v5101 = vsel %vm484, %v5096, %v5100
        %v5102 = vshrl.u32 %v5037, 16
        %v5104 = vor.u32 %v5102, %v5100
        %v5106 = vshll.u32 %v5038, 16
        %v5108 = vrot.slane %v5106, 1
        %v5109 = vsel %vm484, %v5104, %v5108
        %v5110 = vshrl.u32 %v5038, 16
        %v5112 = vor.u32 %v5110, %v5108
        %v5114 = vshll.u32 %v5039, 16
        %v5116 = vrot.slane %v5114, 1
        %v5117 = vsel %vm484, %v5112, %v5116
        %v5118 = vshrl.u32 %v5039, 16
        %v5120 = vor.u32 %v5118, %v5116
        %v5122 = vshll.u32 %v5040, 16
        %v5124 = vrot.slane %v5122, 1
        %v5125 = vsel %vm484, %v5120, %v5124
        %v5126 = vshrl.u32 %v5040, 16
        %v5128 = vor.u32 %v5126, %v5124
        %v5130 = vshll.u32 %v5041, 16
        %v5132 = vrot.slane %v5130, 1
        %v5133 = vsel %vm484, %v5128, %v5132
        %v5134 = vshrl.u32 %v5041, 16
        %v5136 = vor.u32 %v5134, %v5132
        %v5138 = vshll.u32 %v5042, 16
        %v5140 = vrot.slane %v5138, 1
        %v5141 = vsel %vm484, %v5136, %v5140
        %v5142 = vshrl.u32 %v5042, 16
        %v5144 = vor.u32 %v5142, %v5140
        %v5146 = vshll.u32 %v5043, 16
        %v5148 = vrot.slane %v5146, 1
        %v5149 = vsel %vm484, %v5144, %v5148
        %v5150 = vshrl.u32 %v5043, 16
        %v5152 = vor.u32 %v5150, %v5148
        %v5154 = vshll.u32 %v5044, 16
        %v5156 = vrot.slane %v5154, 1
        %v5157 = vsel %vm484, %v5152, %v5156
        %v5158 = vshrl.u32 %v5044, 16
        %v5160 = vor.u32 %v5158, %v5156
        %v5162 = vshll.u32 %v5045, 16
        %v5164 = vrot.slane %v5162, 1
        %v5165 = vsel %vm484, %v5160, %v5164
        %v5166 = vshrl.u32 %v5045, 16
        %v5168 = vor.u32 %v5166, %v5164
        %v5170 = vshll.u32 %v5046, 16
        %v5172 = vrot.slane %v5170, 1
        %v5173 = vsel %vm484, %v5168, %v5172
        %v5174 = vshrl.u32 %v5046, 16
        %v5176 = vor.u32 %v5174, %v5172
        %v5178 = vshll.u32 %v5047, 16
        %v5180 = vrot.slane %v5178, 1
        %v5181 = vsel %vm484, %v5176, %v5180
        %v5182 = vshrl.u32 %v5047, 16
        %v5184 = vor.u32 %v5182, %v5180
        %v5186 = vshll.u32 %v5048, 16
        %v5188 = vrot.slane %v5186, 1
        %v5189 = vsel %vm484, %v5184, %v5188
        %v5190 = vshrl.u32 %v5048, 16
        %v5192 = vor.u32 %v5190, %v5188
        %v5194 = vshll.u32 %v5049, 16
        %v5196 = vrot.slane %v5194, 1
        %v5197 = vsel %vm484, %v5192, %v5196
        %v5198 = vshrl.u32 %v5049, 16
        %v5200 = vor.u32 %v5198, %v5196
        %v5202 = vshll.u32 %v5050, 16
        %v5204 = vrot.slane %v5202, 1
        %v5205 = vsel %vm484, %v5200, %v5204
        %v5206 = vshrl.u32 %v5050, 16
        %v5208 = vor.u32 %v5206, %v5204
        %v5210 = vshll.u32 %v5051, 16
        %v5212 = vrot.slane %v5210, 1
        %v5213 = vsel %vm484, %v5208, %v5212
        %v5214 = vshrl.u32 %v5051, 16
        %v5216 = vor.u32 %v5214, %v5212
        %v5218 = vshll.u32 %v5052, 16
        %v5220 = vrot.slane %v5218, 1
        %v5221 = vsel %vm484, %v5216, %v5220
        %v5222 = vshrl.u32 %v5052, 16
        %v5224 = vor.u32 %v5222, %v5220
        %v5226 = vshll.u32 %v5053, 16
        %v5228 = vrot.slane %v5226, 1
        %v5229 = vsel %vm484, %v5224, %v5228
        %v5230 = vshrl.u32 %v5053, 16
        %v5232 = vor.u32 %v5230, %v5228
        %v5234 = vshll.u32 %v5054, 16
        %v5236 = vrot.slane %v5234, 1
        %v5237 = vsel %vm484, %v5232, %v5236
        %v5238 = vshrl.u32 %v5054, 16
        %v5240 = vor.u32 %v5238, %v5236
        %v5242 = vshll.u32 %v5055, 16
        %v5244 = vrot.slane %v5242, 1
        %v5245 = vsel %vm484, %v5240, %v5244
        %v5246 = vshrl.u32 %v5055, 16
        %v5248 = vor.u32 %v5246, %v5244
        %v5250 = vshll.u32 %v5056, 16
        %v5252 = vrot.slane %v5250, 1
        %v5253 = vsel %vm484, %v5248, %v5252
        %v5254 = vshrl.u32 %v5056, 16
        %v5256 = vor.u32 %v5254, %v5252
        %v5258 = vshll.u32 %v5057, 16
        %v5260 = vrot.slane %v5258, 1
        %v5261 = vsel %vm484, %v5256, %v5260
        %v5262 = vshrl.u32 %v5057, 16
        %v5264 = vor.u32 %v5262, %v5260
        %v5266 = vshll.u32 %v5058, 16
        %v5268 = vrot.slane %v5266, 1
        %v5269 = vsel %vm484, %v5264, %v5268
        %v5270 = vshrl.u32 %v5058, 16
        %v5272 = vor.u32 %v5270, %v5268
        %v5274 = vshll.u32 %v5059, 16
        %v5276 = vrot.slane %v5274, 1
        %v5277 = vsel %vm484, %v5272, %v5276
        %v5278 = vshrl.u32 %v5059, 16
        %v5280 = vor.u32 %v5278, %v5276
        %v5282 = vshll.u32 %v5060, 16
        %v5284 = vrot.slane %v5282, 1
        %v5285 = vsel %vm484, %v5280, %v5284
        %v5286 = vshrl.u32 %v5060, 16
        %v5288 = vor.u32 %v5286, %v5284
        %v5290 = vshll.u32 %v5061, 16
        %v5292 = vrot.slane %v5290, 1
        %v5293 = vsel %vm484, %v5288, %v5292
        %v5294 = vshrl.u32 %v5061, 16
        %v5296 = vor.u32 %v5294, %v5292
        %v5298 = vshll.u32 %v5062, 16
        %v5300 = vrot.slane %v5298, 1
        %v5301 = vsel %vm484, %v5296, %v5300
        %v5302 = vshrl.u32 %v5062, 16
        %v5304 = vor.u32 %v5302, %v5300
        %v5306 = vshll.u32 %v5063, 16
        %v5308 = vrot.slane %v5306, 1
        %v5309 = vsel %vm484, %v5304, %v5308
        %v5310 = vshrl.u32 %v5063, 16
        %v5312 = vor.u32 %v5310, %v5308
        %v5314 = vshll.u32 %v5064, 16
        %v5316 = vrot.slane %v5314, 1
        %v5317 = vsel %vm484, %v5312, %v5316
        %v5318 = vshrl.u32 %v5064, 16
        %v5320 = vor.u32 %v5318, %v5316
        %v5322 = vshll.u32 %v5065, 16
        %v5324 = vrot.slane %v5322, 1
        %v5325 = vsel %vm484, %v5320, %v5324
        %v5327 = vsel %vm745, %v5077, 0
        %v5330 = vsel %vm745, %v5085, 0
        %v5333 = vsel %vm745, %v5093, 0
        %v5336 = vsel %vm745, %v5101, 0
        %v5339 = vsel %vm745, %v5109, 0
        %v5342 = vsel %vm745, %v5117, 0
        %v5345 = vsel %vm745, %v5125, 0
        %v5348 = vsel %vm745, %v5133, 0
        %v5351 = vsel %vm745, %v5141, 0
        %v5354 = vsel %vm745, %v5149, 0
        %v5357 = vsel %vm745, %v5157, 0
        %v5360 = vsel %vm745, %v5165, 0
        %v5363 = vsel %vm745, %v5173, 0
        %v5366 = vsel %vm745, %v5181, 0
        %v5369 = vsel %vm745, %v5189, 0
        %v5372 = vsel %vm745, %v5197, 0
        %v5375 = vsel %vm745, %v5205, 0
        %v5378 = vsel %vm745, %v5213, 0
        %v5381 = vsel %vm745, %v5221, 0
        %v5384 = vsel %vm745, %v5229, 0
        %v5387 = vsel %vm745, %v5237, 0
        %v5390 = vsel %vm745, %v5245, 0
        %v5393 = vsel %vm745, %v5253, 0
        %v5396 = vsel %vm745, %v5261, 0
        %v5399 = vsel %vm745, %v5269, 0
        %v5402 = vsel %vm745, %v5277, 0
        %v5405 = vsel %vm745, %v5285, 0
        %v5408 = vsel %vm745, %v5293, 0
        %v5411 = vsel %vm745, %v5301, 0
        %v5414 = vsel %vm745, %v5309, 0
        %v5417 = vsel %vm745, %v5317, 0
        %v5420 = vsel %vm745, %v5325, 0
        %v5423 = vsel %vm842, %v4902, 0
        %5425 = vmatprep.subr.bf16.mxu0 0
        %5426 = vmatpush1.bf16.msra.mxu0 0
        %5427 = vmatprep.subr.bf16.mxu0 0
        %5428 = vmatpush1.bf16.msra.mxu0 0
        %5429 = vmatprep.subr.bf16.mxu0 0
        %5430 = vmatpush1.bf16.msra.mxu0 0
        %5431 = vmatprep.subr.bf16.mxu0 0
        %5432 = vmatpush1.bf16.msra.mxu0 0
        %5433 = vmatprep.subr.bf16.mxu0 0
        %5434 = vmatpush1.bf16.msra.mxu0 0
        %5435 = vmatprep.subr.bf16.mxu0 0
        %5436 = vmatpush1.bf16.msra.mxu0 0
        %5437 = vmatprep.subr.bf16.mxu0 0
        %5438 = vmatpush1.bf16.msra.mxu0 0
        %5439 = vmatprep.subr.bf16.mxu0 0
        %5440 = vmatpush1.bf16.msra.mxu0 %v5423
        %5441 = vmatprep.subr.bf16.mxu0 0
        %5442 = vmatpush2.bf16.msra.mxu0 0
        %5443 = vmatprep.subr.bf16.mxu0 0
        %5444 = vmatpush2.bf16.msra.mxu0 0
        %5445 = vmatprep.subr.bf16.mxu0 0
        %5446 = vmatpush2.bf16.msra.mxu0 0
        %5447 = vmatprep.subr.bf16.mxu0 0
        %5448 = vmatpush2.bf16.msra.mxu0 0
        %5449 = vmatprep.subr.bf16.mxu0 0
        %5450 = vmatpush2.bf16.msra.mxu0 0
        %5451 = vmatprep.subr.bf16.mxu0 0
        %5452 = vmatpush2.bf16.msra.mxu0 0
        %5453 = vmatprep.subr.bf16.mxu0 0
        %5454 = vmatpush2.bf16.msra.mxu0 0
        %5455 = vmatprep.subr.bf16.mxu0 0
        %5456 = vmatpush2.bf16.msra.mxu0 0
        %5457 = vmatprep.mubr.bf16.mxu0 0
        %5458 = vmatmul.mubr.bf16.gmra.mxu0 %v5327
        %v5459 = vpop.f32.mrf.mxu0
        %v5460 = vadd.f32 0.0, %v5459
        %v5461 = vpop.f32.mrf.mxu0
        %v5462 = vpop.f32.mrf.mxu0
        %v5463 = vadd.f32 0.0, %v5462
        %v5464 = vpop.f32.mrf.mxu0
        %5465 = vmatprep.mubr.bf16.mxu0 0
        %5466 = vmatmul.mubr.bf16.gmra.mxu0 %v5330
        %v5467 = vpop.f32.mrf.mxu0
        %v5468 = vadd.f32 0.0, %v5467
        %v5469 = vpop.f32.mrf.mxu0
        %v5470 = vpop.f32.mrf.mxu0
        %v5471 = vadd.f32 0.0, %v5470
        %v5472 = vpop.f32.mrf.mxu0
        %5473 = vmatprep.mubr.bf16.mxu0 0
        %5474 = vmatmul.mubr.bf16.gmra.mxu0 %v5333
        %v5475 = vpop.f32.mrf.mxu0
        %v5476 = vadd.f32 0.0, %v5475
        %v5477 = vpop.f32.mrf.mxu0
        %v5478 = vpop.f32.mrf.mxu0
        %v5479 = vadd.f32 0.0, %v5478
        %v5480 = vpop.f32.mrf.mxu0
        %5481 = vmatprep.mubr.bf16.mxu0 0
        %5482 = vmatmul.mubr.bf16.gmra.mxu0 %v5336
        %v5483 = vpop.f32.mrf.mxu0
        %v5484 = vadd.f32 0.0, %v5483
        %v5485 = vpop.f32.mrf.mxu0
        %v5486 = vpop.f32.mrf.mxu0
        %v5487 = vadd.f32 0.0, %v5486
        %v5488 = vpop.f32.mrf.mxu0
        %5489 = vmatprep.mubr.bf16.mxu0 0
        %5490 = vmatmul.mubr.bf16.gmra.mxu0 %v5339
        %v5491 = vpop.f32.mrf.mxu0
        %v5492 = vadd.f32 0.0, %v5491
        %v5493 = vpop.f32.mrf.mxu0
        %v5494 = vpop.f32.mrf.mxu0
        %v5495 = vadd.f32 0.0, %v5494
        %v5496 = vpop.f32.mrf.mxu0
        %5497 = vmatprep.mubr.bf16.mxu0 0
        %5498 = vmatmul.mubr.bf16.gmra.mxu0 %v5342
        %v5499 = vpop.f32.mrf.mxu0
        %v5500 = vadd.f32 0.0, %v5499
        %v5501 = vpop.f32.mrf.mxu0
        %v5502 = vpop.f32.mrf.mxu0
        %v5503 = vadd.f32 0.0, %v5502
        %v5504 = vpop.f32.mrf.mxu0
        %5505 = vmatprep.mubr.bf16.mxu0 0
        %5506 = vmatmul.mubr.bf16.gmra.mxu0 %v5345
        %v5507 = vpop.f32.mrf.mxu0
        %v5508 = vadd.f32 0.0, %v5507
        %v5509 = vpop.f32.mrf.mxu0
        %v5510 = vpop.f32.mrf.mxu0
        %v5511 = vadd.f32 0.0, %v5510
        %v5512 = vpop.f32.mrf.mxu0
        %5513 = vmatprep.mubr.bf16.mxu0 0
        %5514 = vmatmul.mubr.bf16.gmra.mxu0 %v5348
        %v5515 = vpop.f32.mrf.mxu0
        %v5516 = vadd.f32 0.0, %v5515
        %v5517 = vpop.f32.mrf.mxu0
        %v5518 = vpop.f32.mrf.mxu0
        %v5519 = vadd.f32 0.0, %v5518
        %v5520 = vpop.f32.mrf.mxu0
        %5521 = vmatprep.mubr.bf16.mxu0 0
        %5522 = vmatmul.mubr.bf16.gmra.mxu0 %v5351
        %v5523 = vpop.f32.mrf.mxu0
        %v5524 = vadd.f32 0.0, %v5523
        %v5525 = vpop.f32.mrf.mxu0
        %v5526 = vpop.f32.mrf.mxu0
        %v5527 = vadd.f32 0.0, %v5526
        %v5528 = vpop.f32.mrf.mxu0
        %5529 = vmatprep.mubr.bf16.mxu0 0
        %5530 = vmatmul.mubr.bf16.gmra.mxu0 %v5354
        %v5531 = vpop.f32.mrf.mxu0
        %v5532 = vadd.f32 0.0, %v5531
        %v5533 = vpop.f32.mrf.mxu0
        %v5534 = vpop.f32.mrf.mxu0
        %v5535 = vadd.f32 0.0, %v5534
        %v5536 = vpop.f32.mrf.mxu0
        %5537 = vmatprep.mubr.bf16.mxu0 0
        %5538 = vmatmul.mubr.bf16.gmra.mxu0 %v5357
        %v5539 = vpop.f32.mrf.mxu0
        %v5540 = vadd.f32 0.0, %v5539
        %v5541 = vpop.f32.mrf.mxu0
        %v5542 = vpop.f32.mrf.mxu0
        %v5543 = vadd.f32 0.0, %v5542
        %v5544 = vpop.f32.mrf.mxu0
        %5545 = vmatprep.mubr.bf16.mxu0 0
        %5546 = vmatmul.mubr.bf16.gmra.mxu0 %v5360
        %v5547 = vpop.f32.mrf.mxu0
        %v5548 = vadd.f32 0.0, %v5547
        %v5549 = vpop.f32.mrf.mxu0
        %v5550 = vpop.f32.mrf.mxu0
        %v5551 = vadd.f32 0.0, %v5550
        %v5552 = vpop.f32.mrf.mxu0
        %5553 = vmatprep.mubr.bf16.mxu0 0
        %5554 = vmatmul.mubr.bf16.gmra.mxu0 %v5363
        %v5555 = vpop.f32.mrf.mxu0
        %v5556 = vadd.f32 0.0, %v5555
        %v5557 = vpop.f32.mrf.mxu0
        %v5558 = vpop.f32.mrf.mxu0
        %v5559 = vadd.f32 0.0, %v5558
        %v5560 = vpop.f32.mrf.mxu0
        %5561 = vmatprep.mubr.bf16.mxu0 0
        %5562 = vmatmul.mubr.bf16.gmra.mxu0 %v5366
        %v5563 = vpop.f32.mrf.mxu0
        %v5564 = vadd.f32 0.0, %v5563
        %v5565 = vpop.f32.mrf.mxu0
        %v5566 = vpop.f32.mrf.mxu0
        %v5567 = vadd.f32 0.0, %v5566
        %v5568 = vpop.f32.mrf.mxu0
        %5569 = vmatprep.mubr.bf16.mxu0 0
        %5570 = vmatmul.mubr.bf16.gmra.mxu0 %v5369
        %v5571 = vpop.f32.mrf.mxu0
        %v5572 = vadd.f32 0.0, %v5571
        %v5573 = vpop.f32.mrf.mxu0
        %v5574 = vpop.f32.mrf.mxu0
        %v5575 = vadd.f32 0.0, %v5574
        %v5576 = vpop.f32.mrf.mxu0
        %5577 = vmatprep.mubr.bf16.mxu0 0
        %5578 = vmatmul.mubr.bf16.gmra.mxu0 %v5372
        %v5579 = vpop.f32.mrf.mxu0
        %v5580 = vadd.f32 0.0, %v5579
        %v5581 = vpop.f32.mrf.mxu0
        %v5582 = vpop.f32.mrf.mxu0
        %v5583 = vadd.f32 0.0, %v5582
        %v5584 = vpop.f32.mrf.mxu0
        %5585 = vmatprep.mubr.bf16.mxu0 0
        %5586 = vmatmul.mubr.bf16.gmra.mxu0 %v5375
        %v5587 = vpop.f32.mrf.mxu0
        %v5588 = vadd.f32 0.0, %v5587
        %v5589 = vpop.f32.mrf.mxu0
        %v5590 = vpop.f32.mrf.mxu0
        %v5591 = vadd.f32 0.0, %v5590
        %v5592 = vpop.f32.mrf.mxu0
        %5593 = vmatprep.mubr.bf16.mxu0 0
        %5594 = vmatmul.mubr.bf16.gmra.mxu0 %v5378
        %v5595 = vpop.f32.mrf.mxu0
        %v5596 = vadd.f32 0.0, %v5595
        %v5597 = vpop.f32.mrf.mxu0
        %v5598 = vpop.f32.mrf.mxu0
        %v5599 = vadd.f32 0.0, %v5598
        %v5600 = vpop.f32.mrf.mxu0
        %5601 = vmatprep.mubr.bf16.mxu0 0
        %5602 = vmatmul.mubr.bf16.gmra.mxu0 %v5381
        %v5603 = vpop.f32.mrf.mxu0
        %v5604 = vadd.f32 0.0, %v5603
        %v5605 = vpop.f32.mrf.mxu0
        %v5606 = vpop.f32.mrf.mxu0
        %v5607 = vadd.f32 0.0, %v5606
        %v5608 = vpop.f32.mrf.mxu0
        %5609 = vmatprep.mubr.bf16.mxu0 0
        %5610 = vmatmul.mubr.bf16.gmra.mxu0 %v5384
        %v5611 = vpop.f32.mrf.mxu0
        %v5612 = vadd.f32 0.0, %v5611
        %v5613 = vpop.f32.mrf.mxu0
        %v5614 = vpop.f32.mrf.mxu0
        %v5615 = vadd.f32 0.0, %v5614
        %v5616 = vpop.f32.mrf.mxu0
        %5617 = vmatprep.mubr.bf16.mxu0 0
        %5618 = vmatmul.mubr.bf16.gmra.mxu0 %v5387
        %v5619 = vpop.f32.mrf.mxu0
        %v5620 = vadd.f32 0.0, %v5619
        %v5621 = vpop.f32.mrf.mxu0
        %v5622 = vpop.f32.mrf.mxu0
        %v5623 = vadd.f32 0.0, %v5622
        %v5624 = vpop.f32.mrf.mxu0
        %5625 = vmatprep.mubr.bf16.mxu0 0
        %5626 = vmatmul.mubr.bf16.gmra.mxu0 %v5390
        %v5627 = vpop.f32.mrf.mxu0
        %v5628 = vadd.f32 0.0, %v5627
        %v5629 = vpop.f32.mrf.mxu0
        %v5630 = vpop.f32.mrf.mxu0
        %v5631 = vadd.f32 0.0, %v5630
        %v5632 = vpop.f32.mrf.mxu0
        %5633 = vmatprep.mubr.bf16.mxu0 0
        %5634 = vmatmul.mubr.bf16.gmra.mxu0 %v5393
        %v5635 = vpop.f32.mrf.mxu0
        %v5636 = vadd.f32 0.0, %v5635
        %v5637 = vpop.f32.mrf.mxu0
        %v5638 = vpop.f32.mrf.mxu0
        %v5639 = vadd.f32 0.0, %v5638
        %v5640 = vpop.f32.mrf.mxu0
        %5641 = vmatprep.mubr.bf16.mxu0 0
        %5642 = vmatmul.mubr.bf16.gmra.mxu0 %v5396
        %v5643 = vpop.f32.mrf.mxu0
        %v5644 = vadd.f32 0.0, %v5643
        %v5645 = vpop.f32.mrf.mxu0
        %v5646 = vpop.f32.mrf.mxu0
        %v5647 = vadd.f32 0.0, %v5646
        %v5648 = vpop.f32.mrf.mxu0
        %5649 = vmatprep.mubr.bf16.mxu0 0
        %5650 = vmatmul.mubr.bf16.gmra.mxu0 %v5399
        %v5651 = vpop.f32.mrf.mxu0
        %v5652 = vadd.f32 0.0, %v5651
        %v5653 = vpop.f32.mrf.mxu0
        %v5654 = vpop.f32.mrf.mxu0
        %v5655 = vadd.f32 0.0, %v5654
        %v5656 = vpop.f32.mrf.mxu0
        %5657 = vmatprep.mubr.bf16.mxu0 0
        %5658 = vmatmul.mubr.bf16.gmra.mxu0 %v5402
        %v5659 = vpop.f32.mrf.mxu0
        %v5660 = vadd.f32 0.0, %v5659
        %v5661 = vpop.f32.mrf.mxu0
        %v5662 = vpop.f32.mrf.mxu0
        %v5663 = vadd.f32 0.0, %v5662
        %v5664 = vpop.f32.mrf.mxu0
        %5665 = vmatprep.mubr.bf16.mxu0 0
        %5666 = vmatmul.mubr.bf16.gmra.mxu0 %v5405
        %v5667 = vpop.f32.mrf.mxu0
        %v5668 = vadd.f32 0.0, %v5667
        %v5669 = vpop.f32.mrf.mxu0
        %v5670 = vpop.f32.mrf.mxu0
        %v5671 = vadd.f32 0.0, %v5670
        %v5672 = vpop.f32.mrf.mxu0
        %5673 = vmatprep.mubr.bf16.mxu0 0
        %5674 = vmatmul.mubr.bf16.gmra.mxu0 %v5408
        %v5675 = vpop.f32.mrf.mxu0
        %v5676 = vadd.f32 0.0, %v5675
        %v5677 = vpop.f32.mrf.mxu0
        %v5678 = vpop.f32.mrf.mxu0
        %v5679 = vadd.f32 0.0, %v5678
        %v5680 = vpop.f32.mrf.mxu0
        %5681 = vmatprep.mubr.bf16.mxu0 0
        %5682 = vmatmul.mubr.bf16.gmra.mxu0 %v5411
        %v5683 = vpop.f32.mrf.mxu0
        %v5684 = vadd.f32 0.0, %v5683
        %v5685 = vpop.f32.mrf.mxu0
        %v5686 = vpop.f32.mrf.mxu0
        %v5687 = vadd.f32 0.0, %v5686
        %v5688 = vpop.f32.mrf.mxu0
        %5689 = vmatprep.mubr.bf16.mxu0 0
        %5690 = vmatmul.mubr.bf16.gmra.mxu0 %v5414
        %v5691 = vpop.f32.mrf.mxu0
        %v5692 = vadd.f32 0.0, %v5691
        %v5693 = vpop.f32.mrf.mxu0
        %v5694 = vpop.f32.mrf.mxu0
        %v5695 = vadd.f32 0.0, %v5694
        %v5696 = vpop.f32.mrf.mxu0
        %5697 = vmatprep.mubr.bf16.mxu0 0
        %5698 = vmatmul.mubr.bf16.gmra.mxu0 %v5417
        %v5699 = vpop.f32.mrf.mxu0
        %v5700 = vadd.f32 0.0, %v5699
        %v5701 = vpop.f32.mrf.mxu0
        %v5702 = vpop.f32.mrf.mxu0
        %v5703 = vadd.f32 0.0, %v5702
        %v5704 = vpop.f32.mrf.mxu0
        %5705 = vmatprep.mubr.bf16.mxu0 0
        %5706 = vmatmul.mubr.bf16.gmra.mxu0 %v5420
        %v5707 = vpop.f32.mrf.mxu0
        %v5708 = vadd.f32 0.0, %v5707
        %v5709 = vpop.f32.mrf.mxu0
        %v5710 = vpop.f32.mrf.mxu0
        %v5711 = vadd.f32 0.0, %v5710
        %v5712 = vpop.f32.mrf.mxu0
        %5713 = vdwg.mxu0
        %v5714 = vadd.f32 %v4772, %v5460
        %v5715 = vadd.f32 %v4773, %v5463
        %v5716 = vadd.f32 %v4774, %v5468
        %v5717 = vadd.f32 %v4775, %v5471
        %v5718 = vadd.f32 %v4776, %v5476
        %v5719 = vadd.f32 %v4777, %v5479
        %v5720 = vadd.f32 %v4778, %v5484
        %v5721 = vadd.f32 %v4779, %v5487
        %v5722 = vadd.f32 %v4780, %v5492
        %v5723 = vadd.f32 %v4781, %v5495
        %v5724 = vadd.f32 %v4782, %v5500
        %v5725 = vadd.f32 %v4783, %v5503
        %v5726 = vadd.f32 %v4784, %v5508
        %v5727 = vadd.f32 %v4785, %v5511
        %v5728 = vadd.f32 %v4786, %v5516
        %v5729 = vadd.f32 %v4787, %v5519
        %v5730 = vadd.f32 %v4788, %v5524
        %v5731 = vadd.f32 %v4789, %v5527
        %v5732 = vadd.f32 %v4790, %v5532
        %v5733 = vadd.f32 %v4791, %v5535
        %v5734 = vadd.f32 %v4792, %v5540
        %v5735 = vadd.f32 %v4793, %v5543
        %v5736 = vadd.f32 %v4794, %v5548
        %v5737 = vadd.f32 %v4795, %v5551
        %v5738 = vadd.f32 %v4796, %v5556
        %v5739 = vadd.f32 %v4797, %v5559
        %v5740 = vadd.f32 %v4798, %v5564
        %v5741 = vadd.f32 %v4799, %v5567
        %v5742 = vadd.f32 %v4800, %v5572
        %v5743 = vadd.f32 %v4801, %v5575
        %v5744 = vadd.f32 %v4802, %v5580
        %v5745 = vadd.f32 %v4803, %v5583
        %v5746 = vadd.f32 %v4804, %v5588
        %v5747 = vadd.f32 %v4805, %v5591
        %v5748 = vadd.f32 %v4806, %v5596
        %v5749 = vadd.f32 %v4807, %v5599
        %v5750 = vadd.f32 %v4808, %v5604
        %v5751 = vadd.f32 %v4809, %v5607
        %v5752 = vadd.f32 %v4810, %v5612
        %v5753 = vadd.f32 %v4811, %v5615
        %v5754 = vadd.f32 %v4812, %v5620
        %v5755 = vadd.f32 %v4813, %v5623
        %v5756 = vadd.f32 %v4814, %v5628
        %v5757 = vadd.f32 %v4815, %v5631
        %v5758 = vadd.f32 %v4816, %v5636
        %v5759 = vadd.f32 %v4817, %v5639
        %v5760 = vadd.f32 %v4818, %v5644
        %v5761 = vadd.f32 %v4819, %v5647
        %v5762 = vadd.f32 %v4820, %v5652
        %v5763 = vadd.f32 %v4821, %v5655
        %v5764 = vadd.f32 %v4822, %v5660
        %v5765 = vadd.f32 %v4823, %v5663
        %v5766 = vadd.f32 %v4824, %v5668
        %v5767 = vadd.f32 %v4825, %v5671
        %v5768 = vadd.f32 %v4826, %v5676
        %v5769 = vadd.f32 %v4827, %v5679
        %v5770 = vadd.f32 %v4828, %v5684
        %v5771 = vadd.f32 %v4829, %v5687
        %v5772 = vadd.f32 %v4830, %v5692
        %v5773 = vadd.f32 %v4831, %v5695
        %v5774 = vadd.f32 %v4832, %v5700
        %v5775 = vadd.f32 %v4833, %v5703
        %v5776 = vadd.f32 %v4834, %v5708
        %v5777 = vadd.f32 %v4835, %v5711
        %v5778 = vld [vmem:[%s250 + $0x20] sm:$0xe]
        %s5779 = scalar_lea.vmem %s1, 16
        %v5780 = vld [vmem:[%s5779] sm:$0x3]
        %v5782 = vunpack.c.l.b16 %v5778
        %v5783 = vpack.c.b16 %v4969, %v5782
        %v5784 = vrot.slane %v5783, 1
        %v5785 = vrot.slane %v5034, 1
        %v5786 = vsel %vm1497, %v5784, %v5785
        %v5787 = vrot.slane %v5035, 1
        %v5788 = vsel %vm1497, %v5785, %v5787
        %v5789 = vrot.slane %v5036, 1
        %v5790 = vsel %vm1497, %v5787, %v5789
        %v5791 = vrot.slane %v5037, 1
        %v5792 = vsel %vm1497, %v5789, %v5791
        %v5793 = vrot.slane %v5038, 1
        %v5794 = vsel %vm1497, %v5791, %v5793
        %v5795 = vrot.slane %v5039, 1
        %v5796 = vsel %vm1497, %v5793, %v5795
        %v5797 = vrot.slane %v5040, 1
        %v5798 = vsel %vm1497, %v5795, %v5797
        %v5799 = vrot.slane %v5041, 1
        %v5800 = vsel %vm1497, %v5797, %v5799
        %v5801 = vrot.slane %v5042, 1
        %v5802 = vsel %vm1497, %v5799, %v5801
        %v5803 = vrot.slane %v5043, 1
        %v5804 = vsel %vm1497, %v5801, %v5803
        %v5805 = vrot.slane %v5044, 1
        %v5806 = vsel %vm1497, %v5803, %v5805
        %v5807 = vrot.slane %v5045, 1
        %v5808 = vsel %vm1497, %v5805, %v5807
        %v5809 = vrot.slane %v5046, 1
        %v5810 = vsel %vm1497, %v5807, %v5809
        %v5811 = vrot.slane %v5047, 1
        %v5812 = vsel %vm1497, %v5809, %v5811
        %v5813 = vrot.slane %v5048, 1
        %v5814 = vsel %vm1497, %v5811, %v5813
        %v5815 = vrot.slane %v5049, 1
        %v5816 = vsel %vm1497, %v5813, %v5815
        %v5817 = vrot.slane %v5050, 1
        %v5818 = vsel %vm1497, %v5815, %v5817
        %v5819 = vrot.slane %v5051, 1
        %v5820 = vsel %vm1497, %v5817, %v5819
        %v5821 = vrot.slane %v5052, 1
        %v5822 = vsel %vm1497, %v5819, %v5821
        %v5823 = vrot.slane %v5053, 1
        %v5824 = vsel %vm1497, %v5821, %v5823
        %v5825 = vrot.slane %v5054, 1
        %v5826 = vsel %vm1497, %v5823, %v5825
        %v5827 = vrot.slane %v5055, 1
        %v5828 = vsel %vm1497, %v5825, %v5827
        %v5829 = vrot.slane %v5056, 1
        %v5830 = vsel %vm1497, %v5827, %v5829
        %v5831 = vrot.slane %v5057, 1
        %v5832 = vsel %vm1497, %v5829, %v5831
        %v5833 = vrot.slane %v5058, 1
        %v5834 = vsel %vm1497, %v5831, %v5833
        %v5835 = vrot.slane %v5059, 1
        %v5836 = vsel %vm1497, %v5833, %v5835
        %v5837 = vrot.slane %v5060, 1
        %v5838 = vsel %vm1497, %v5835, %v5837
        %v5839 = vrot.slane %v5061, 1
        %v5840 = vsel %vm1497, %v5837, %v5839
        %v5841 = vrot.slane %v5062, 1
        %v5842 = vsel %vm1497, %v5839, %v5841
        %v5843 = vrot.slane %v5063, 1
        %v5844 = vsel %vm1497, %v5841, %v5843
        %v5845 = vrot.slane %v5064, 1
        %v5846 = vsel %vm1497, %v5843, %v5845
        %v5847 = vrot.slane %v5065, 1
        %v5848 = vsel %vm1497, %v5845, %v5847
        %v5850 = vsel %vm745, %v5786, 0
        %v5853 = vsel %vm745, %v5788, 0
        %v5856 = vsel %vm745, %v5790, 0
        %v5859 = vsel %vm745, %v5792, 0
        %v5862 = vsel %vm745, %v5794, 0
        %v5865 = vsel %vm745, %v5796, 0
        %v5868 = vsel %vm745, %v5798, 0
        %v5871 = vsel %vm745, %v5800, 0
        %v5874 = vsel %vm745, %v5802, 0
        %v5877 = vsel %vm745, %v5804, 0
        %v5880 = vsel %vm745, %v5806, 0
        %v5883 = vsel %vm745, %v5808, 0
        %v5886 = vsel %vm745, %v5810, 0
        %v5889 = vsel %vm745, %v5812, 0
        %v5892 = vsel %vm745, %v5814, 0
        %v5895 = vsel %vm745, %v5816, 0
        %v5898 = vsel %vm745, %v5818, 0
        %v5901 = vsel %vm745, %v5820, 0
        %v5904 = vsel %vm745, %v5822, 0
        %v5907 = vsel %vm745, %v5824, 0
        %v5910 = vsel %vm745, %v5826, 0
        %v5913 = vsel %vm745, %v5828, 0
        %v5916 = vsel %vm745, %v5830, 0
        %v5919 = vsel %vm745, %v5832, 0
        %v5922 = vsel %vm745, %v5834, 0
        %v5925 = vsel %vm745, %v5836, 0
        %v5928 = vsel %vm745, %v5838, 0
        %v5931 = vsel %vm745, %v5840, 0
        %v5934 = vsel %vm745, %v5842, 0
        %v5937 = vsel %vm745, %v5844, 0
        %v5940 = vsel %vm745, %v5846, 0
        %v5943 = vsel %vm745, %v5848, 0
        %v5946 = vsel %vm842, %v5780, 0
        %5948 = vmatprep.subr.bf16.mxu0 0
        %5949 = vmatpush1.bf16.msra.mxu0 0
        %5950 = vmatprep.subr.bf16.mxu0 0
        %5951 = vmatpush1.bf16.msra.mxu0 0
        %5952 = vmatprep.subr.bf16.mxu0 0
        %5953 = vmatpush1.bf16.msra.mxu0 0
        %5954 = vmatprep.subr.bf16.mxu0 0
        %5955 = vmatpush1.bf16.msra.mxu0 0
        %5956 = vmatprep.subr.bf16.mxu0 0
        %5957 = vmatpush1.bf16.msra.mxu0 0
        %5958 = vmatprep.subr.bf16.mxu0 0
        %5959 = vmatpush1.bf16.msra.mxu0 0
        %5960 = vmatprep.subr.bf16.mxu0 0
        %5961 = vmatpush1.bf16.msra.mxu0 0
        %5962 = vmatprep.subr.bf16.mxu0 0
        %5963 = vmatpush1.bf16.msra.mxu0 %v5946
        %5964 = vmatprep.subr.bf16.mxu0 0
        %5965 = vmatpush2.bf16.msra.mxu0 0
        %5966 = vmatprep.subr.bf16.mxu0 0
        %5967 = vmatpush2.bf16.msra.mxu0 0
        %5968 = vmatprep.subr.bf16.mxu0 0
        %5969 = vmatpush2.bf16.msra.mxu0 0
        %5970 = vmatprep.subr.bf16.mxu0 0
        %5971 = vmatpush2.bf16.msra.mxu0 0
        %5972 = vmatprep.subr.bf16.mxu0 0
        %5973 = vmatpush2.bf16.msra.mxu0 0
        %5974 = vmatprep.subr.bf16.mxu0 0
        %5975 = vmatpush2.bf16.msra.mxu0 0
        %5976 = vmatprep.subr.bf16.mxu0 0
        %5977 = vmatpush2.bf16.msra.mxu0 0
        %5978 = vmatprep.subr.bf16.mxu0 0
        %5979 = vmatpush2.bf16.msra.mxu0 0
        %5980 = vmatprep.mubr.bf16.mxu0 0
        %5981 = vmatmul.mubr.bf16.gmra.mxu0 %v5850
        %v5982 = vpop.f32.mrf.mxu0
        %v5983 = vadd.f32 0.0, %v5982
        %v5984 = vpop.f32.mrf.mxu0
        %v5985 = vpop.f32.mrf.mxu0
        %v5986 = vadd.f32 0.0, %v5985
        %v5987 = vpop.f32.mrf.mxu0
        %5988 = vmatprep.mubr.bf16.mxu0 0
        %5989 = vmatmul.mubr.bf16.gmra.mxu0 %v5853
        %v5990 = vpop.f32.mrf.mxu0
        %v5991 = vadd.f32 0.0, %v5990
        %v5992 = vpop.f32.mrf.mxu0
        %v5993 = vpop.f32.mrf.mxu0
        %v5994 = vadd.f32 0.0, %v5993
        %v5995 = vpop.f32.mrf.mxu0
        %5996 = vmatprep.mubr.bf16.mxu0 0
        %5997 = vmatmul.mubr.bf16.gmra.mxu0 %v5856
        %v5998 = vpop.f32.mrf.mxu0
        %v5999 = vadd.f32 0.0, %v5998
        %v6000 = vpop.f32.mrf.mxu0
        %v6001 = vpop.f32.mrf.mxu0
        %v6002 = vadd.f32 0.0, %v6001
        %v6003 = vpop.f32.mrf.mxu0
        %6004 = vmatprep.mubr.bf16.mxu0 0
        %6005 = vmatmul.mubr.bf16.gmra.mxu0 %v5859
        %v6006 = vpop.f32.mrf.mxu0
        %v6007 = vadd.f32 0.0, %v6006
        %v6008 = vpop.f32.mrf.mxu0
        %v6009 = vpop.f32.mrf.mxu0
        %v6010 = vadd.f32 0.0, %v6009
        %v6011 = vpop.f32.mrf.mxu0
        %6012 = vmatprep.mubr.bf16.mxu0 0
        %6013 = vmatmul.mubr.bf16.gmra.mxu0 %v5862
        %v6014 = vpop.f32.mrf.mxu0
        %v6015 = vadd.f32 0.0, %v6014
        %v6016 = vpop.f32.mrf.mxu0
        %v6017 = vpop.f32.mrf.mxu0
        %v6018 = vadd.f32 0.0, %v6017
        %v6019 = vpop.f32.mrf.mxu0
        %6020 = vmatprep.mubr.bf16.mxu0 0
        %6021 = vmatmul.mubr.bf16.gmra.mxu0 %v5865
        %v6022 = vpop.f32.mrf.mxu0
        %v6023 = vadd.f32 0.0, %v6022
        %v6024 = vpop.f32.mrf.mxu0
        %v6025 = vpop.f32.mrf.mxu0
        %v6026 = vadd.f32 0.0, %v6025
        %v6027 = vpop.f32.mrf.mxu0
        %6028 = vmatprep.mubr.bf16.mxu0 0
        %6029 = vmatmul.mubr.bf16.gmra.mxu0 %v5868
        %v6030 = vpop.f32.mrf.mxu0
        %v6031 = vadd.f32 0.0, %v6030
        %v6032 = vpop.f32.mrf.mxu0
        %v6033 = vpop.f32.mrf.mxu0
        %v6034 = vadd.f32 0.0, %v6033
        %v6035 = vpop.f32.mrf.mxu0
        %6036 = vmatprep.mubr.bf16.mxu0 0
        %6037 = vmatmul.mubr.bf16.gmra.mxu0 %v5871
        %v6038 = vpop.f32.mrf.mxu0
        %v6039 = vadd.f32 0.0, %v6038
        %v6040 = vpop.f32.mrf.mxu0
        %v6041 = vpop.f32.mrf.mxu0
        %v6042 = vadd.f32 0.0, %v6041
        %v6043 = vpop.f32.mrf.mxu0
        %6044 = vmatprep.mubr.bf16.mxu0 0
        %6045 = vmatmul.mubr.bf16.gmra.mxu0 %v5874
        %v6046 = vpop.f32.mrf.mxu0
        %v6047 = vadd.f32 0.0, %v6046
        %v6048 = vpop.f32.mrf.mxu0
        %v6049 = vpop.f32.mrf.mxu0
        %v6050 = vadd.f32 0.0, %v6049
        %v6051 = vpop.f32.mrf.mxu0
        %6052 = vmatprep.mubr.bf16.mxu0 0
        %6053 = vmatmul.mubr.bf16.gmra.mxu0 %v5877
        %v6054 = vpop.f32.mrf.mxu0
        %v6055 = vadd.f32 0.0, %v6054
        %v6056 = vpop.f32.mrf.mxu0
        %v6057 = vpop.f32.mrf.mxu0
        %v6058 = vadd.f32 0.0, %v6057
        %v6059 = vpop.f32.mrf.mxu0
        %6060 = vmatprep.mubr.bf16.mxu0 0
        %6061 = vmatmul.mubr.bf16.gmra.mxu0 %v5880
        %v6062 = vpop.f32.mrf.mxu0
        %v6063 = vadd.f32 0.0, %v6062
        %v6064 = vpop.f32.mrf.mxu0
        %v6065 = vpop.f32.mrf.mxu0
        %v6066 = vadd.f32 0.0, %v6065
        %v6067 = vpop.f32.mrf.mxu0
        %6068 = vmatprep.mubr.bf16.mxu0 0
        %6069 = vmatmul.mubr.bf16.gmra.mxu0 %v5883
        %v6070 = vpop.f32.mrf.mxu0
        %v6071 = vadd.f32 0.0, %v6070
        %v6072 = vpop.f32.mrf.mxu0
        %v6073 = vpop.f32.mrf.mxu0
        %v6074 = vadd.f32 0.0, %v6073
        %v6075 = vpop.f32.mrf.mxu0
        %6076 = vmatprep.mubr.bf16.mxu0 0
        %6077 = vmatmul.mubr.bf16.gmra.mxu0 %v5886
        %v6078 = vpop.f32.mrf.mxu0
        %v6079 = vadd.f32 0.0, %v6078
        %v6080 = vpop.f32.mrf.mxu0
        %v6081 = vpop.f32.mrf.mxu0
        %v6082 = vadd.f32 0.0, %v6081
        %v6083 = vpop.f32.mrf.mxu0
        %6084 = vmatprep.mubr.bf16.mxu0 0
        %6085 = vmatmul.mubr.bf16.gmra.mxu0 %v5889
        %v6086 = vpop.f32.mrf.mxu0
        %v6087 = vadd.f32 0.0, %v6086
        %v6088 = vpop.f32.mrf.mxu0
        %v6089 = vpop.f32.mrf.mxu0
        %v6090 = vadd.f32 0.0, %v6089
        %v6091 = vpop.f32.mrf.mxu0
        %6092 = vmatprep.mubr.bf16.mxu0 0
        %6093 = vmatmul.mubr.bf16.gmra.mxu0 %v5892
        %v6094 = vpop.f32.mrf.mxu0
        %v6095 = vadd.f32 0.0, %v6094
        %v6096 = vpop.f32.mrf.mxu0
        %v6097 = vpop.f32.mrf.mxu0
        %v6098 = vadd.f32 0.0, %v6097
        %v6099 = vpop.f32.mrf.mxu0
        %6100 = vmatprep.mubr.bf16.mxu0 0
        %6101 = vmatmul.mubr.bf16.gmra.mxu0 %v5895
        %v6102 = vpop.f32.mrf.mxu0
        %v6103 = vadd.f32 0.0, %v6102
        %v6104 = vpop.f32.mrf.mxu0
        %v6105 = vpop.f32.mrf.mxu0
        %v6106 = vadd.f32 0.0, %v6105
        %v6107 = vpop.f32.mrf.mxu0
        %6108 = vmatprep.mubr.bf16.mxu0 0
        %6109 = vmatmul.mubr.bf16.gmra.mxu0 %v5898
        %v6110 = vpop.f32.mrf.mxu0
        %v6111 = vadd.f32 0.0, %v6110
        %v6112 = vpop.f32.mrf.mxu0
        %v6113 = vpop.f32.mrf.mxu0
        %v6114 = vadd.f32 0.0, %v6113
        %v6115 = vpop.f32.mrf.mxu0
        %6116 = vmatprep.mubr.bf16.mxu0 0
        %6117 = vmatmul.mubr.bf16.gmra.mxu0 %v5901
        %v6118 = vpop.f32.mrf.mxu0
        %v6119 = vadd.f32 0.0, %v6118
        %v6120 = vpop.f32.mrf.mxu0
        %v6121 = vpop.f32.mrf.mxu0
        %v6122 = vadd.f32 0.0, %v6121
        %v6123 = vpop.f32.mrf.mxu0
        %6124 = vmatprep.mubr.bf16.mxu0 0
        %6125 = vmatmul.mubr.bf16.gmra.mxu0 %v5904
        %v6126 = vpop.f32.mrf.mxu0
        %v6127 = vadd.f32 0.0, %v6126
        %v6128 = vpop.f32.mrf.mxu0
        %v6129 = vpop.f32.mrf.mxu0
        %v6130 = vadd.f32 0.0, %v6129
        %v6131 = vpop.f32.mrf.mxu0
        %6132 = vmatprep.mubr.bf16.mxu0 0
        %6133 = vmatmul.mubr.bf16.gmra.mxu0 %v5907
        %v6134 = vpop.f32.mrf.mxu0
        %v6135 = vadd.f32 0.0, %v6134
        %v6136 = vpop.f32.mrf.mxu0
        %v6137 = vpop.f32.mrf.mxu0
        %v6138 = vadd.f32 0.0, %v6137
        %v6139 = vpop.f32.mrf.mxu0
        %6140 = vmatprep.mubr.bf16.mxu0 0
        %6141 = vmatmul.mubr.bf16.gmra.mxu0 %v5910
        %v6142 = vpop.f32.mrf.mxu0
        %v6143 = vadd.f32 0.0, %v6142
        %v6144 = vpop.f32.mrf.mxu0
        %v6145 = vpop.f32.mrf.mxu0
        %v6146 = vadd.f32 0.0, %v6145
        %v6147 = vpop.f32.mrf.mxu0
        %6148 = vmatprep.mubr.bf16.mxu0 0
        %6149 = vmatmul.mubr.bf16.gmra.mxu0 %v5913
        %v6150 = vpop.f32.mrf.mxu0
        %v6151 = vadd.f32 0.0, %v6150
        %v6152 = vpop.f32.mrf.mxu0
        %v6153 = vpop.f32.mrf.mxu0
        %v6154 = vadd.f32 0.0, %v6153
        %v6155 = vpop.f32.mrf.mxu0
        %6156 = vmatprep.mubr.bf16.mxu0 0
        %6157 = vmatmul.mubr.bf16.gmra.mxu0 %v5916
        %v6158 = vpop.f32.mrf.mxu0
        %v6159 = vadd.f32 0.0, %v6158
        %v6160 = vpop.f32.mrf.mxu0
        %v6161 = vpop.f32.mrf.mxu0
        %v6162 = vadd.f32 0.0, %v6161
        %v6163 = vpop.f32.mrf.mxu0
        %6164 = vmatprep.mubr.bf16.mxu0 0
        %6165 = vmatmul.mubr.bf16.gmra.mxu0 %v5919
        %v6166 = vpop.f32.mrf.mxu0
        %v6167 = vadd.f32 0.0, %v6166
        %v6168 = vpop.f32.mrf.mxu0
        %v6169 = vpop.f32.mrf.mxu0
        %v6170 = vadd.f32 0.0, %v6169
        %v6171 = vpop.f32.mrf.mxu0
        %6172 = vmatprep.mubr.bf16.mxu0 0
        %6173 = vmatmul.mubr.bf16.gmra.mxu0 %v5922
        %v6174 = vpop.f32.mrf.mxu0
        %v6175 = vadd.f32 0.0, %v6174
        %v6176 = vpop.f32.mrf.mxu0
        %v6177 = vpop.f32.mrf.mxu0
        %v6178 = vadd.f32 0.0, %v6177
        %v6179 = vpop.f32.mrf.mxu0
        %6180 = vmatprep.mubr.bf16.mxu0 0
        %6181 = vmatmul.mubr.bf16.gmra.mxu0 %v5925
        %v6182 = vpop.f32.mrf.mxu0
        %v6183 = vadd.f32 0.0, %v6182
        %v6184 = vpop.f32.mrf.mxu0
        %v6185 = vpop.f32.mrf.mxu0
        %v6186 = vadd.f32 0.0, %v6185
        %v6187 = vpop.f32.mrf.mxu0
        %6188 = vmatprep.mubr.bf16.mxu0 0
        %6189 = vmatmul.mubr.bf16.gmra.mxu0 %v5928
        %v6190 = vpop.f32.mrf.mxu0
        %v6191 = vadd.f32 0.0, %v6190
        %v6192 = vpop.f32.mrf.mxu0
        %v6193 = vpop.f32.mrf.mxu0
        %v6194 = vadd.f32 0.0, %v6193
        %v6195 = vpop.f32.mrf.mxu0
        %6196 = vmatprep.mubr.bf16.mxu0 0
        %6197 = vmatmul.mubr.bf16.gmra.mxu0 %v5931
        %v6198 = vpop.f32.mrf.mxu0
        %v6199 = vadd.f32 0.0, %v6198
        %v6200 = vpop.f32.mrf.mxu0
        %v6201 = vpop.f32.mrf.mxu0
        %v6202 = vadd.f32 0.0, %v6201
        %v6203 = vpop.f32.mrf.mxu0
        %6204 = vmatprep.mubr.bf16.mxu0 0
        %6205 = vmatmul.mubr.bf16.gmra.mxu0 %v5934
        %v6206 = vpop.f32.mrf.mxu0
        %v6207 = vadd.f32 0.0, %v6206
        %v6208 = vpop.f32.mrf.mxu0
        %v6209 = vpop.f32.mrf.mxu0
        %v6210 = vadd.f32 0.0, %v6209
        %v6211 = vpop.f32.mrf.mxu0
        %6212 = vmatprep.mubr.bf16.mxu0 0
        %6213 = vmatmul.mubr.bf16.gmra.mxu0 %v5937
        %v6214 = vpop.f32.mrf.mxu0
        %v6215 = vadd.f32 0.0, %v6214
        %v6216 = vpop.f32.mrf.mxu0
        %v6217 = vpop.f32.mrf.mxu0
        %v6218 = vadd.f32 0.0, %v6217
        %v6219 = vpop.f32.mrf.mxu0
        %6220 = vmatprep.mubr.bf16.mxu0 0
        %6221 = vmatmul.mubr.bf16.gmra.mxu0 %v5940
        %v6222 = vpop.f32.mrf.mxu0
        %v6223 = vadd.f32 0.0, %v6222
        %v6224 = vpop.f32.mrf.mxu0
        %v6225 = vpop.f32.mrf.mxu0
        %v6226 = vadd.f32 0.0, %v6225
        %v6227 = vpop.f32.mrf.mxu0
        %6228 = vmatprep.mubr.bf16.mxu0 0
        %6229 = vmatmul.mubr.bf16.gmra.mxu0 %v5943
        %v6230 = vpop.f32.mrf.mxu0
        %v6231 = vadd.f32 0.0, %v6230
        %v6232 = vpop.f32.mrf.mxu0
        %v6233 = vpop.f32.mrf.mxu0
        %v6234 = vadd.f32 0.0, %v6233
        %v6235 = vpop.f32.mrf.mxu0
        %6236 = vdwg.mxu0
        %v6237 = vadd.f32 %v5714, %v5983
        %v6238 = vadd.f32 %v5715, %v5986
        %v6239 = vadd.f32 %v5716, %v5991
        %v6240 = vadd.f32 %v5717, %v5994
        %v6241 = vadd.f32 %v5718, %v5999
        %v6242 = vadd.f32 %v5719, %v6002
        %v6243 = vadd.f32 %v5720, %v6007
        %v6244 = vadd.f32 %v5721, %v6010
        %v6245 = vadd.f32 %v5722, %v6015
        %v6246 = vadd.f32 %v5723, %v6018
        %v6247 = vadd.f32 %v5724, %v6023
        %v6248 = vadd.f32 %v5725, %v6026
        %v6249 = vadd.f32 %v5726, %v6031
        %v6250 = vadd.f32 %v5727, %v6034
        %v6251 = vadd.f32 %v5728, %v6039
        %v6252 = vadd.f32 %v5729, %v6042
        %v6253 = vadd.f32 %v5730, %v6047
        %v6254 = vadd.f32 %v5731, %v6050
        %v6255 = vadd.f32 %v5732, %v6055
        %v6256 = vadd.f32 %v5733, %v6058
        %v6257 = vadd.f32 %v5734, %v6063
        %v6258 = vadd.f32 %v5735, %v6066
        %v6259 = vadd.f32 %v5736, %v6071
        %v6260 = vadd.f32 %v5737, %v6074
        %v6261 = vadd.f32 %v5738, %v6079
        %v6262 = vadd.f32 %v5739, %v6082
        %v6263 = vadd.f32 %v5740, %v6087
        %v6264 = vadd.f32 %v5741, %v6090
        %v6265 = vadd.f32 %v5742, %v6095
        %v6266 = vadd.f32 %v5743, %v6098
        %v6267 = vadd.f32 %v5744, %v6103
        %v6268 = vadd.f32 %v5745, %v6106
        %v6269 = vadd.f32 %v5746, %v6111
        %v6270 = vadd.f32 %v5747, %v6114
        %v6271 = vadd.f32 %v5748, %v6119
        %v6272 = vadd.f32 %v5749, %v6122
        %v6273 = vadd.f32 %v5750, %v6127
        %v6274 = vadd.f32 %v5751, %v6130
        %v6275 = vadd.f32 %v5752, %v6135
        %v6276 = vadd.f32 %v5753, %v6138
        %v6277 = vadd.f32 %v5754, %v6143
        %v6278 = vadd.f32 %v5755, %v6146
        %v6279 = vadd.f32 %v5756, %v6151
        %v6280 = vadd.f32 %v5757, %v6154
        %v6281 = vadd.f32 %v5758, %v6159
        %v6282 = vadd.f32 %v5759, %v6162
        %v6283 = vadd.f32 %v5760, %v6167
        %v6284 = vadd.f32 %v5761, %v6170
        %v6285 = vadd.f32 %v5762, %v6175
        %v6286 = vadd.f32 %v5763, %v6178
        %v6287 = vadd.f32 %v5764, %v6183
        %v6288 = vadd.f32 %v5765, %v6186
        %v6289 = vadd.f32 %v5766, %v6191
        %v6290 = vadd.f32 %v5767, %v6194
        %v6291 = vadd.f32 %v5768, %v6199
        %v6292 = vadd.f32 %v5769, %v6202
        %v6293 = vadd.f32 %v5770, %v6207
        %v6294 = vadd.f32 %v5771, %v6210
        %v6295 = vadd.f32 %v5772, %v6215
        %v6296 = vadd.f32 %v5773, %v6218
        %v6297 = vadd.f32 %v5774, %v6223
        %v6298 = vadd.f32 %v5775, %v6226
        %v6299 = vadd.f32 %v5776, %v6231
        %v6300 = vadd.f32 %v5777, %v6234
        %v6301 = vld [vmem:[%s2] sm:$0x1]
        %v6303 = vlaneseq
        %v6304 = vshrl.u32 %v6303, 7
        %v6305 = vsub.s32 0, %v6304
        %v6306 = vrot.slane %v6301, %v6305
        %v6308 = vadd.f32 %v6237, %v6306
        %v6309 = vadd.f32 %v6238, %v6306
        %v6310 = vadd.f32 %v6239, %v6306
        %v6311 = vadd.f32 %v6240, %v6306
        %v6312 = vadd.f32 %v6241, %v6306
        %v6313 = vadd.f32 %v6242, %v6306
        %v6314 = vadd.f32 %v6243, %v6306
        %v6315 = vadd.f32 %v6244, %v6306
        %v6316 = vadd.f32 %v6245, %v6306
        %v6317 = vadd.f32 %v6246, %v6306
        %v6318 = vadd.f32 %v6247, %v6306
        %v6319 = vadd.f32 %v6248, %v6306
        %v6320 = vadd.f32 %v6249, %v6306
        %v6321 = vadd.f32 %v6250, %v6306
        %v6322 = vadd.f32 %v6251, %v6306
        %v6323 = vadd.f32 %v6252, %v6306
        %v6324 = vadd.f32 %v6253, %v6306
        %v6325 = vadd.f32 %v6254, %v6306
        %v6326 = vadd.f32 %v6255, %v6306
        %v6327 = vadd.f32 %v6256, %v6306
        %v6328 = vadd.f32 %v6257, %v6306
        %v6329 = vadd.f32 %v6258, %v6306
        %v6330 = vadd.f32 %v6259, %v6306
        %v6331 = vadd.f32 %v6260, %v6306
        %v6332 = vadd.f32 %v6261, %v6306
        %v6333 = vadd.f32 %v6262, %v6306
        %v6334 = vadd.f32 %v6263, %v6306
        %v6335 = vadd.f32 %v6264, %v6306
        %v6336 = vadd.f32 %v6265, %v6306
        %v6337 = vadd.f32 %v6266, %v6306
        %v6338 = vadd.f32 %v6267, %v6306
        %v6339 = vadd.f32 %v6268, %v6306
        %v6340 = vadd.f32 %v6269, %v6306
        %v6341 = vadd.f32 %v6270, %v6306
        %v6342 = vadd.f32 %v6271, %v6306
        %v6343 = vadd.f32 %v6272, %v6306
        %v6344 = vadd.f32 %v6273, %v6306
        %v6345 = vadd.f32 %v6274, %v6306
        %v6346 = vadd.f32 %v6275, %v6306
        %v6347 = vadd.f32 %v6276, %v6306
        %v6348 = vadd.f32 %v6277, %v6306
        %v6349 = vadd.f32 %v6278, %v6306
        %v6350 = vadd.f32 %v6279, %v6306
        %v6351 = vadd.f32 %v6280, %v6306
        %v6352 = vadd.f32 %v6281, %v6306
        %v6353 = vadd.f32 %v6282, %v6306
        %v6354 = vadd.f32 %v6283, %v6306
        %v6355 = vadd.f32 %v6284, %v6306
        %v6356 = vadd.f32 %v6285, %v6306
        %v6357 = vadd.f32 %v6286, %v6306
        %v6358 = vadd.f32 %v6287, %v6306
        %v6359 = vadd.f32 %v6288, %v6306
        %v6360 = vadd.f32 %v6289, %v6306
        %v6361 = vadd.f32 %v6290, %v6306
        %v6362 = vadd.f32 %v6291, %v6306
        %v6363 = vadd.f32 %v6292, %v6306
        %v6364 = vadd.f32 %v6293, %v6306
        %v6365 = vadd.f32 %v6294, %v6306
        %v6366 = vadd.f32 %v6295, %v6306
        %v6367 = vadd.f32 %v6296, %v6306
        %v6368 = vadd.f32 %v6297, %v6306
        %v6369 = vadd.f32 %v6298, %v6306
        %v6370 = vadd.f32 %v6299, %v6306
        %v6371 = vadd.f32 %v6300, %v6306
        %v6372 = vmax.f32 %v6308, 0.0
        %v6373 = vmax.f32 %v6309, 0.0
        %v6374 = vmax.f32 %v6310, 0.0
        %v6375 = vmax.f32 %v6311, 0.0
        %v6376 = vmax.f32 %v6312, 0.0
        %v6377 = vmax.f32 %v6313, 0.0
        %v6378 = vmax.f32 %v6314, 0.0
        %v6379 = vmax.f32 %v6315, 0.0
        %v6380 = vmax.f32 %v6316, 0.0
        %v6381 = vmax.f32 %v6317, 0.0
        %v6382 = vmax.f32 %v6318, 0.0
        %v6383 = vmax.f32 %v6319, 0.0
        %v6384 = vmax.f32 %v6320, 0.0
        %v6385 = vmax.f32 %v6321, 0.0
        %v6386 = vmax.f32 %v6322, 0.0
        %v6387 = vmax.f32 %v6323, 0.0
        %v6388 = vmax.f32 %v6324, 0.0
        %v6389 = vmax.f32 %v6325, 0.0
        %v6390 = vmax.f32 %v6326, 0.0
        %v6391 = vmax.f32 %v6327, 0.0
        %v6392 = vmax.f32 %v6328, 0.0
        %v6393 = vmax.f32 %v6329, 0.0
        %v6394 = vmax.f32 %v6330, 0.0
        %v6395 = vmax.f32 %v6331, 0.0
        %v6396 = vmax.f32 %v6332, 0.0
        %v6397 = vmax.f32 %v6333, 0.0
        %v6398 = vmax.f32 %v6334, 0.0
        %v6399 = vmax.f32 %v6335, 0.0
        %v6400 = vmax.f32 %v6336, 0.0
        %v6401 = vmax.f32 %v6337, 0.0
        %v6402 = vmax.f32 %v6338, 0.0
        %v6403 = vmax.f32 %v6339, 0.0
        %v6404 = vmax.f32 %v6340, 0.0
        %v6405 = vmax.f32 %v6341, 0.0
        %v6406 = vmax.f32 %v6342, 0.0
        %v6407 = vmax.f32 %v6343, 0.0
        %v6408 = vmax.f32 %v6344, 0.0
        %v6409 = vmax.f32 %v6345, 0.0
        %v6410 = vmax.f32 %v6346, 0.0
        %v6411 = vmax.f32 %v6347, 0.0
        %v6412 = vmax.f32 %v6348, 0.0
        %v6413 = vmax.f32 %v6349, 0.0
        %v6414 = vmax.f32 %v6350, 0.0
        %v6415 = vmax.f32 %v6351, 0.0
        %v6416 = vmax.f32 %v6352, 0.0
        %v6417 = vmax.f32 %v6353, 0.0
        %v6418 = vmax.f32 %v6354, 0.0
        %v6419 = vmax.f32 %v6355, 0.0
        %v6420 = vmax.f32 %v6356, 0.0
        %v6421 = vmax.f32 %v6357, 0.0
        %v6422 = vmax.f32 %v6358, 0.0
        %v6423 = vmax.f32 %v6359, 0.0
        %v6424 = vmax.f32 %v6360, 0.0
        %v6425 = vmax.f32 %v6361, 0.0
        %v6426 = vmax.f32 %v6362, 0.0
        %v6427 = vmax.f32 %v6363, 0.0
        %v6428 = vmax.f32 %v6364, 0.0
        %v6429 = vmax.f32 %v6365, 0.0
        %v6430 = vmax.f32 %v6366, 0.0
        %v6431 = vmax.f32 %v6367, 0.0
        %v6432 = vmax.f32 %v6368, 0.0
        %v6433 = vmax.f32 %v6369, 0.0
        %v6434 = vmax.f32 %v6370, 0.0
        %v6435 = vmax.f32 %v6371, 0.0
        %v6436 = vld [vmem:[%s3] sm:$0x1]
        %v6438 = vlaneseq
        %v6439 = vshrl.u32 %v6438, 7
        %v6440 = vsub.s32 0, %v6439
        %v6441 = vrot.slane %v6436, %v6440
        %v6443 = vmul.f32 %v6372, %v6441
        %v6444 = vmul.f32 %v6373, %v6441
        %v6445 = vmul.f32 %v6374, %v6441
        %v6446 = vmul.f32 %v6375, %v6441
        %v6447 = vmul.f32 %v6376, %v6441
        %v6448 = vmul.f32 %v6377, %v6441
        %v6449 = vmul.f32 %v6378, %v6441
        %v6450 = vmul.f32 %v6379, %v6441
        %v6451 = vmul.f32 %v6380, %v6441
        %v6452 = vmul.f32 %v6381, %v6441
        %v6453 = vmul.f32 %v6382, %v6441
        %v6454 = vmul.f32 %v6383, %v6441
        %v6455 = vmul.f32 %v6384, %v6441
        %v6456 = vmul.f32 %v6385, %v6441
        %v6457 = vmul.f32 %v6386, %v6441
        %v6458 = vmul.f32 %v6387, %v6441
        %v6459 = vmul.f32 %v6388, %v6441
        %v6460 = vmul.f32 %v6389, %v6441
        %v6461 = vmul.f32 %v6390, %v6441
        %v6462 = vmul.f32 %v6391, %v6441
        %v6463 = vmul.f32 %v6392, %v6441
        %v6464 = vmul.f32 %v6393, %v6441
        %v6465 = vmul.f32 %v6394, %v6441
        %v6466 = vmul.f32 %v6395, %v6441
        %v6467 = vmul.f32 %v6396, %v6441
        %v6468 = vmul.f32 %v6397, %v6441
        %v6469 = vmul.f32 %v6398, %v6441
        %v6470 = vmul.f32 %v6399, %v6441
        %v6471 = vmul.f32 %v6400, %v6441
        %v6472 = vmul.f32 %v6401, %v6441
        %v6473 = vmul.f32 %v6402, %v6441
        %v6474 = vmul.f32 %v6403, %v6441
        %v6475 = vmul.f32 %v6404, %v6441
        %v6476 = vmul.f32 %v6405, %v6441
        %v6477 = vmul.f32 %v6406, %v6441
        %v6478 = vmul.f32 %v6407, %v6441
        %v6479 = vmul.f32 %v6408, %v6441
        %v6480 = vmul.f32 %v6409, %v6441
        %v6481 = vmul.f32 %v6410, %v6441
        %v6482 = vmul.f32 %v6411, %v6441
        %v6483 = vmul.f32 %v6412, %v6441
        %v6484 = vmul.f32 %v6413, %v6441
        %v6485 = vmul.f32 %v6414, %v6441
        %v6486 = vmul.f32 %v6415, %v6441
        %v6487 = vmul.f32 %v6416, %v6441
        %v6488 = vmul.f32 %v6417, %v6441
        %v6489 = vmul.f32 %v6418, %v6441
        %v6490 = vmul.f32 %v6419, %v6441
        %v6491 = vmul.f32 %v6420, %v6441
        %v6492 = vmul.f32 %v6421, %v6441
        %v6493 = vmul.f32 %v6422, %v6441
        %v6494 = vmul.f32 %v6423, %v6441
        %v6495 = vmul.f32 %v6424, %v6441
        %v6496 = vmul.f32 %v6425, %v6441
        %v6497 = vmul.f32 %v6426, %v6441
        %v6498 = vmul.f32 %v6427, %v6441
        %v6499 = vmul.f32 %v6428, %v6441
        %v6500 = vmul.f32 %v6429, %v6441
        %v6501 = vmul.f32 %v6430, %v6441
        %v6502 = vmul.f32 %v6431, %v6441
        %v6503 = vmul.f32 %v6432, %v6441
        %v6504 = vmul.f32 %v6433, %v6441
        %v6505 = vmul.f32 %v6434, %v6441
        %v6506 = vmul.f32 %v6435, %v6441
        %v6507 = vld [vmem:[%s4] sm:$0x1]
        %v6509 = vlaneseq
        %v6510 = vshrl.u32 %v6509, 7
        %v6511 = vsub.s32 0, %v6510
        %v6512 = vrot.slane %v6507, %v6511
        %v6514 = vadd.f32 %v6443, %v6512
        %v6515 = vadd.f32 %v6444, %v6512
        %v6516 = vadd.f32 %v6445, %v6512
        %v6517 = vadd.f32 %v6446, %v6512
        %v6518 = vadd.f32 %v6447, %v6512
        %v6519 = vadd.f32 %v6448, %v6512
        %v6520 = vadd.f32 %v6449, %v6512
        %v6521 = vadd.f32 %v6450, %v6512
        %v6522 = vadd.f32 %v6451, %v6512
        %v6523 = vadd.f32 %v6452, %v6512
        %v6524 = vadd.f32 %v6453, %v6512
        %v6525 = vadd.f32 %v6454, %v6512
        %v6526 = vadd.f32 %v6455, %v6512
        %v6527 = vadd.f32 %v6456, %v6512
        %v6528 = vadd.f32 %v6457, %v6512
        %v6529 = vadd.f32 %v6458, %v6512
        %v6530 = vadd.f32 %v6459, %v6512
        %v6531 = vadd.f32 %v6460, %v6512
        %v6532 = vadd.f32 %v6461, %v6512
        %v6533 = vadd.f32 %v6462, %v6512
        %v6534 = vadd.f32 %v6463, %v6512
        %v6535 = vadd.f32 %v6464, %v6512
        %v6536 = vadd.f32 %v6465, %v6512
        %v6537 = vadd.f32 %v6466, %v6512
        %v6538 = vadd.f32 %v6467, %v6512
        %v6539 = vadd.f32 %v6468, %v6512
        %v6540 = vadd.f32 %v6469, %v6512
        %v6541 = vadd.f32 %v6470, %v6512
        %v6542 = vadd.f32 %v6471, %v6512
        %v6543 = vadd.f32 %v6472, %v6512
        %v6544 = vadd.f32 %v6473, %v6512
        %v6545 = vadd.f32 %v6474, %v6512
        %v6546 = vadd.f32 %v6475, %v6512
        %v6547 = vadd.f32 %v6476, %v6512
        %v6548 = vadd.f32 %v6477, %v6512
        %v6549 = vadd.f32 %v6478, %v6512
        %v6550 = vadd.f32 %v6479, %v6512
        %v6551 = vadd.f32 %v6480, %v6512
        %v6552 = vadd.f32 %v6481, %v6512
        %v6553 = vadd.f32 %v6482, %v6512
        %v6554 = vadd.f32 %v6483, %v6512
        %v6555 = vadd.f32 %v6484, %v6512
        %v6556 = vadd.f32 %v6485, %v6512
        %v6557 = vadd.f32 %v6486, %v6512
        %v6558 = vadd.f32 %v6487, %v6512
        %v6559 = vadd.f32 %v6488, %v6512
        %v6560 = vadd.f32 %v6489, %v6512
        %v6561 = vadd.f32 %v6490, %v6512
        %v6562 = vadd.f32 %v6491, %v6512
        %v6563 = vadd.f32 %v6492, %v6512
        %v6564 = vadd.f32 %v6493, %v6512
        %v6565 = vadd.f32 %v6494, %v6512
        %v6566 = vadd.f32 %v6495, %v6512
        %v6567 = vadd.f32 %v6496, %v6512
        %v6568 = vadd.f32 %v6497, %v6512
        %v6569 = vadd.f32 %v6498, %v6512
        %v6570 = vadd.f32 %v6499, %v6512
        %v6571 = vadd.f32 %v6500, %v6512
        %v6572 = vadd.f32 %v6501, %v6512
        %v6573 = vadd.f32 %v6502, %v6512
        %v6574 = vadd.f32 %v6503, %v6512
        %v6575 = vadd.f32 %v6504, %v6512
        %v6576 = vadd.f32 %v6505, %v6512
        %v6577 = vadd.f32 %v6506, %v6512
        %vm6578 = vcmask 261120
        %6579 = vst.msk [vmem:[#allocation2] sm:$0xff] %vm6578, %v6514
        %6580 = vst.msk [vmem:[#allocation2 + $0x8] sm:$0xff] %vm6578, %v6515
        %6581 = vst.msk [vmem:[#allocation2 + $0x10] sm:$0xff] %vm6578, %v6516
        %6582 = vst.msk [vmem:[#allocation2 + $0x18] sm:$0xff] %vm6578, %v6517
        %6583 = vst.msk [vmem:[#allocation2 + $0x20] sm:$0xff] %vm6578, %v6518
        %6584 = vst.msk [vmem:[#allocation2 + $0x28] sm:$0xff] %vm6578, %v6519
        %6585 = vst.msk [vmem:[#allocation2 + $0x30] sm:$0xff] %vm6578, %v6520
        %6586 = vst.msk [vmem:[#allocation2 + $0x38] sm:$0xff] %vm6578, %v6521
        %6587 = vst.msk [vmem:[#allocation2 + $0x40] sm:$0xff] %vm6578, %v6522
        %6588 = vst.msk [vmem:[#allocation2 + $0x48] sm:$0xff] %vm6578, %v6523
        %6589 = vst.msk [vmem:[#allocation2 + $0x50] sm:$0xff] %vm6578, %v6524
        %6590 = vst.msk [vmem:[#allocation2 + $0x58] sm:$0xff] %vm6578, %v6525
        %6591 = vst.msk [vmem:[#allocation2 + $0x60] sm:$0xff] %vm6578, %v6526
        %6592 = vst.msk [vmem:[#allocation2 + $0x68] sm:$0xff] %vm6578, %v6527
        %6593 = vst.msk [vmem:[#allocation2 + $0x70] sm:$0xff] %vm6578, %v6528
        %6594 = vst.msk [vmem:[#allocation2 + $0x78] sm:$0xff] %vm6578, %v6529
        %6595 = vst.msk [vmem:[#allocation2 + $0x80] sm:$0xff] %vm6578, %v6530
        %6596 = vst.msk [vmem:[#allocation2 + $0x88] sm:$0xff] %vm6578, %v6531
        %6597 = vst.msk [vmem:[#allocation2 + $0x90] sm:$0xff] %vm6578, %v6532
        %6598 = vst.msk [vmem:[#allocation2 + $0x98] sm:$0xff] %vm6578, %v6533
        %6599 = vst.msk [vmem:[#allocation2 + $0xa0] sm:$0xff] %vm6578, %v6534
        %6600 = vst.msk [vmem:[#allocation2 + $0xa8] sm:$0xff] %vm6578, %v6535
        %6601 = vst.msk [vmem:[#allocation2 + $0xb0] sm:$0xff] %vm6578, %v6536
        %6602 = vst.msk [vmem:[#allocation2 + $0xb8] sm:$0xff] %vm6578, %v6537
        %6603 = vst.msk [vmem:[#allocation2 + $0xc0] sm:$0xff] %vm6578, %v6538
        %6604 = vst.msk [vmem:[#allocation2 + $0xc8] sm:$0xff] %vm6578, %v6539
        %6605 = vst.msk [vmem:[#allocation2 + $0xd0] sm:$0xff] %vm6578, %v6540
        %6606 = vst.msk [vmem:[#allocation2 + $0xd8] sm:$0xff] %vm6578, %v6541
        %6607 = vst.msk [vmem:[#allocation2 + $0xe0] sm:$0xff] %vm6578, %v6542
        %6608 = vst.msk [vmem:[#allocation2 + $0xe8] sm:$0xff] %vm6578, %v6543
        %6609 = vst.msk [vmem:[#allocation2 + $0xf0] sm:$0xff] %vm6578, %v6544
        %6610 = vst.msk [vmem:[#allocation2 + $0xf8] sm:$0xff] %vm6578, %v6545
        %6611 = vst.msk [vmem:[#allocation2 + $0x100] sm:$0xff] %vm6578, %v6546
        %6612 = vst.msk [vmem:[#allocation2 + $0x108] sm:$0xff] %vm6578, %v6547
        %6613 = vst.msk [vmem:[#allocation2 + $0x110] sm:$0xff] %vm6578, %v6548
        %6614 = vst.msk [vmem:[#allocation2 + $0x118] sm:$0xff] %vm6578, %v6549
        %6615 = vst.msk [vmem:[#allocation2 + $0x120] sm:$0xff] %vm6578, %v6550
        %6616 = vst.msk [vmem:[#allocation2 + $0x128] sm:$0xff] %vm6578, %v6551
        %6617 = vst.msk [vmem:[#allocation2 + $0x130] sm:$0xff] %vm6578, %v6552
        %6618 = vst.msk [vmem:[#allocation2 + $0x138] sm:$0xff] %vm6578, %v6553
        %6619 = vst.msk [vmem:[#allocation2 + $0x140] sm:$0xff] %vm6578, %v6554
        %6620 = vst.msk [vmem:[#allocation2 + $0x148] sm:$0xff] %vm6578, %v6555
        %6621 = vst.msk [vmem:[#allocation2 + $0x150] sm:$0xff] %vm6578, %v6556
        %6622 = vst.msk [vmem:[#allocation2 + $0x158] sm:$0xff] %vm6578, %v6557
        %6623 = vst.msk [vmem:[#allocation2 + $0x160] sm:$0xff] %vm6578, %v6558
        %6624 = vst.msk [vmem:[#allocation2 + $0x168] sm:$0xff] %vm6578, %v6559
        %6625 = vst.msk [vmem:[#allocation2 + $0x170] sm:$0xff] %vm6578, %v6560
        %6626 = vst.msk [vmem:[#allocation2 + $0x178] sm:$0xff] %vm6578, %v6561
        %6627 = vst.msk [vmem:[#allocation2 + $0x180] sm:$0xff] %vm6578, %v6562
        %6628 = vst.msk [vmem:[#allocation2 + $0x188] sm:$0xff] %vm6578, %v6563
        %6629 = vst.msk [vmem:[#allocation2 + $0x190] sm:$0xff] %vm6578, %v6564
        %6630 = vst.msk [vmem:[#allocation2 + $0x198] sm:$0xff] %vm6578, %v6565
        %6631 = vst.msk [vmem:[#allocation2 + $0x1a0] sm:$0xff] %vm6578, %v6566
        %6632 = vst.msk [vmem:[#allocation2 + $0x1a8] sm:$0xff] %vm6578, %v6567
        %6633 = vst.msk [vmem:[#allocation2 + $0x1b0] sm:$0xff] %vm6578, %v6568
        %6634 = vst.msk [vmem:[#allocation2 + $0x1b8] sm:$0xff] %vm6578, %v6569
        %6635 = vst.msk [vmem:[#allocation2 + $0x1c0] sm:$0xff] %vm6578, %v6570
        %6636 = vst.msk [vmem:[#allocation2 + $0x1c8] sm:$0xff] %vm6578, %v6571
        %6637 = vst.msk [vmem:[#allocation2 + $0x1d0] sm:$0xff] %vm6578, %v6572
        %6638 = vst.msk [vmem:[#allocation2 + $0x1d8] sm:$0xff] %vm6578, %v6573
        %6639 = vst.msk [vmem:[#allocation2 + $0x1e0] sm:$0xff] %vm6578, %v6574
        %6640 = vst.msk [vmem:[#allocation2 + $0x1e8] sm:$0xff] %vm6578, %v6575
        %6641 = vst.msk [vmem:[#allocation2 + $0x1f0] sm:$0xff] %vm6578, %v6576
        %6642 = vst.msk [vmem:[#allocation2 + $0x1f8] sm:$0xff] %vm6578, %v6577
        %v6643 = vld [vmem:[#allocation2] ss:$2 sm:$0xff]
        %s6644 = scalar_lea.vmem [#allocation2], 32
        %v6645 = vld [vmem:[%s6644] ss:$2 sm:$0xff]
        %s6646 = scalar_lea.vmem [#allocation2], 64
        %v6647 = vld [vmem:[%s6646] ss:$2 sm:$0xff]
        %s6648 = scalar_lea.vmem [#allocation2], 96
        %v6649 = vld [vmem:[%s6648] ss:$2 sm:$0xff]
        %s6650 = scalar_lea.vmem [#allocation2], 128
        %v6651 = vld [vmem:[%s6650] ss:$2 sm:$0xff]
        %s6652 = scalar_lea.vmem [#allocation2], 160
        %v6653 = vld [vmem:[%s6652] ss:$2 sm:$0xff]
        %s6654 = scalar_lea.vmem [#allocation2], 192
        %v6655 = vld [vmem:[%s6654] ss:$2 sm:$0xff]
        %s6656 = scalar_lea.vmem [#allocation2], 224
        %v6657 = vld [vmem:[%s6656] ss:$2 sm:$0xff]
        %s6658 = scalar_lea.vmem [#allocation2], 256
        %v6659 = vld [vmem:[%s6658] ss:$2 sm:$0xff]
        %s6660 = scalar_lea.vmem [#allocation2], 288
        %v6661 = vld [vmem:[%s6660] ss:$2 sm:$0xff]
        %s6662 = scalar_lea.vmem [#allocation2], 320
        %v6663 = vld [vmem:[%s6662] ss:$2 sm:$0xff]
        %s6664 = scalar_lea.vmem [#allocation2], 352
        %v6665 = vld [vmem:[%s6664] ss:$2 sm:$0xff]
        %s6666 = scalar_lea.vmem [#allocation2], 384
        %v6667 = vld [vmem:[%s6666] ss:$2 sm:$0xff]
        %s6668 = scalar_lea.vmem [#allocation2], 416
        %v6669 = vld [vmem:[%s6668] ss:$2 sm:$0xff]
        %s6670 = scalar_lea.vmem [#allocation2], 448
        %v6671 = vld [vmem:[%s6670] ss:$2 sm:$0xff]
        %s6672 = scalar_lea.vmem [#allocation2], 480
        %v6673 = vld [vmem:[%s6672] ss:$2 sm:$0xff]
        %s6674 = scalar_lea.vmem [#allocation2], 1
        %v6675 = vld [vmem:[%s6674] ss:$2 sm:$0xff]
        %s6676 = scalar_lea.vmem [#allocation2], 33
        %v6677 = vld [vmem:[%s6676] ss:$2 sm:$0xff]
        %s6678 = scalar_lea.vmem [#allocation2], 65
        %v6679 = vld [vmem:[%s6678] ss:$2 sm:$0xff]
        %s6680 = scalar_lea.vmem [#allocation2], 97
        %v6681 = vld [vmem:[%s6680] ss:$2 sm:$0xff]
        %s6682 = scalar_lea.vmem [#allocation2], 129
        %v6683 = vld [vmem:[%s6682] ss:$2 sm:$0xff]
        %s6684 = scalar_lea.vmem [#allocation2], 161
        %v6685 = vld [vmem:[%s6684] ss:$2 sm:$0xff]
        %s6686 = scalar_lea.vmem [#allocation2], 193
        %v6687 = vld [vmem:[%s6686] ss:$2 sm:$0xff]
        %s6688 = scalar_lea.vmem [#allocation2], 225
        %v6689 = vld [vmem:[%s6688] ss:$2 sm:$0xff]
        %s6690 = scalar_lea.vmem [#allocation2], 257
        %v6691 = vld [vmem:[%s6690] ss:$2 sm:$0xff]
        %s6692 = scalar_lea.vmem [#allocation2], 289
        %v6693 = vld [vmem:[%s6692] ss:$2 sm:$0xff]
        %s6694 = scalar_lea.vmem [#allocation2], 321
        %v6695 = vld [vmem:[%s6694] ss:$2 sm:$0xff]
        %s6696 = scalar_lea.vmem [#allocation2], 353
        %v6697 = vld [vmem:[%s6696] ss:$2 sm:$0xff]
        %s6698 = scalar_lea.vmem [#allocation2], 385
        %v6699 = vld [vmem:[%s6698] ss:$2 sm:$0xff]
        %s6700 = scalar_lea.vmem [#allocation2], 417
        %v6701 = vld [vmem:[%s6700] ss:$2 sm:$0xff]
        %s6702 = scalar_lea.vmem [#allocation2], 449
        %v6703 = vld [vmem:[%s6702] ss:$2 sm:$0xff]
        %s6704 = scalar_lea.vmem [#allocation2], 481
        %v6705 = vld [vmem:[%s6704] ss:$2 sm:$0xff]
        %v6706 = vmax.f32 %v6643, %v6675
        %v6707 = vmax.f32 %v6645, %v6677
        %v6708 = vmax.f32 %v6647, %v6679
        %v6709 = vmax.f32 %v6649, %v6681
        %v6710 = vmax.f32 %v6651, %v6683
        %v6711 = vmax.f32 %v6653, %v6685
        %v6712 = vmax.f32 %v6655, %v6687
        %v6713 = vmax.f32 %v6657, %v6689
        %v6714 = vmax.f32 %v6659, %v6691
        %v6715 = vmax.f32 %v6661, %v6693
        %v6716 = vmax.f32 %v6663, %v6695
        %v6717 = vmax.f32 %v6665, %v6697
        %v6718 = vmax.f32 %v6667, %v6699
        %v6719 = vmax.f32 %v6669, %v6701
        %v6720 = vmax.f32 %v6671, %v6703
        %v6721 = vmax.f32 %v6673, %v6705
        %v6722 = vmax.f32 %v6706, %v6707
        %v6723 = vmax.f32 %v6708, %v6709
        %v6724 = vmax.f32 %v6710, %v6711
        %v6725 = vmax.f32 %v6712, %v6713
        %v6726 = vmax.f32 %v6714, %v6715
        %v6727 = vmax.f32 %v6716, %v6717
        %v6728 = vmax.f32 %v6718, %v6719
        %v6729 = vmax.f32 %v6720, %v6721
        %6730 = vst.msk [vmem:[%s241] sm:$0xff] %vm6578, %v6722
        %6731 = vst.msk [vmem:[%s241 + $0x8] sm:$0xff] %vm6578, %v6723
        %6732 = vst.msk [vmem:[%s241 + $0x10] sm:$0xff] %vm6578, %v6724
        %6733 = vst.msk [vmem:[%s241 + $0x18] sm:$0xff] %vm6578, %v6725
        %6734 = vst.msk [vmem:[%s241 + $0x20] sm:$0xff] %vm6578, %v6726
        %6735 = vst.msk [vmem:[%s241 + $0x28] sm:$0xff] %vm6578, %v6727
        %6736 = vst.msk [vmem:[%s241 + $0x30] sm:$0xff] %vm6578, %v6728
        %6737 = vst.msk [vmem:[%s241 + $0x38] sm:$0xff] %vm6578, %v6729
        %s6738 = sand.u32 %s153, 1
        %s6739 = scalar_lea.sflag [#allocation4], %s6738
        %s6740 = sand.u32 %s153, 1
        %s6741 = smul.addr %s6740, 64
        %s6742 = scalar_lea.vmem [#allocation3], %s6741
        // Predicated region
        $region41: #{fpn_block_forward.1} parent=39 // pred_check
          %p6743 = pneg %p163
        $region42: #{fpn_block_forward.1} parent=39 // pred_check_branch
          %6745 = sbr.rel (%p6743) target = $region44
        $region43: #{fpn_block_forward.1} parent=39 // pred_region
          %s6746 = smul.u32 8, %s24
          %s6748 = ssub.s32 1024, 1024
          %6749 = vsyncadd %s6739, %s6748
          %s6750 = smul.addr %s23, 8
          %s6751 = sadd.s32 %s6746, %s6750
          %s6752 = smul.addr %s6751, 128
          %s6753 = scalar_lea.hbm %s5, %s6752
          %s6754 = sshll.u32 %s6742, 4
          %s6755 = int_to_ptr.vmem [resolvable:$true] %s6754
          %6760 = dma.vmem_to_hbm [thread:$0]  %s6755, 1024, %s6753, %s6739, 128, 128, 8
        $region44: #{fpn_block_forward.1} parent=39 // pred_fallthru
          _
      $region40: #{fpn_block_forward.1} parent=5 // pred_fallthru
        _
      %p6761 = scmp.le.s32.totalorder 2, %s14
      // Predicated region
      $region45: #{fpn_block_forward.1} parent=5 // pred_check
        %p6762 = pneg %p6761
      $region46: #{fpn_block_forward.1} parent=5 // pred_check_branch
        %6764 = sbr.rel (%p6762) target = $region48
      $region47: #{fpn_block_forward.1} parent=5 // pred_region
        %s6765 = ssub.s32 %s14, 2
        // Predicated region
        $region49: #{fpn_block_forward.1} parent=47 // pred_check
          %p6766 = pneg %p169
        $region50: #{fpn_block_forward.1} parent=47 // pred_check_branch
          %6768 = sbr.rel (%p6766) target = $region52
        $region51: #{fpn_block_forward.1} parent=47 // pred_region
          %s6769 = sand.u32 %s154, 1
          %s6770 = scalar_lea.sflag [#allocation4], %s6769
          %s6771 = sand.u32 %s154, 1
          %s6772 = smul.addr %s6771, 64
          %s6773 = scalar_lea.vmem [#allocation3], %s6772
          %6774 = dma.done %s6770, 1024
        $region52: #{fpn_block_forward.1} parent=47 // pred_fallthru
          _
      $region48: #{fpn_block_forward.1} parent=5 // pred_fallthru
        _
    $region6: #{fpn_block_forward.1} parent=1 // loop_footer
      %s18 = sadd.s32 1, %s14
    $region7: #{fpn_block_forward.1} parent=1 // loop_footer_branch
      %13 = sbr.rel target = $region3
    $region8: #{fpn_block_forward.1} parent=1 // loop_exit
      _
    %6775 = vsyncpa [#allocation4], 1
    %s6776 = scalar_lea.sflag [#allocation4], 1
    %6777 = vsyncpa %s6776, 1

</llo_original>
